<compile_context>
chip_gen: v5e
topology: v5e:2x2
jax: 0.10.0
libtpu: 0.0.40
codegen_flags: <defaults>
</compile_context>

<pallas_src>
import functools

import jax
import jax.numpy as jnp
from jax.experimental import pallas as pl
from jax.experimental.pallas import tpu as pltpu


def _round_up(x, m):
    return ((x + m - 1) // m) * m


# ---------------------------------------------------------------------------
# Chip-generation traits (trace-time Python, perf-only decisions)
# ---------------------------------------------------------------------------
@functools.lru_cache(maxsize=None)
def _chip_traits():
    """Returns (num_tensorcores_sharing_grid, has_bf16_eup)."""
    try:
        kind = jax.devices()[0].device_kind.lower()
    except Exception:  # pragma: no cover - defensive
        kind = ""
    if "v7" in kind:
        return 2, True            # 2 TCs/chip, bf16 EUP
    if "v6" in kind:
        return 1, True            # 1 TC, bf16 EUP
    if "lite" in kind or "v5e" in kind:
        return 1, False           # v5e: 1 TC, no bf16 EUP
    if "v5" in kind or "v4" in kind:
        return 2, False           # v5p / v4 megacore, no bf16 EUP
    if "v3" in kind or "v2" in kind:
        return 2, False
    return 1, True                # unknown: conservative defaults


@functools.lru_cache(maxsize=None)
def _buffered_one_supported():
    """Probe whether pl.Buffered(1) (single-buffered pipelining) is accepted."""
    try:
        def _k(x_ref, o_ref):
            o_ref[...] = x_ref[...]

        x = jnp.zeros((8, 128), jnp.float32)
        f = pl.pallas_call(
            _k,
            out_shape=jax.ShapeDtypeStruct((8, 128), jnp.float32),
            grid=(1,),
            in_specs=[pl.BlockSpec((8, 128), lambda i: (0, 0),
                                   pipeline_mode=pl.Buffered(1))],
            out_specs=pl.BlockSpec((8, 128), lambda i: (0, 0)),
        )
        jax.block_until_ready(f(x))
        return True
    except Exception:
        return False


def _choose_tm(R, tm_req, num_cores):
    """Row-tile size: big (amortize grid-step overhead), core-count aware."""
    tm = _round_up(max(int(tm_req), 128), 128)
    if num_cores > 1:
        # Target >= 2 tiles per TensorCore for megacore balance / pipelining.
        min_tiles = 2 * num_cores
        tm = min(tm, _round_up(pl.cdiv(R, min_tiles), 128))
        tm = max(tm, 128)
    if tm >= R:
        # One full-extent block: legal even when R is not a multiple of 8,
        # removes both the extra grid step and masked-tail wasted compute.
        return R
    return tm


# ---------------------------------------------------------------------------
# Pallas kernel: the full MLP
#   Linear(in+3 -> H) + ReLU
#   [Linear(H -> H) + Tanh] x 3
#   Linear(H -> 3)
# applied to a tile of TM rows per grid step.  Matmul operands are bf16,
# accumulation / bias add are f32.  Tanh runs in bf16 on chips with a bf16
# EUP (v6e/v7x) and in f32 on v5e.
# ---------------------------------------------------------------------------
def _make_mlp_kernel(tanh_in_bf16):
    def _mlp_kernel(x_ref,
                    w0_ref, b0_ref,
                    w1_ref, b1_ref,
                    w2_ref, b2_ref,
                    w3_ref, b3_ref,
                    w4_ref, b4_ref,
                    o_ref):
        x = x_ref[...]  # already bf16
        h = jnp.dot(x, w0_ref[...], preferred_element_type=jnp.float32) + b0_ref[...]
        h = jnp.maximum(h, 0.0).astype(jnp.bfloat16)
        for w_ref, b_ref in ((w1_ref, b1_ref), (w2_ref, b2_ref), (w3_ref, b3_ref)):
            h = jnp.dot(h, w_ref[...], preferred_element_type=jnp.float32) + b_ref[...]
            if tanh_in_bf16:
                h = jnp.tanh(h.astype(jnp.bfloat16))          # bf16 EUP path
            else:
                h = jnp.tanh(h).astype(jnp.bfloat16)          # f32 EUP, cast for MXU
        out = jnp.dot(h, w4_ref[...], preferred_element_type=jnp.float32) + b4_ref[...]
        o_ref[...] = out.astype(o_ref.dtype)

    return _mlp_kernel


def mlp_pallas(x2d, params, *, tm=4096):
    """x2d: (R, Din) float32 -> (R, Dout) float32 via the Pallas MLP kernel."""
    (w0, b0), (w1, b1), (w2, b2), (w3, b3), (w4, b4) = params
    R, Din = x2d.shape
    Dout = w4.shape[1]

    num_cores, bf16_eup = _chip_traits()
    tm = _choose_tm(R, tm, num_cores)
    n_tiles = pl.cdiv(R, tm)

    # bf16 operands for the MXU; f32 biases keep the accumulate/add in f32.
    x2d = x2d.astype(jnp.bfloat16)
    w0, w1, w2, w3, w4 = (w.astype(jnp.bfloat16) for w in (w0, w1, w2, w3, w4))

    single_buffer = _buffered_one_supported()

    def full_spec(arr):
        # Whole (small) parameter array resident in VMEM for every grid step
        # (constant index_map -> DMA'd once).  Single-buffered when supported.
        zeros = (0,) * arr.ndim
        if single_buffer:
            return pl.BlockSpec(arr.shape, lambda i: zeros,
                                pipeline_mode=pl.Buffered(1))
        return pl.BlockSpec(arr.shape, lambda i: zeros)

    # Advisory cost estimate so XLA schedules around the custom call sensibly.
    flops = 2 * R * (Din * w0.shape[1]
                     + w1.shape[0] * w1.shape[1]
                     + w2.shape[0] * w2.shape[1]
                     + w3.shape[0] * w3.shape[1]
                     + w4.shape[0] * Dout)
    transcendentals = R * (w1.shape[1] + w2.shape[1] + w3.shape[1])
    param_bytes = sum(int(a.size) * a.dtype.itemsize
                      for a in (w0, b0, w1, b1, w2, b2, w3, b3, w4, b4))
    bytes_accessed = R * Din * 2 + R * Dout * 4 + param_bytes

    out = pl.pallas_call(
        _make_mlp_kernel(bf16_eup),
        out_shape=jax.ShapeDtypeStruct((R, Dout), jnp.float32),
        grid_spec=pltpu.PrefetchScalarGridSpec(
            num_scalar_prefetch=0,
            grid=(n_tiles,),
            in_specs=[
                pl.BlockSpec((tm, Din), lambda i: (i, 0)),
                full_spec(w0), full_spec(b0),
                full_spec(w1), full_spec(b1),
                full_spec(w2), full_spec(b2),
                full_spec(w3), full_spec(b3),
                full_spec(w4), full_spec(b4),
            ],
            out_specs=pl.BlockSpec((tm, Dout), lambda i: (i, 0)),
        ),
        compiler_params=pltpu.CompilerParams(
            dimension_semantics=("parallel",),
            vmem_limit_bytes=32 * 1024 * 1024,
        ),
        cost_estimate=pl.CostEstimate(
            flops=int(flops),
            transcendentals=int(transcendentals),
            bytes_accessed=int(bytes_accessed),
        ),
    )(x2d, w0, b0, w1, b1, w2, b2, w3, b3, w4, b4)

    return out


# ---------------------------------------------------------------------------
# IA_NILUT forward (glue in plain JAX, MLP in Pallas)
# ---------------------------------------------------------------------------
def ia_nilut_forward(intensity, params, in_features, *, tm=4096):
    # intensity: (B, N, in_features), float32
    rgb = intensity[:, :, :3]
    sorted_rgb = jnp.sort(rgb, axis=-1)                       # torch.sort(...)[0], ascending
    inp = jnp.concatenate([intensity, sorted_rgb], axis=2)    # (B, N, in_features+3)

    zero_inp = inp[:1]
    if in_features > 3:
        # zero_input[:, :, 3:-3] = 0
        zero_inp = zero_inp.at[:, :, 3:in_features].set(0.0)
    inp_full = jnp.concatenate([inp, zero_inp], axis=0)       # (B+1, N, in_features+3)

    Bp1, N, Din = inp_full.shape
    x2d = inp_full.reshape(Bp1 * N, Din)
    out2d = mlp_pallas(x2d, params, tm=tm)
    out = out2d.reshape(Bp1, N, 3)

    # output[:-1] - output[-1:] + intensity[:, :, :3]
    return out[:-1] - out[-1:] + rgb


def ia_nilut_reference(intensity, params, in_features, *, tanh_in_bf16=True):
    """Pure-JAX reference mirroring the kernel's bf16 operand / f32 accumulate
    numerics (XLA path, no Pallas).  NOTE: this checks the intended bf16-MXU
    numerics, not the original f32 PyTorch model bit-for-bit."""
    bf = jnp.bfloat16
    rgb = intensity[:, :, :3]
    sorted_rgb = jnp.sort(rgb, axis=-1)
    inp = jnp.concatenate([intensity, sorted_rgb], axis=2)
    zero_inp = inp[:1]
    if in_features > 3:
        zero_inp = zero_inp.at[:, :, 3:in_features].set(0.0)
    x = jnp.concatenate([inp, zero_inp], axis=0).astype(bf)

    (w0, b0), (w1, b1), (w2, b2), (w3, b3), (w4, b4) = params
    h = jnp.dot(x, w0.astype(bf), preferred_element_type=jnp.float32) + b0
    h = jnp.maximum(h, 0.0).astype(bf)
    for w, b in ((w1, b1), (w2, b2), (w3, b3)):
        h = jnp.dot(h, w.astype(bf), preferred_element_type=jnp.float32) + b
        if tanh_in_bf16:
            h = jnp.tanh(h.astype(bf))
        else:
            h = jnp.tanh(h).astype(bf)
    out = jnp.dot(h, w4.astype(bf), preferred_element_type=jnp.float32) + b4
    return out[:-1] - out[-1:] + rgb


def init_params(key, in_features, hidden_features, hidden_layers, out_features):
    """Deterministic init mimicking nn.Linear's U(-1/sqrt(fan_in), 1/sqrt(fan_in)).
    Weights are stored as (fan_in, fan_out) so the kernel computes x @ W."""
    dims = [in_features + 3] + [hidden_features] * (hidden_layers + 1) + [out_features]
    params = []
    for i in range(len(dims) - 1):
        fan_in, fan_out = dims[i], dims[i + 1]
        key, kw, kb = jax.random.split(key, 3)
        bound = 1.0 / jnp.sqrt(float(fan_in))
        w = jax.random.uniform(kw, (fan_in, fan_out), jnp.float32, -bound, bound)
        b = jax.random.uniform(kb, (1, fan_out), jnp.float32, -bound, bound)
        params.append((w, b))
    return params


if __name__ == "__main__":
    # Module defaults: in_features=3, hidden_features=256, hidden_layers=3, out_features=3.
    in_features = 3
    hidden_features = 256
    hidden_layers = 3
    out_features = 3

    # Small but non-trivial: R = (B+1)*N = 600 rows.  On single-TC chips this
    # becomes one full-extent block; on multi-TC chips it splits into several
    # 128/256-row tiles with a masked ragged tail.
    B, N = 2, 200

    key = jax.random.PRNGKey(0)
    key, k_x = jax.random.split(key)
    intensity = jax.random.uniform(k_x, (B, N, in_features), jnp.float32)

    params = init_params(key, in_features, hidden_features, hidden_layers, out_features)

    # Warm the trace-time probes / chip queries outside of jit tracing.
    _ = _chip_traits()
    _ = _buffered_one_supported()

    fwd = jax.jit(functools.partial(ia_nilut_forward, in_features=in_features))
    out = jax.block_until_ready(fwd(intensity, params))

    _, _bf16_eup = _chip_traits()
    ref = ia_nilut_reference(intensity, params, in_features, tanh_in_bf16=_bf16_eup)
    assert out.shape == (B, N, out_features)
    assert bool(jnp.all(jnp.isfinite(out)))
    err = float(jnp.max(jnp.abs(out - ref)))
    # bf16 operands -> allow small deviation from the XLA bf16 reference
    # (accumulation order differences only; tanh mode matches the kernel).
    assert err < 1.5e-2, err

    print("KERNEL_OK")
</pallas_src>

<mosaic_0001>
module attributes {stable_mosaic.version = 11 : i64} {
  func.func @_k(%arg0: i32, %arg1: memref<8x128xf32, #tpu.memory_space<vmem>>, %arg2: memref<8x128xf32, #tpu.memory_space<vmem>>) attributes {dimension_semantics = [#tpu.dimension_semantics<arbitrary>], iteration_bounds = array<i64: 1>, scalar_prefetch = 0 : i64, scratch_operands = 0 : i64, tpu.core_type = #tpu.core_type<tc>, window_params = [{pipeline_mode = #tpu.pipeline_mode<synchronous>, transform_indices = @transform_0, window_bounds = array<i64: 8, 128>}, {pipeline_mode = #tpu.pipeline_mode<synchronous>, transform_indices = @transform_1, window_bounds = array<i64: 8, 128>}]} {
    %c0 = arith.constant 0 : index
    %c0_0 = arith.constant 0 : index
    %0 = vector.load %arg1[%c0, %c0_0] : memref<8x128xf32, #tpu.memory_space<vmem>>, vector<8x128xf32>
    %c0_1 = arith.constant 0 : index
    %c0_2 = arith.constant 0 : index
    %1 = vector.load %arg2[%c0_1, %c0_2] : memref<8x128xf32, #tpu.memory_space<vmem>>, vector<8x128xf32>
    tpu.vector_store %arg2[%c0_1, %c0_2], %0 {strides = array<i32>} : memref<8x128xf32, #tpu.memory_space<vmem>>, vector<8x128xf32>,
    return
  }
  func.func @transform_0(%arg0: i32) -> (i32, i32) {
    %c0_i32 = arith.constant 0 : i32
    %c0_i32_0 = arith.constant 0 : i32
    %c0_i32_1 = arith.constant 0 : i32
    return %c0_i32, %c0_i32_0 : i32, i32
  }
  func.func @transform_1(%arg0: i32) -> (i32, i32) {
    %c0_i32 = arith.constant 0 : i32
    %c0_i32_0 = arith.constant 0 : i32
    %c0_i32_1 = arith.constant 0 : i32
    return %c0_i32, %c0_i32_0 : i32, i32
  }
}

module attributes {stable_mosaic.version = 11 : i64} {
  func.func @_mlp_kernel(%arg0: i32, %arg1: memref<600x6xbf16, #tpu.memory_space<vmem>>, %arg2: memref<6x256xbf16, #tpu.memory_space<vmem>>, %arg3: memref<1x256xf32, #tpu.memory_space<vmem>>, %arg4: memref<256x256xbf16, #tpu.memory_space<vmem>>, %arg5: memref<1x256xf32, #tpu.memory_space<vmem>>, %arg6: memref<256x256xbf16, #tpu.memory_space<vmem>>, %arg7: memref<1x256xf32, #tpu.memory_space<vmem>>, %arg8: memref<256x256xbf16, #tpu.memory_space<vmem>>, %arg9: memref<1x256xf32, #tpu.memory_space<vmem>>, %arg10: memref<256x3xbf16, #tpu.memory_space<vmem>>, %arg11: memref<1x3xf32, #tpu.memory_space<vmem>>, %arg12: memref<600x3xf32, #tpu.memory_space<vmem>>) attributes {dimension_semantics = [#tpu.dimension_semantics<parallel>], iteration_bounds = array<i64: 1>, scalar_prefetch = 0 : i64, scratch_operands = 0 : i64, tpu.core_type = #tpu.core_type<tc>, window_params = [{transform_indices = @transform_0, window_bounds = array<i64: 600, 6>}, {pipeline_mode = #tpu.pipeline_mode<synchronous>, transform_indices = @transform_1, window_bounds = array<i64: 6, 256>}, {pipeline_mode = #tpu.pipeline_mode<synchronous>, transform_indices = @transform_2, window_bounds = array<i64: 1, 256>}, {pipeline_mode = #tpu.pipeline_mode<synchronous>, transform_indices = @transform_3, window_bounds = array<i64: 256, 256>}, {pipeline_mode = #tpu.pipeline_mode<synchronous>, transform_indices = @transform_4, window_bounds = array<i64: 1, 256>}, {pipeline_mode = #tpu.pipeline_mode<synchronous>, transform_indices = @transform_5, window_bounds = array<i64: 256, 256>}, {pipeline_mode = #tpu.pipeline_mode<synchronous>, transform_indices = @transform_6, window_bounds = array<i64: 1, 256>}, {pipeline_mode = #tpu.pipeline_mode<synchronous>, transform_indices = @transform_7, window_bounds = array<i64: 256, 256>}, {pipeline_mode = #tpu.pipeline_mode<synchronous>, transform_indices = @transform_8, window_bounds = array<i64: 1, 256>}, {pipeline_mode = #tpu.pipeline_mode<synchronous>, transform_indices = @transform_9, window_bounds = array<i64: 256, 3>}, {pipeline_mode = #tpu.pipeline_mode<synchronous>, transform_indices = @transform_10, window_bounds = array<i64: 1, 3>}, {transform_indices = @transform_11, window_bounds = array<i64: 600, 3>}]} {
    %c0 = arith.constant 0 : index
    %c0_0 = arith.constant 0 : index
    %0 = vector.load %arg1[%c0, %c0_0] : memref<600x6xbf16, #tpu.memory_space<vmem>>, vector<600x6xbf16>
    %c0_1 = arith.constant 0 : index
    %c0_2 = arith.constant 0 : index
    %1 = vector.load %arg2[%c0_1, %c0_2] : memref<6x256xbf16, #tpu.memory_space<vmem>>, vector<6x256xbf16>
    %cst = arith.constant dense<0.000000e+00> : vector<600x256xf32>
    %2 = tpu.matmul %0, %1, %cst {dimension_numbers = #tpu.dot_dimension_numbers<[1], [0], [0], [1], [0, 0, 1, 1], [], []>} : vector<600x6xbf16>, vector<6x256xbf16>, vector<600x256xf32> -> vector<600x256xf32>
    %c0_3 = arith.constant 0 : index
    %c0_4 = arith.constant 0 : index
    %3 = vector.load %arg3[%c0_3, %c0_4] : memref<1x256xf32, #tpu.memory_space<vmem>>, vector<1x256xf32>
    %4 = vector.broadcast %3 : vector<1x256xf32> to vector<600x256xf32>
    %5 = arith.addf %2, %4 : vector<600x256xf32>
    %cst_5 = arith.constant 0.000000e+00 : f32
    %6 = vector.broadcast %cst_5 : f32 to vector<600x256xf32>
    %7 = arith.maximumf %5, %6 : vector<600x256xf32>
    %8 = arith.truncf %7 : vector<600x256xf32> to vector<600x256xbf16>
    %c0_6 = arith.constant 0 : index
    %c0_7 = arith.constant 0 : index
    %9 = vector.load %arg4[%c0_6, %c0_7] : memref<256x256xbf16, #tpu.memory_space<vmem>>, vector<256x256xbf16>
    %cst_8 = arith.constant dense<0.000000e+00> : vector<600x256xf32>
    %10 = tpu.matmul %8, %9, %cst_8 {dimension_numbers = #tpu.dot_dimension_numbers<[1], [0], [0], [1], [0, 0, 1, 1], [], []>} : vector<600x256xbf16>, vector<256x256xbf16>, vector<600x256xf32> -> vector<600x256xf32>
    %c0_9 = arith.constant 0 : index
    %c0_10 = arith.constant 0 : index
    %11 = vector.load %arg5[%c0_9, %c0_10] : memref<1x256xf32, #tpu.memory_space<vmem>>, vector<1x256xf32>
    %12 = vector.broadcast %11 : vector<1x256xf32> to vector<600x256xf32>
    %13 = arith.addf %10, %12 : vector<600x256xf32>
    %14 = arith.truncf %13 : vector<600x256xf32> to vector<600x256xbf16>
    %15 = math.tanh %14 : vector<600x256xbf16>
    %c0_11 = arith.constant 0 : index
    %c0_12 = arith.constant 0 : index
    %16 = vector.load %arg6[%c0_11, %c0_12] : memref<256x256xbf16, #tpu.memory_space<vmem>>, vector<256x256xbf16>
    %cst_13 = arith.constant dense<0.000000e+00> : vector<600x256xf32>
    %17 = tpu.matmul %15, %16, %cst_13 {dimension_numbers = #tpu.dot_dimension_numbers<[1], [0], [0], [1], [0, 0, 1, 1], [], []>} : vector<600x256xbf16>, vector<256x256xbf16>, vector<600x256xf32> -> vector<600x256xf32>
    %c0_14 = arith.constant 0 : index
    %c0_15 = arith.constant 0 : index
    %18 = vector.load %arg7[%c0_14, %c0_15] : memref<1x256xf32, #tpu.memory_space<vmem>>, vector<1x256xf32>
    %19 = vector.broadcast %18 : vector<1x256xf32> to vector<600x256xf32>
    %20 = arith.addf %17, %19 : vector<600x256xf32>
    %21 = arith.truncf %20 : vector<600x256xf32> to vector<600x256xbf16>
    %22 = math.tanh %21 : vector<600x256xbf16>
    %c0_16 = arith.constant 0 : index
    %c0_17 = arith.constant 0 : index
    %23 = vector.load %arg8[%c0_16, %c0_17] : memref<256x256xbf16, #tpu.memory_space<vmem>>, vector<256x256xbf16>
    %cst_18 = arith.constant dense<0.000000e+00> : vector<600x256xf32>
    %24 = tpu.matmul %22, %23, %cst_18 {dimension_numbers = #tpu.dot_dimension_numbers<[1], [0], [0], [1], [0, 0, 1, 1], [], []>} : vector<600x256xbf16>, vector<256x256xbf16>, vector<600x256xf32> -> vector<600x256xf32>
    %c0_19 = arith.constant 0 : index
    %c0_20 = arith.constant 0 : index
    %25 = vector.load %arg9[%c0_19, %c0_20] : memref<1x256xf32, #tpu.memory_space<vmem>>, vector<1x256xf32>
    %26 = vector.broadcast %25 : vector<1x256xf32> to vector<600x256xf32>
    %27 = arith.addf %24, %26 : vector<600x256xf32>
    %28 = arith.truncf %27 : vector<600x256xf32> to vector<600x256xbf16>
    %29 = math.tanh %28 : vector<600x256xbf16>
    %c0_21 = arith.constant 0 : index
    %c0_22 = arith.constant 0 : index
    %30 = vector.load %arg10[%c0_21, %c0_22] : memref<256x3xbf16, #tpu.memory_space<vmem>>, vector<256x3xbf16>
    %cst_23 = arith.constant dense<0.000000e+00> : vector<600x3xf32>
    %31 = tpu.matmul %29, %30, %cst_23 {dimension_numbers = #tpu.dot_dimension_numbers<[1], [0], [0], [1], [0, 0, 1, 1], [], []>} : vector<600x256xbf16>, vector<256x3xbf16>, vector<600x3xf32> -> vector<600x3xf32>
    %c0_24 = arith.constant 0 : index
    %c0_25 = arith.constant 0 : index
    %32 = vector.load %arg11[%c0_24, %c0_25] : memref<1x3xf32, #tpu.memory_space<vmem>>, vector<1x3xf32>
    %33 = vector.broadcast %32 : vector<1x3xf32> to vector<600x3xf32>
    %34 = arith.addf %31, %33 : vector<600x3xf32>
    %c0_26 = arith.constant 0 : index
    %c0_27 = arith.constant 0 : index
    %35 = vector.load %arg12[%c0_26, %c0_27] : memref<600x3xf32, #tpu.memory_space<vmem>>, vector<600x3xf32>
    tpu.vector_store %arg12[%c0_26, %c0_27], %34 {strides = array<i32>} : memref<600x3xf32, #tpu.memory_space<vmem>>, vector<600x3xf32>,
    return
  }
  func.func @transform_0(%arg0: i32) -> (i32, i32) {
    %c0_i32 = arith.constant 0 : i32
    %c0_i32_0 = arith.constant 0 : i32
    return %arg0, %c0_i32 : i32, i32
  }
  func.func @transform_1(%arg0: i32) -> (i32, i32) {
    %c0_i32 = arith.constant 0 : i32
    %c0_i32_0 = arith.constant 0 : i32
    %c0_i32_1 = arith.constant 0 : i32
    return %c0_i32, %c0_i32_0 : i32, i32
  }
  func.func @transform_2(%arg0: i32) -> (i32, i32) {
    %c0_i32 = arith.constant 0 : i32
    %c0_i32_0 = arith.constant 0 : i32
    %c0_i32_1 = arith.constant 0 : i32
    return %c0_i32, %c0_i32_0 : i32, i32
  }
  func.func @transform_3(%arg0: i32) -> (i32, i32) {
    %c0_i32 = arith.constant 0 : i32
    %c0_i32_0 = arith.constant 0 : i32
    %c0_i32_1 = arith.constant 0 : i32
    return %c0_i32, %c0_i32_0 : i32, i32
  }
  func.func @transform_4(%arg0: i32) -> (i32, i32) {
    %c0_i32 = arith.constant 0 : i32
    %c0_i32_0 = arith.constant 0 : i32
    %c0_i32_1 = arith.constant 0 : i32
    return %c0_i32, %c0_i32_0 : i32, i32
  }
  func.func @transform_5(%arg0: i32) -> (i32, i32) {
    %c0_i32 = arith.constant 0 : i32
    %c0_i32_0 = arith.constant 0 : i32
    %c0_i32_1 = arith.constant 0 : i32
    return %c0_i32, %c0_i32_0 : i32, i32
  }
  func.func @transform_6(%arg0: i32) -> (i32, i32) {
    %c0_i32 = arith.constant 0 : i32
    %c0_i32_0 = arith.constant 0 : i32
    %c0_i32_1 = arith.constant 0 : i32
    return %c0_i32, %c0_i32_0 : i32, i32
  }
  func.func @transform_7(%arg0: i32) -> (i32, i32) {
    %c0_i32 = arith.constant 0 : i32
    %c0_i32_0 = arith.constant 0 : i32
    %c0_i32_1 = arith.constant 0 : i32
    return %c0_i32, %c0_i32_0 : i32, i32
  }
  func.func @transform_8(%arg0: i32) -> (i32, i32) {
    %c0_i32 = arith.constant 0 : i32
    %c0_i32_0 = arith.constant 0 : i32
    %c0_i32_1 = arith.constant 0 : i32
    return %c0_i32, %c0_i32_0 : i32, i32
  }
  func.func @transform_9(%arg0: i32) -> (i32, i32) {
    %c0_i32 = arith.constant 0 : i32
    %c0_i32_0 = arith.constant 0 : i32
    %c0_i32_1 = arith.constant 0 : i32
    return %c0_i32, %c0_i32_0 : i32, i32
  }
  func.func @transform_10(%arg0: i32) -> (i32, i32) {
    %c0_i32 = arith.constant 0 : i32
    %c0_i32_0 = arith.constant 0 : i32
    %c0_i32_1 = arith.constant 0 : i32
    return %c0_i32, %c0_i32_0 : i32, i32
  }
  func.func @transform_11(%arg0: i32) -> (i32, i32) {
    %c0_i32 = arith.constant 0 : i32
    %c0_i32_0 = arith.constant 0 : i32
    return %arg0, %c0_i32 : i32, i32
  }
}

</mosaic_0001>

<llo_original>
// kernel: tpu_custom_call.1
$region0: #{tpu_custom_call.1}
  #allocation0 [shape = 'u32[]', space=smem, size = 0x4, offset = 0x4, fixed_abs, tag = 'smem constant byte address 0x4 - core index']
  #allocation1 [shape = 'u32[72,128]{1,0:T(1,128)}', space=vmem, size = 0x9000, scoped, tag = 'internal scratch']
  %s0 = inlined_call_operand.hbm [shape: f32[8,128], index: 0, kind: input, shape index: {}]
  %s1 = inlined_call_operand.hbm [shape: f32[8,128], index: 1, kind: output, shape index: {}]
  %s2 = sld [smem:[#allocation0]]
  $region18: #{tpu_custom_call.1} parent=0
    _
  %s4 = ssub.s32 1, %s2
  %s5 = scalar_select 0, %s4, %s2
  $region1: #{tpu_custom_call.1} parent=0
    #allocation2 [shape = 'u8[4096]{0}', space=vmem, size = 0x1000, scoped, tag = 'input window, operand 0, single buffered']
    #allocation3 [shape = 's32[1]{0}', space=sflag, size = 0x4, scoped, tag = 'scoped memory for tpu_custom_call.1']
    #allocation4 [shape = 's32[1]{0}', space=sflag, size = 0x4, scoped, tag = 'scoped memory for tpu_custom_call.1']
    #allocation5 [shape = 'u8[4096]{0}', space=vmem, size = 0x1000, scoped, tag = 'output window, operand 0, single buffered']
    %6 = vsyncpa [#allocation3], 0
    %7 = vsyncpa [#allocation4], 0
    // Predicated region
    $region2: #{tpu_custom_call.1} parent=1 // pred_check
      _
    $region3: #{tpu_custom_call.1} parent=1 // pred_check_branch
      %9 = sbr.rel (0) target = $region5
    $region4: #{tpu_custom_call.1} parent=1 // pred_region
      %11 = vsyncadd [#allocation3], 0
      %s13 = sshll.u32 %s0, 4
      %s14 = int_to_ptr.hbm [resolvable:$true] %s13
      %s15 = sshll.u32 [#allocation2], 4
      %s16 = int_to_ptr.vmem [resolvable:$true] %s15
      %18 = dma.hbm_to_vmem [thread:$0]  %s14, 128, %s16, [#allocation3]
    $region5: #{tpu_custom_call.1} parent=1 // pred_fallthru
      _
    // Predicated region
    $region6: #{tpu_custom_call.1} parent=1 // pred_check
      _
    $region7: #{tpu_custom_call.1} parent=1 // pred_check_branch
      %20 = sbr.rel (0) target = $region9
    $region8: #{tpu_custom_call.1} parent=1 // pred_region
      %22 = dma.done [#allocation3], 128
    $region9: #{tpu_custom_call.1} parent=1 // pred_fallthru
      _
    %v23 = vld [vmem:[#allocation2] sm:$0xff]
    %24 = vst [vmem:[#allocation5] sm:$0xff] %v23
    // Predicated region
    $region10: #{tpu_custom_call.1} parent=1 // pred_check
      _
    $region11: #{tpu_custom_call.1} parent=1 // pred_check_branch
      %26 = sbr.rel (0) target = $region13
    $region12: #{tpu_custom_call.1} parent=1 // pred_region
      %28 = vsyncadd [#allocation4], 0
      %s30 = sshll.u32 [#allocation5], 4
      %s31 = int_to_ptr.vmem [resolvable:$true] %s30
      %s32 = sshll.u32 %s1, 4
      %s33 = int_to_ptr.hbm [resolvable:$true] %s32
      %35 = dma.vmem_to_hbm [thread:$0]  %s31, 128, %s33, [#allocation4]
    $region13: #{tpu_custom_call.1} parent=1 // pred_fallthru
      _
    // Predicated region
    $region14: #{tpu_custom_call.1} parent=1 // pred_check
      _
    $region15: #{tpu_custom_call.1} parent=1 // pred_check_branch
      %37 = sbr.rel (0) target = $region17
    $region16: #{tpu_custom_call.1} parent=1 // pred_region
      %39 = dma.done [#allocation4], 128
    $region17: #{tpu_custom_call.1} parent=1 // pred_fallthru
      _
    %40 = vsyncpa [#allocation3], 1
    %41 = vsyncpa [#allocation4], 1

// kernel: ia_nilut_forward.1
$region0: #{ia_nilut_forward.1}
  #allocation0 [shape = 'u32[]', space=smem, size = 0x4, offset = 0x4, fixed_abs, tag = 'smem constant byte address 0x4 - core index']
  #allocation1 [shape = 'u32[72,128]{1,0:T(1,128)}', space=vmem, size = 0x9000, scoped, tag = 'internal scratch']
  %s0 = inlined_call_operand.vmem [shape: bf16[600,6], index: 0, kind: input, shape index: {}]
  %s1 = inlined_call_operand.vmem [shape: bf16[6,256], index: 1, kind: input, shape index: {}]
  %s2 = inlined_call_operand.vmem [shape: f32[1,256], index: 2, kind: input, shape index: {}]
  %s3 = inlined_call_operand.vmem [shape: bf16[256,256], index: 3, kind: input, shape index: {}]
  %s4 = inlined_call_operand.vmem [shape: f32[1,256], index: 4, kind: input, shape index: {}]
  %s5 = inlined_call_operand.vmem [shape: bf16[256,256], index: 5, kind: input, shape index: {}]
  %s6 = inlined_call_operand.vmem [shape: f32[1,256], index: 6, kind: input, shape index: {}]
  %s7 = inlined_call_operand.vmem [shape: bf16[256,256], index: 7, kind: input, shape index: {}]
  %s8 = inlined_call_operand.vmem [shape: f32[1,256], index: 8, kind: input, shape index: {}]
  %s9 = inlined_call_operand.vmem [shape: bf16[256,3], index: 9, kind: input, shape index: {}]
  %s10 = inlined_call_operand.vmem [shape: f32[1,3], index: 10, kind: input, shape index: {}]
  %s11 = inlined_call_operand.vmem [shape: f32[600,3], index: 11, kind: output, shape index: {}]
  %s12 = sld [smem:[#allocation0]]
  $region54: #{ia_nilut_forward.1} parent=0
    _
  %s14 = ssub.s32 1, %s12
  %s15 = scalar_select 0, %s14, %s12
  // Predicated region
  $region2: #{ia_nilut_forward.1} parent=0 // pred_check
    _
  $region3: #{ia_nilut_forward.1} parent=0 // pred_check_branch
    %17 = sbr.rel (0) target = $region5
  $region4: #{ia_nilut_forward.1} parent=0 // pred_region
    _
  $region5: #{ia_nilut_forward.1} parent=0 // pred_fallthru
    _
  // Predicated region
  $region6: #{ia_nilut_forward.1} parent=0 // pred_check
    _
  $region7: #{ia_nilut_forward.1} parent=0 // pred_check_branch
    %19 = sbr.rel (0) target = $region9
  $region8: #{ia_nilut_forward.1} parent=0 // pred_region
    _
  $region9: #{ia_nilut_forward.1} parent=0 // pred_fallthru
    _
  // Predicated region
  $region10: #{ia_nilut_forward.1} parent=0 // pred_check
    _
  $region11: #{ia_nilut_forward.1} parent=0 // pred_check_branch
    %21 = sbr.rel (0) target = $region13
  $region12: #{ia_nilut_forward.1} parent=0 // pred_region
    _
  $region13: #{ia_nilut_forward.1} parent=0 // pred_fallthru
    _
  // Predicated region
  $region14: #{ia_nilut_forward.1} parent=0 // pred_check
    _
  $region15: #{ia_nilut_forward.1} parent=0 // pred_check_branch
    %23 = sbr.rel (0) target = $region17
  $region16: #{ia_nilut_forward.1} parent=0 // pred_region
    _
  $region17: #{ia_nilut_forward.1} parent=0 // pred_fallthru
    _
  // Predicated region
  $region18: #{ia_nilut_forward.1} parent=0 // pred_check
    _
  $region19: #{ia_nilut_forward.1} parent=0 // pred_check_branch
    %25 = sbr.rel (0) target = $region21
  $region20: #{ia_nilut_forward.1} parent=0 // pred_region
    _
  $region21: #{ia_nilut_forward.1} parent=0 // pred_fallthru
    _
  // Predicated region
  $region22: #{ia_nilut_forward.1} parent=0 // pred_check
    _
  $region23: #{ia_nilut_forward.1} parent=0 // pred_check_branch
    %27 = sbr.rel (0) target = $region25
  $region24: #{ia_nilut_forward.1} parent=0 // pred_region
    _
  $region25: #{ia_nilut_forward.1} parent=0 // pred_fallthru
    _
  // Predicated region
  $region26: #{ia_nilut_forward.1} parent=0 // pred_check
    _
  $region27: #{ia_nilut_forward.1} parent=0 // pred_check_branch
    %29 = sbr.rel (0) target = $region29
  $region28: #{ia_nilut_forward.1} parent=0 // pred_region
    _
  $region29: #{ia_nilut_forward.1} parent=0 // pred_fallthru
    _
  // Predicated region
  $region30: #{ia_nilut_forward.1} parent=0 // pred_check
    _
  $region31: #{ia_nilut_forward.1} parent=0 // pred_check_branch
    %31 = sbr.rel (0) target = $region33
  $region32: #{ia_nilut_forward.1} parent=0 // pred_region
    _
  $region33: #{ia_nilut_forward.1} parent=0 // pred_fallthru
    _
  // Predicated region
  $region34: #{ia_nilut_forward.1} parent=0 // pred_check
    _
  $region35: #{ia_nilut_forward.1} parent=0 // pred_check_branch
    %33 = sbr.rel (0) target = $region37
  $region36: #{ia_nilut_forward.1} parent=0 // pred_region
    _
  $region37: #{ia_nilut_forward.1} parent=0 // pred_fallthru
    _
  // Predicated region
  $region38: #{ia_nilut_forward.1} parent=0 // pred_check
    _
  $region39: #{ia_nilut_forward.1} parent=0 // pred_check_branch
    %35 = sbr.rel (0) target = $region41
  $region40: #{ia_nilut_forward.1} parent=0 // pred_region
    _
  $region41: #{ia_nilut_forward.1} parent=0 // pred_fallthru
    _
  // Predicated region
  $region42: #{ia_nilut_forward.1} parent=0 // pred_check
    _
  $region43: #{ia_nilut_forward.1} parent=0 // pred_check_branch
    %37 = sbr.rel (0) target = $region45
  $region44: #{ia_nilut_forward.1} parent=0 // pred_region
    _
  $region45: #{ia_nilut_forward.1} parent=0 // pred_fallthru
    _
  %v39 = vld [vmem:[%s0] sm:$0xf]
  %v40 = vld [vmem:[%s0 + $0x4] sm:$0xf]
  %v41 = vld [vmem:[%s0 + $0x8] sm:$0xf]
  %v42 = vld [vmem:[%s0 + $0xc] sm:$0xf]
  %v43 = vld [vmem:[%s0 + $0x10] sm:$0xf]
  %v44 = vld [vmem:[%s0 + $0x14] sm:$0xf]
  %v45 = vld [vmem:[%s0 + $0x18] sm:$0xf]
  %v46 = vld [vmem:[%s0 + $0x1c] sm:$0xf]
  %v47 = vld [vmem:[%s0 + $0x20] sm:$0xf]
  %v48 = vld [vmem:[%s0 + $0x24] sm:$0xf]
  %v49 = vld [vmem:[%s0 + $0x28] sm:$0xf]
  %v50 = vld [vmem:[%s0 + $0x2c] sm:$0xf]
  %v51 = vld [vmem:[%s0 + $0x30] sm:$0xf]
  %v52 = vld [vmem:[%s0 + $0x34] sm:$0xf]
  %v53 = vld [vmem:[%s0 + $0x38] sm:$0xf]
  %v54 = vld [vmem:[%s0 + $0x3c] sm:$0xf]
  %v55 = vld [vmem:[%s0 + $0x40] sm:$0xf]
  %v56 = vld [vmem:[%s0 + $0x44] sm:$0xf]
  %v57 = vld [vmem:[%s0 + $0x48] sm:$0xf]
  %v58 = vld [vmem:[%s0 + $0x4c] sm:$0xf]
  %v59 = vld [vmem:[%s0 + $0x50] sm:$0xf]
  %v60 = vld [vmem:[%s0 + $0x54] sm:$0xf]
  %v61 = vld [vmem:[%s0 + $0x58] sm:$0xf]
  %v62 = vld [vmem:[%s0 + $0x5c] sm:$0xf]
  %v63 = vld [vmem:[%s0 + $0x60] sm:$0xf]
  %v64 = vld [vmem:[%s0 + $0x64] sm:$0xf]
  %v65 = vld [vmem:[%s0 + $0x68] sm:$0xf]
  %v66 = vld [vmem:[%s0 + $0x6c] sm:$0xf]
  %v67 = vld [vmem:[%s0 + $0x70] sm:$0xf]
  %v68 = vld [vmem:[%s0 + $0x74] sm:$0xf]
  %v69 = vld [vmem:[%s0 + $0x78] sm:$0xf]
  %v70 = vld [vmem:[%s0 + $0x7c] sm:$0xf]
  %v71 = vld [vmem:[%s0 + $0x80] sm:$0xf]
  %v72 = vld [vmem:[%s0 + $0x84] sm:$0xf]
  %v73 = vld [vmem:[%s0 + $0x88] sm:$0xf]
  %v74 = vld [vmem:[%s0 + $0x8c] sm:$0xf]
  %v75 = vld [vmem:[%s0 + $0x90] sm:$0xf]
  %v76 = vld [vmem:[%s0 + $0x94] sm:$0xf]
  %v77 = vld [vmem:[%s0 + $0x98] sm:$0xf]
  %v78 = vld [vmem:[%s0 + $0x9c] sm:$0xf]
  %v79 = vld [vmem:[%s0 + $0xa0] sm:$0xf]
  %v80 = vld [vmem:[%s0 + $0xa4] sm:$0xf]
  %v81 = vld [vmem:[%s0 + $0xa8] sm:$0xf]
  %v82 = vld [vmem:[%s0 + $0xac] sm:$0xf]
  %v83 = vld [vmem:[%s0 + $0xb0] sm:$0xf]
  %v84 = vld [vmem:[%s0 + $0xb4] sm:$0xf]
  %v85 = vld [vmem:[%s0 + $0xb8] sm:$0xf]
  %v86 = vld [vmem:[%s0 + $0xbc] sm:$0xf]
  %v87 = vld [vmem:[%s0 + $0xc0] sm:$0xf]
  %v88 = vld [vmem:[%s0 + $0xc4] sm:$0xf]
  %v89 = vld [vmem:[%s0 + $0xc8] sm:$0xf]
  %v90 = vld [vmem:[%s0 + $0xcc] sm:$0xf]
  %v91 = vld [vmem:[%s0 + $0xd0] sm:$0xf]
  %v92 = vld [vmem:[%s0 + $0xd4] sm:$0xf]
  %v93 = vld [vmem:[%s0 + $0xd8] sm:$0xf]
  %v94 = vld [vmem:[%s0 + $0xdc] sm:$0xf]
  %v95 = vld [vmem:[%s0 + $0xe0] sm:$0xf]
  %v96 = vld [vmem:[%s0 + $0xe4] sm:$0xf]
  %v97 = vld [vmem:[%s0 + $0xe8] sm:$0xf]
  %v98 = vld [vmem:[%s0 + $0xec] sm:$0xf]
  %v99 = vld [vmem:[%s0 + $0xf0] sm:$0xf]
  %v100 = vld [vmem:[%s0 + $0xf4] sm:$0xf]
  %v101 = vld [vmem:[%s0 + $0xf8] sm:$0xf]
  %v102 = vld [vmem:[%s0 + $0xfc] sm:$0xf]
  %v103 = vld [vmem:[%s0 + $0x100] sm:$0xf]
  %v104 = vld [vmem:[%s0 + $0x104] sm:$0xf]
  %v105 = vld [vmem:[%s0 + $0x108] sm:$0xf]
  %v106 = vld [vmem:[%s0 + $0x10c] sm:$0xf]
  %v107 = vld [vmem:[%s0 + $0x110] sm:$0xf]
  %v108 = vld [vmem:[%s0 + $0x114] sm:$0xf]
  %v109 = vld [vmem:[%s0 + $0x118] sm:$0xf]
  %v110 = vld [vmem:[%s0 + $0x11c] sm:$0xf]
  %v111 = vld [vmem:[%s0 + $0x120] sm:$0xf]
  %v112 = vld [vmem:[%s0 + $0x124] sm:$0xf]
  %v113 = vld [vmem:[%s0 + $0x128] sm:$0xf]
  %v114 = vld [vmem:[%s1] sm:$0x77]
  %v115 = vld [vmem:[%s2] sm:$0x3]
  %v117 = vperm.slane %v115, 0
  %v118 = vperm.slane %v115, 1
  %v196 = vunpack.c.l.b16 %v39
  %v197 = vunpack.c.l.b16 %v40
  %v198 = vunpack.c.l.b16 %v41
  %v199 = vunpack.c.l.b16 %v42
  %v200 = vunpack.c.l.b16 %v43
  %v201 = vunpack.c.l.b16 %v44
  %v202 = vunpack.c.l.b16 %v45
  %v203 = vunpack.c.l.b16 %v46
  %v204 = vunpack.c.l.b16 %v47
  %v205 = vunpack.c.l.b16 %v48
  %v206 = vunpack.c.l.b16 %v49
  %v207 = vunpack.c.l.b16 %v50
  %v208 = vunpack.c.l.b16 %v51
  %v209 = vunpack.c.l.b16 %v52
  %v210 = vunpack.c.l.b16 %v53
  %v211 = vunpack.c.l.b16 %v54
  %v212 = vunpack.c.l.b16 %v55
  %v213 = vunpack.c.l.b16 %v56
  %v214 = vunpack.c.l.b16 %v57
  %v215 = vunpack.c.l.b16 %v58
  %v216 = vunpack.c.l.b16 %v59
  %v217 = vunpack.c.l.b16 %v60
  %v218 = vunpack.c.l.b16 %v61
  %v219 = vunpack.c.l.b16 %v62
  %v220 = vunpack.c.l.b16 %v63
  %v221 = vunpack.c.l.b16 %v64
  %v222 = vunpack.c.l.b16 %v65
  %v223 = vunpack.c.l.b16 %v66
  %v224 = vunpack.c.l.b16 %v67
  %v225 = vunpack.c.l.b16 %v68
  %v226 = vunpack.c.l.b16 %v69
  %v227 = vunpack.c.l.b16 %v70
  %v228 = vunpack.c.l.b16 %v71
  %v229 = vunpack.c.l.b16 %v72
  %v230 = vunpack.c.l.b16 %v73
  %v231 = vunpack.c.l.b16 %v74
  %v232 = vunpack.c.l.b16 %v75
  %v233 = vunpack.c.l.b16 %v76
  %v234 = vunpack.c.l.b16 %v77
  %v235 = vunpack.c.l.b16 %v78
  %v236 = vunpack.c.l.b16 %v79
  %v237 = vunpack.c.l.b16 %v80
  %v238 = vunpack.c.l.b16 %v81
  %v239 = vunpack.c.l.b16 %v82
  %v240 = vunpack.c.l.b16 %v83
  %v241 = vunpack.c.l.b16 %v84
  %v242 = vunpack.c.l.b16 %v85
  %v243 = vunpack.c.l.b16 %v86
  %v244 = vunpack.c.l.b16 %v87
  %v245 = vunpack.c.l.b16 %v88
  %v246 = vunpack.c.l.b16 %v89
  %v247 = vunpack.c.l.b16 %v90
  %v248 = vunpack.c.l.b16 %v91
  %v249 = vunpack.c.l.b16 %v92
  %v250 = vunpack.c.l.b16 %v93
  %v251 = vunpack.c.l.b16 %v94
  %v252 = vunpack.c.l.b16 %v95
  %v253 = vunpack.c.l.b16 %v96
  %v254 = vunpack.c.l.b16 %v97
  %v255 = vunpack.c.l.b16 %v98
  %v256 = vunpack.c.l.b16 %v99
  %v257 = vunpack.c.l.b16 %v100
  %v258 = vunpack.c.l.b16 %v101
  %v259 = vunpack.c.l.b16 %v102
  %v260 = vunpack.c.l.b16 %v103
  %v261 = vunpack.c.l.b16 %v104
  %v262 = vunpack.c.l.b16 %v105
  %v263 = vunpack.c.l.b16 %v106
  %v264 = vunpack.c.l.b16 %v107
  %v265 = vunpack.c.l.b16 %v108
  %v266 = vunpack.c.l.b16 %v109
  %v267 = vunpack.c.l.b16 %v110
  %v268 = vunpack.c.l.b16 %v111
  %v269 = vunpack.c.l.b16 %v112
  %v270 = vunpack.c.l.b16 %v113
  %v271 = vpack.c.b16 %v197, %v196
  %v272 = vpack.c.b16 %v199, %v198
  %v273 = vpack.c.b16 %v201, %v200
  %v274 = vpack.c.b16 %v203, %v202
  %v275 = vpack.c.b16 %v205, %v204
  %v276 = vpack.c.b16 %v207, %v206
  %v277 = vpack.c.b16 %v209, %v208
  %v278 = vpack.c.b16 %v211, %v210
  %v279 = vpack.c.b16 %v213, %v212
  %v280 = vpack.c.b16 %v215, %v214
  %v281 = vpack.c.b16 %v217, %v216
  %v282 = vpack.c.b16 %v219, %v218
  %v283 = vpack.c.b16 %v221, %v220
  %v284 = vpack.c.b16 %v223, %v222
  %v285 = vpack.c.b16 %v225, %v224
  %v286 = vpack.c.b16 %v227, %v226
  %v287 = vpack.c.b16 %v229, %v228
  %v288 = vpack.c.b16 %v231, %v230
  %v289 = vpack.c.b16 %v233, %v232
  %v290 = vpack.c.b16 %v235, %v234
  %v291 = vpack.c.b16 %v237, %v236
  %v292 = vpack.c.b16 %v239, %v238
  %v293 = vpack.c.b16 %v241, %v240
  %v294 = vpack.c.b16 %v243, %v242
  %v295 = vpack.c.b16 %v245, %v244
  %v296 = vpack.c.b16 %v247, %v246
  %v297 = vpack.c.b16 %v249, %v248
  %v298 = vpack.c.b16 %v251, %v250
  %v299 = vpack.c.b16 %v253, %v252
  %v300 = vpack.c.b16 %v255, %v254
  %v301 = vpack.c.b16 %v257, %v256
  %v302 = vpack.c.b16 %v259, %v258
  %v303 = vpack.c.b16 %v261, %v260
  %v304 = vpack.c.b16 %v263, %v262
  %v305 = vpack.c.b16 %v265, %v264
  %v306 = vpack.c.b16 %v267, %v266
  %v307 = vpack.c.b16 %v269, %v268
  %v308 = vpack.c.b16 %v270, %v270
  %v310 = vunpack.c.l.b16 %v114
  %v311 = vunpack.c.h.b16 %v114
  %v312 = vpack.c.b16 %v310, %v310
  %v313 = vpack.c.b16 %v311, %v311
  %vm314 = vcmask 48128
  %v316 = vsel %vm314, %v271, 0
  %v319 = vsel %vm314, %v272, 0
  %v322 = vsel %vm314, %v273, 0
  %v325 = vsel %vm314, %v274, 0
  %v328 = vsel %vm314, %v275, 0
  %v331 = vsel %vm314, %v276, 0
  %v334 = vsel %vm314, %v277, 0
  %v337 = vsel %vm314, %v278, 0
  %v340 = vsel %vm314, %v279, 0
  %v343 = vsel %vm314, %v280, 0
  %v346 = vsel %vm314, %v281, 0
  %v349 = vsel %vm314, %v282, 0
  %v352 = vsel %vm314, %v283, 0
  %v355 = vsel %vm314, %v284, 0
  %v358 = vsel %vm314, %v285, 0
  %v361 = vsel %vm314, %v286, 0
  %v364 = vsel %vm314, %v287, 0
  %v367 = vsel %vm314, %v288, 0
  %v370 = vsel %vm314, %v289, 0
  %v373 = vsel %vm314, %v290, 0
  %v376 = vsel %vm314, %v291, 0
  %v379 = vsel %vm314, %v292, 0
  %v382 = vsel %vm314, %v293, 0
  %v385 = vsel %vm314, %v294, 0
  %v388 = vsel %vm314, %v295, 0
  %v391 = vsel %vm314, %v296, 0
  %v394 = vsel %vm314, %v297, 0
  %v397 = vsel %vm314, %v298, 0
  %v400 = vsel %vm314, %v299, 0
  %v403 = vsel %vm314, %v300, 0
  %v406 = vsel %vm314, %v301, 0
  %v409 = vsel %vm314, %v302, 0
  %v412 = vsel %vm314, %v303, 0
  %v415 = vsel %vm314, %v304, 0
  %v418 = vsel %vm314, %v305, 0
  %v421 = vsel %vm314, %v306, 0
  %v424 = vsel %vm314, %v307, 0
  %v427 = vsel %vm314, %v308, 0
  %vm429 = vcmask 1042432
  %v431 = vsel %vm429, %v312, 0
  %v434 = vsel %vm429, %v313, 0
  %436 = vmatpush.bf16.msra.mxu0 0
  %437 = vmatpush.bf16.msra.mxu0 0
  %438 = vmatpush.bf16.msra.mxu0 0
  %439 = vmatpush.bf16.msra.mxu0 0
  %440 = vmatpush.bf16.msra.mxu0 0
  %441 = vmatpush.bf16.msra.mxu0 0
  %442 = vmatpush.bf16.msra.mxu0 0
  %443 = vmatpush.bf16.msra.mxu0 %v431
  %444 = vmatmul.bf16.gmra.mxu0 %v316
  %v445 = vpop.f32.mrf.mxu0
  %v446 = vadd.f32 %v117, %v445
  %v447 = vpop.f32.mrf.mxu0
  %v448 = vadd.f32 %v117, %v447
  %449 = vmatmul.bf16.gmra.mxu0 %v319
  %v450 = vpop.f32.mrf.mxu0
  %v451 = vadd.f32 %v117, %v450
  %v452 = vpop.f32.mrf.mxu0
  %v453 = vadd.f32 %v117, %v452
  %454 = vmatmul.bf16.gmra.mxu0 %v322
  %v455 = vpop.f32.mrf.mxu0
  %v456 = vadd.f32 %v117, %v455
  %v457 = vpop.f32.mrf.mxu0
  %v458 = vadd.f32 %v117, %v457
  %459 = vmatmul.bf16.gmra.mxu0 %v325
  %v460 = vpop.f32.mrf.mxu0
  %v461 = vadd.f32 %v117, %v460
  %v462 = vpop.f32.mrf.mxu0
  %v463 = vadd.f32 %v117, %v462
  %464 = vmatmul.bf16.gmra.mxu0 %v328
  %v465 = vpop.f32.mrf.mxu0
  %v466 = vadd.f32 %v117, %v465
  %v467 = vpop.f32.mrf.mxu0
  %v468 = vadd.f32 %v117, %v467
  %469 = vmatmul.bf16.gmra.mxu0 %v331
  %v470 = vpop.f32.mrf.mxu0
  %v471 = vadd.f32 %v117, %v470
  %v472 = vpop.f32.mrf.mxu0
  %v473 = vadd.f32 %v117, %v472
  %474 = vmatmul.bf16.gmra.mxu0 %v334
  %v475 = vpop.f32.mrf.mxu0
  %v476 = vadd.f32 %v117, %v475
  %v477 = vpop.f32.mrf.mxu0
  %v478 = vadd.f32 %v117, %v477
  %479 = vmatmul.bf16.gmra.mxu0 %v337
  %v480 = vpop.f32.mrf.mxu0
  %v481 = vadd.f32 %v117, %v480
  %v482 = vpop.f32.mrf.mxu0
  %v483 = vadd.f32 %v117, %v482
  %484 = vmatmul.bf16.gmra.mxu0 %v340
  %v485 = vpop.f32.mrf.mxu0
  %v486 = vadd.f32 %v117, %v485
  %v487 = vpop.f32.mrf.mxu0
  %v488 = vadd.f32 %v117, %v487
  %489 = vmatmul.bf16.gmra.mxu0 %v343
  %v490 = vpop.f32.mrf.mxu0
  %v491 = vadd.f32 %v117, %v490
  %v492 = vpop.f32.mrf.mxu0
  %v493 = vadd.f32 %v117, %v492
  %494 = vmatmul.bf16.gmra.mxu0 %v346
  %v495 = vpop.f32.mrf.mxu0
  %v496 = vadd.f32 %v117, %v495
  %v497 = vpop.f32.mrf.mxu0
  %v498 = vadd.f32 %v117, %v497
  %499 = vmatmul.bf16.gmra.mxu0 %v349
  %v500 = vpop.f32.mrf.mxu0
  %v501 = vadd.f32 %v117, %v500
  %v502 = vpop.f32.mrf.mxu0
  %v503 = vadd.f32 %v117, %v502
  %504 = vmatmul.bf16.gmra.mxu0 %v352
  %v505 = vpop.f32.mrf.mxu0
  %v506 = vadd.f32 %v117, %v505
  %v507 = vpop.f32.mrf.mxu0
  %v508 = vadd.f32 %v117, %v507
  %509 = vmatmul.bf16.gmra.mxu0 %v355
  %v510 = vpop.f32.mrf.mxu0
  %v511 = vadd.f32 %v117, %v510
  %v512 = vpop.f32.mrf.mxu0
  %v513 = vadd.f32 %v117, %v512
  %514 = vmatmul.bf16.gmra.mxu0 %v358
  %v515 = vpop.f32.mrf.mxu0
  %v516 = vadd.f32 %v117, %v515
  %v517 = vpop.f32.mrf.mxu0
  %v518 = vadd.f32 %v117, %v517
  %519 = vmatmul.bf16.gmra.mxu0 %v361
  %v520 = vpop.f32.mrf.mxu0
  %v521 = vadd.f32 %v117, %v520
  %v522 = vpop.f32.mrf.mxu0
  %v523 = vadd.f32 %v117, %v522
  %524 = vmatmul.bf16.gmra.mxu0 %v364
  %v525 = vpop.f32.mrf.mxu0
  %v526 = vadd.f32 %v117, %v525
  %v527 = vpop.f32.mrf.mxu0
  %v528 = vadd.f32 %v117, %v527
  %529 = vmatmul.bf16.gmra.mxu0 %v367
  %v530 = vpop.f32.mrf.mxu0
  %v531 = vadd.f32 %v117, %v530
  %v532 = vpop.f32.mrf.mxu0
  %v533 = vadd.f32 %v117, %v532
  %534 = vmatmul.bf16.gmra.mxu0 %v370
  %v535 = vpop.f32.mrf.mxu0
  %v536 = vadd.f32 %v117, %v535
  %v537 = vpop.f32.mrf.mxu0
  %v538 = vadd.f32 %v117, %v537
  %539 = vmatmul.bf16.gmra.mxu0 %v373
  %v540 = vpop.f32.mrf.mxu0
  %v541 = vadd.f32 %v117, %v540
  %v542 = vpop.f32.mrf.mxu0
  %v543 = vadd.f32 %v117, %v542
  %544 = vmatmul.bf16.gmra.mxu0 %v376
  %v545 = vpop.f32.mrf.mxu0
  %v546 = vadd.f32 %v117, %v545
  %v547 = vpop.f32.mrf.mxu0
  %v548 = vadd.f32 %v117, %v547
  %549 = vmatmul.bf16.gmra.mxu0 %v379
  %v550 = vpop.f32.mrf.mxu0
  %v551 = vadd.f32 %v117, %v550
  %v552 = vpop.f32.mrf.mxu0
  %v553 = vadd.f32 %v117, %v552
  %554 = vmatmul.bf16.gmra.mxu0 %v382
  %v555 = vpop.f32.mrf.mxu0
  %v556 = vadd.f32 %v117, %v555
  %v557 = vpop.f32.mrf.mxu0
  %v558 = vadd.f32 %v117, %v557
  %559 = vmatmul.bf16.gmra.mxu0 %v385
  %v560 = vpop.f32.mrf.mxu0
  %v561 = vadd.f32 %v117, %v560
  %v562 = vpop.f32.mrf.mxu0
  %v563 = vadd.f32 %v117, %v562
  %564 = vmatmul.bf16.gmra.mxu0 %v388
  %v565 = vpop.f32.mrf.mxu0
  %v566 = vadd.f32 %v117, %v565
  %v567 = vpop.f32.mrf.mxu0
  %v568 = vadd.f32 %v117, %v567
  %569 = vmatmul.bf16.gmra.mxu0 %v391
  %v570 = vpop.f32.mrf.mxu0
  %v571 = vadd.f32 %v117, %v570
  %v572 = vpop.f32.mrf.mxu0
  %v573 = vadd.f32 %v117, %v572
  %574 = vmatmul.bf16.gmra.mxu0 %v394
  %v575 = vpop.f32.mrf.mxu0
  %v576 = vadd.f32 %v117, %v575
  %v577 = vpop.f32.mrf.mxu0
  %v578 = vadd.f32 %v117, %v577
  %579 = vmatmul.bf16.gmra.mxu0 %v397
  %v580 = vpop.f32.mrf.mxu0
  %v581 = vadd.f32 %v117, %v580
  %v582 = vpop.f32.mrf.mxu0
  %v583 = vadd.f32 %v117, %v582
  %584 = vmatmul.bf16.gmra.mxu0 %v400
  %v585 = vpop.f32.mrf.mxu0
  %v586 = vadd.f32 %v117, %v585
  %v587 = vpop.f32.mrf.mxu0
  %v588 = vadd.f32 %v117, %v587
  %589 = vmatmul.bf16.gmra.mxu0 %v403
  %v590 = vpop.f32.mrf.mxu0
  %v591 = vadd.f32 %v117, %v590
  %v592 = vpop.f32.mrf.mxu0
  %v593 = vadd.f32 %v117, %v592
  %594 = vmatmul.bf16.gmra.mxu0 %v406
  %v595 = vpop.f32.mrf.mxu0
  %v596 = vadd.f32 %v117, %v595
  %v597 = vpop.f32.mrf.mxu0
  %v598 = vadd.f32 %v117, %v597
  %599 = vmatmul.bf16.gmra.mxu0 %v409
  %v600 = vpop.f32.mrf.mxu0
  %v601 = vadd.f32 %v117, %v600
  %v602 = vpop.f32.mrf.mxu0
  %v603 = vadd.f32 %v117, %v602
  %604 = vmatmul.bf16.gmra.mxu0 %v412
  %v605 = vpop.f32.mrf.mxu0
  %v606 = vadd.f32 %v117, %v605
  %v607 = vpop.f32.mrf.mxu0
  %v608 = vadd.f32 %v117, %v607
  %609 = vmatmul.bf16.gmra.mxu0 %v415
  %v610 = vpop.f32.mrf.mxu0
  %v611 = vadd.f32 %v117, %v610
  %v612 = vpop.f32.mrf.mxu0
  %v613 = vadd.f32 %v117, %v612
  %614 = vmatmul.bf16.gmra.mxu0 %v418
  %v615 = vpop.f32.mrf.mxu0
  %v616 = vadd.f32 %v117, %v615
  %v617 = vpop.f32.mrf.mxu0
  %v618 = vadd.f32 %v117, %v617
  %619 = vmatmul.bf16.gmra.mxu0 %v421
  %v620 = vpop.f32.mrf.mxu0
  %v621 = vadd.f32 %v117, %v620
  %v622 = vpop.f32.mrf.mxu0
  %v623 = vadd.f32 %v117, %v622
  %624 = vmatmul.bf16.gmra.mxu0 %v424
  %v625 = vpop.f32.mrf.mxu0
  %v626 = vadd.f32 %v117, %v625
  %v627 = vpop.f32.mrf.mxu0
  %v628 = vadd.f32 %v117, %v627
  %629 = vmatmul.bf16.gmra.mxu0 %v427
  %v630 = vpop.f32.mrf.mxu0
  %v631 = vadd.f32 %v117, %v630
  %v632 = vpop.f32.mrf.mxu0
  %633 = vdwg.mxu0
  %634 = vmatpush.bf16.msra.mxu0 0
  %635 = vmatpush.bf16.msra.mxu0 0
  %636 = vmatpush.bf16.msra.mxu0 0
  %637 = vmatpush.bf16.msra.mxu0 0
  %638 = vmatpush.bf16.msra.mxu0 0
  %639 = vmatpush.bf16.msra.mxu0 0
  %640 = vmatpush.bf16.msra.mxu0 0
  %641 = vmatpush.bf16.msra.mxu0 %v434
  %642 = vmatmul.bf16.gmra.mxu0 %v316
  %v643 = vpop.f32.mrf.mxu0
  %v644 = vadd.f32 %v118, %v643
  %v645 = vpop.f32.mrf.mxu0
  %v646 = vadd.f32 %v118, %v645
  %647 = vmatmul.bf16.gmra.mxu0 %v319
  %v648 = vpop.f32.mrf.mxu0
  %v649 = vadd.f32 %v118, %v648
  %v650 = vpop.f32.mrf.mxu0
  %v651 = vadd.f32 %v118, %v650
  %652 = vmatmul.bf16.gmra.mxu0 %v322
  %v653 = vpop.f32.mrf.mxu0
  %v654 = vadd.f32 %v118, %v653
  %v655 = vpop.f32.mrf.mxu0
  %v656 = vadd.f32 %v118, %v655
  %657 = vmatmul.bf16.gmra.mxu0 %v325
  %v658 = vpop.f32.mrf.mxu0
  %v659 = vadd.f32 %v118, %v658
  %v660 = vpop.f32.mrf.mxu0
  %v661 = vadd.f32 %v118, %v660
  %662 = vmatmul.bf16.gmra.mxu0 %v328
  %v663 = vpop.f32.mrf.mxu0
  %v664 = vadd.f32 %v118, %v663
  %v665 = vpop.f32.mrf.mxu0
  %v666 = vadd.f32 %v118, %v665
  %667 = vmatmul.bf16.gmra.mxu0 %v331
  %v668 = vpop.f32.mrf.mxu0
  %v669 = vadd.f32 %v118, %v668
  %v670 = vpop.f32.mrf.mxu0
  %v671 = vadd.f32 %v118, %v670
  %672 = vmatmul.bf16.gmra.mxu0 %v334
  %v673 = vpop.f32.mrf.mxu0
  %v674 = vadd.f32 %v118, %v673
  %v675 = vpop.f32.mrf.mxu0
  %v676 = vadd.f32 %v118, %v675
  %677 = vmatmul.bf16.gmra.mxu0 %v337
  %v678 = vpop.f32.mrf.mxu0
  %v679 = vadd.f32 %v118, %v678
  %v680 = vpop.f32.mrf.mxu0
  %v681 = vadd.f32 %v118, %v680
  %682 = vmatmul.bf16.gmra.mxu0 %v340
  %v683 = vpop.f32.mrf.mxu0
  %v684 = vadd.f32 %v118, %v683
  %v685 = vpop.f32.mrf.mxu0
  %v686 = vadd.f32 %v118, %v685
  %687 = vmatmul.bf16.gmra.mxu0 %v343
  %v688 = vpop.f32.mrf.mxu0
  %v689 = vadd.f32 %v118, %v688
  %v690 = vpop.f32.mrf.mxu0
  %v691 = vadd.f32 %v118, %v690
  %692 = vmatmul.bf16.gmra.mxu0 %v346
  %v693 = vpop.f32.mrf.mxu0
  %v694 = vadd.f32 %v118, %v693
  %v695 = vpop.f32.mrf.mxu0
  %v696 = vadd.f32 %v118, %v695
  %697 = vmatmul.bf16.gmra.mxu0 %v349
  %v698 = vpop.f32.mrf.mxu0
  %v699 = vadd.f32 %v118, %v698
  %v700 = vpop.f32.mrf.mxu0
  %v701 = vadd.f32 %v118, %v700
  %702 = vmatmul.bf16.gmra.mxu0 %v352
  %v703 = vpop.f32.mrf.mxu0
  %v704 = vadd.f32 %v118, %v703
  %v705 = vpop.f32.mrf.mxu0
  %v706 = vadd.f32 %v118, %v705
  %707 = vmatmul.bf16.gmra.mxu0 %v355
  %v708 = vpop.f32.mrf.mxu0
  %v709 = vadd.f32 %v118, %v708
  %v710 = vpop.f32.mrf.mxu0
  %v711 = vadd.f32 %v118, %v710
  %712 = vmatmul.bf16.gmra.mxu0 %v358
  %v713 = vpop.f32.mrf.mxu0
  %v714 = vadd.f32 %v118, %v713
  %v715 = vpop.f32.mrf.mxu0
  %v716 = vadd.f32 %v118, %v715
  %717 = vmatmul.bf16.gmra.mxu0 %v361
  %v718 = vpop.f32.mrf.mxu0
  %v719 = vadd.f32 %v118, %v718
  %v720 = vpop.f32.mrf.mxu0
  %v721 = vadd.f32 %v118, %v720
  %722 = vmatmul.bf16.gmra.mxu0 %v364
  %v723 = vpop.f32.mrf.mxu0
  %v724 = vadd.f32 %v118, %v723
  %v725 = vpop.f32.mrf.mxu0
  %v726 = vadd.f32 %v118, %v725
  %727 = vmatmul.bf16.gmra.mxu0 %v367
  %v728 = vpop.f32.mrf.mxu0
  %v729 = vadd.f32 %v118, %v728
  %v730 = vpop.f32.mrf.mxu0
  %v731 = vadd.f32 %v118, %v730
  %732 = vmatmul.bf16.gmra.mxu0 %v370
  %v733 = vpop.f32.mrf.mxu0
  %v734 = vadd.f32 %v118, %v733
  %v735 = vpop.f32.mrf.mxu0
  %v736 = vadd.f32 %v118, %v735
  %737 = vmatmul.bf16.gmra.mxu0 %v373
  %v738 = vpop.f32.mrf.mxu0
  %v739 = vadd.f32 %v118, %v738
  %v740 = vpop.f32.mrf.mxu0
  %v741 = vadd.f32 %v118, %v740
  %742 = vmatmul.bf16.gmra.mxu0 %v376
  %v743 = vpop.f32.mrf.mxu0
  %v744 = vadd.f32 %v118, %v743
  %v745 = vpop.f32.mrf.mxu0
  %v746 = vadd.f32 %v118, %v745
  %747 = vmatmul.bf16.gmra.mxu0 %v379
  %v748 = vpop.f32.mrf.mxu0
  %v749 = vadd.f32 %v118, %v748
  %v750 = vpop.f32.mrf.mxu0
  %v751 = vadd.f32 %v118, %v750
  %752 = vmatmul.bf16.gmra.mxu0 %v382
  %v753 = vpop.f32.mrf.mxu0
  %v754 = vadd.f32 %v118, %v753
  %v755 = vpop.f32.mrf.mxu0
  %v756 = vadd.f32 %v118, %v755
  %757 = vmatmul.bf16.gmra.mxu0 %v385
  %v758 = vpop.f32.mrf.mxu0
  %v759 = vadd.f32 %v118, %v758
  %v760 = vpop.f32.mrf.mxu0
  %v761 = vadd.f32 %v118, %v760
  %762 = vmatmul.bf16.gmra.mxu0 %v388
  %v763 = vpop.f32.mrf.mxu0
  %v764 = vadd.f32 %v118, %v763
  %v765 = vpop.f32.mrf.mxu0
  %v766 = vadd.f32 %v118, %v765
  %767 = vmatmul.bf16.gmra.mxu0 %v391
  %v768 = vpop.f32.mrf.mxu0
  %v769 = vadd.f32 %v118, %v768
  %v770 = vpop.f32.mrf.mxu0
  %v771 = vadd.f32 %v118, %v770
  %772 = vmatmul.bf16.gmra.mxu0 %v394
  %v773 = vpop.f32.mrf.mxu0
  %v774 = vadd.f32 %v118, %v773
  %v775 = vpop.f32.mrf.mxu0
  %v776 = vadd.f32 %v118, %v775
  %777 = vmatmul.bf16.gmra.mxu0 %v397
  %v778 = vpop.f32.mrf.mxu0
  %v779 = vadd.f32 %v118, %v778
  %v780 = vpop.f32.mrf.mxu0
  %v781 = vadd.f32 %v118, %v780
  %782 = vmatmul.bf16.gmra.mxu0 %v400
  %v783 = vpop.f32.mrf.mxu0
  %v784 = vadd.f32 %v118, %v783
  %v785 = vpop.f32.mrf.mxu0
  %v786 = vadd.f32 %v118, %v785
  %787 = vmatmul.bf16.gmra.mxu0 %v403
  %v788 = vpop.f32.mrf.mxu0
  %v789 = vadd.f32 %v118, %v788
  %v790 = vpop.f32.mrf.mxu0
  %v791 = vadd.f32 %v118, %v790
  %792 = vmatmul.bf16.gmra.mxu0 %v406
  %v793 = vpop.f32.mrf.mxu0
  %v794 = vadd.f32 %v118, %v793
  %v795 = vpop.f32.mrf.mxu0
  %v796 = vadd.f32 %v118, %v795
  %797 = vmatmul.bf16.gmra.mxu0 %v409
  %v798 = vpop.f32.mrf.mxu0
  %v799 = vadd.f32 %v118, %v798
  %v800 = vpop.f32.mrf.mxu0
  %v801 = vadd.f32 %v118, %v800
  %802 = vmatmul.bf16.gmra.mxu0 %v412
  %v803 = vpop.f32.mrf.mxu0
  %v804 = vadd.f32 %v118, %v803
  %v805 = vpop.f32.mrf.mxu0
  %v806 = vadd.f32 %v118, %v805
  %807 = vmatmul.bf16.gmra.mxu0 %v415
  %v808 = vpop.f32.mrf.mxu0
  %v809 = vadd.f32 %v118, %v808
  %v810 = vpop.f32.mrf.mxu0
  %v811 = vadd.f32 %v118, %v810
  %812 = vmatmul.bf16.gmra.mxu0 %v418
  %v813 = vpop.f32.mrf.mxu0
  %v814 = vadd.f32 %v118, %v813
  %v815 = vpop.f32.mrf.mxu0
  %v816 = vadd.f32 %v118, %v815
  %817 = vmatmul.bf16.gmra.mxu0 %v421
  %v818 = vpop.f32.mrf.mxu0
  %v819 = vadd.f32 %v118, %v818
  %v820 = vpop.f32.mrf.mxu0
  %v821 = vadd.f32 %v118, %v820
  %822 = vmatmul.bf16.gmra.mxu0 %v424
  %v823 = vpop.f32.mrf.mxu0
  %v824 = vadd.f32 %v118, %v823
  %v825 = vpop.f32.mrf.mxu0
  %v826 = vadd.f32 %v118, %v825
  %827 = vmatmul.bf16.gmra.mxu0 %v427
  %v828 = vpop.f32.mrf.mxu0
  %v829 = vadd.f32 %v118, %v828
  %v830 = vpop.f32.mrf.mxu0
  %831 = vdwg.mxu0
  %v832 = vmax.f32 %v446, 0.0
  %v833 = vmax.f32 %v644, 0.0
  %v834 = vmax.f32 %v448, 0.0
  %v835 = vmax.f32 %v646, 0.0
  %v836 = vmax.f32 %v451, 0.0
  %v837 = vmax.f32 %v649, 0.0
  %v838 = vmax.f32 %v453, 0.0
  %v839 = vmax.f32 %v651, 0.0
  %v840 = vmax.f32 %v456, 0.0
  %v841 = vmax.f32 %v654, 0.0
  %v842 = vmax.f32 %v458, 0.0
  %v843 = vmax.f32 %v656, 0.0
  %v844 = vmax.f32 %v461, 0.0
  %v845 = vmax.f32 %v659, 0.0
  %v846 = vmax.f32 %v463, 0.0
  %v847 = vmax.f32 %v661, 0.0
  %v848 = vmax.f32 %v466, 0.0
  %v849 = vmax.f32 %v664, 0.0
  %v850 = vmax.f32 %v468, 0.0
  %v851 = vmax.f32 %v666, 0.0
  %v852 = vmax.f32 %v471, 0.0
  %v853 = vmax.f32 %v669, 0.0
  %v854 = vmax.f32 %v473, 0.0
  %v855 = vmax.f32 %v671, 0.0
  %v856 = vmax.f32 %v476, 0.0
  %v857 = vmax.f32 %v674, 0.0
  %v858 = vmax.f32 %v478, 0.0
  %v859 = vmax.f32 %v676, 0.0
  %v860 = vmax.f32 %v481, 0.0
  %v861 = vmax.f32 %v679, 0.0
  %v862 = vmax.f32 %v483, 0.0
  %v863 = vmax.f32 %v681, 0.0
  %v864 = vmax.f32 %v486, 0.0
  %v865 = vmax.f32 %v684, 0.0
  %v866 = vmax.f32 %v488, 0.0
  %v867 = vmax.f32 %v686, 0.0
  %v868 = vmax.f32 %v491, 0.0
  %v869 = vmax.f32 %v689, 0.0
  %v870 = vmax.f32 %v493, 0.0
  %v871 = vmax.f32 %v691, 0.0
  %v872 = vmax.f32 %v496, 0.0
  %v873 = vmax.f32 %v694, 0.0
  %v874 = vmax.f32 %v498, 0.0
  %v875 = vmax.f32 %v696, 0.0
  %v876 = vmax.f32 %v501, 0.0
  %v877 = vmax.f32 %v699, 0.0
  %v878 = vmax.f32 %v503, 0.0
  %v879 = vmax.f32 %v701, 0.0
  %v880 = vmax.f32 %v506, 0.0
  %v881 = vmax.f32 %v704, 0.0
  %v882 = vmax.f32 %v508, 0.0
  %v883 = vmax.f32 %v706, 0.0
  %v884 = vmax.f32 %v511, 0.0
  %v885 = vmax.f32 %v709, 0.0
  %v886 = vmax.f32 %v513, 0.0
  %v887 = vmax.f32 %v711, 0.0
  %v888 = vmax.f32 %v516, 0.0
  %v889 = vmax.f32 %v714, 0.0
  %v890 = vmax.f32 %v518, 0.0
  %v891 = vmax.f32 %v716, 0.0
  %v892 = vmax.f32 %v521, 0.0
  %v893 = vmax.f32 %v719, 0.0
  %v894 = vmax.f32 %v523, 0.0
  %v895 = vmax.f32 %v721, 0.0
  %v896 = vmax.f32 %v526, 0.0
  %v897 = vmax.f32 %v724, 0.0
  %v898 = vmax.f32 %v528, 0.0
  %v899 = vmax.f32 %v726, 0.0
  %v900 = vmax.f32 %v531, 0.0
  %v901 = vmax.f32 %v729, 0.0
  %v902 = vmax.f32 %v533, 0.0
  %v903 = vmax.f32 %v731, 0.0
  %v904 = vmax.f32 %v536, 0.0
  %v905 = vmax.f32 %v734, 0.0
  %v906 = vmax.f32 %v538, 0.0
  %v907 = vmax.f32 %v736, 0.0
  %v908 = vmax.f32 %v541, 0.0
  %v909 = vmax.f32 %v739, 0.0
  %v910 = vmax.f32 %v543, 0.0
  %v911 = vmax.f32 %v741, 0.0
  %v912 = vmax.f32 %v546, 0.0
  %v913 = vmax.f32 %v744, 0.0
  %v914 = vmax.f32 %v548, 0.0
  %v915 = vmax.f32 %v746, 0.0
  %v916 = vmax.f32 %v551, 0.0
  %v917 = vmax.f32 %v749, 0.0
  %v918 = vmax.f32 %v553, 0.0
  %v919 = vmax.f32 %v751, 0.0
  %v920 = vmax.f32 %v556, 0.0
  %v921 = vmax.f32 %v754, 0.0
  %v922 = vmax.f32 %v558, 0.0
  %v923 = vmax.f32 %v756, 0.0
  %v924 = vmax.f32 %v561, 0.0
  %v925 = vmax.f32 %v759, 0.0
  %v926 = vmax.f32 %v563, 0.0
  %v927 = vmax.f32 %v761, 0.0
  %v928 = vmax.f32 %v566, 0.0
  %v929 = vmax.f32 %v764, 0.0
  %v930 = vmax.f32 %v568, 0.0
  %v931 = vmax.f32 %v766, 0.0
  %v932 = vmax.f32 %v571, 0.0
  %v933 = vmax.f32 %v769, 0.0
  %v934 = vmax.f32 %v573, 0.0
  %v935 = vmax.f32 %v771, 0.0
  %v936 = vmax.f32 %v576, 0.0
  %v937 = vmax.f32 %v774, 0.0
  %v938 = vmax.f32 %v578, 0.0
  %v939 = vmax.f32 %v776, 0.0
  %v940 = vmax.f32 %v581, 0.0
  %v941 = vmax.f32 %v779, 0.0
  %v942 = vmax.f32 %v583, 0.0
  %v943 = vmax.f32 %v781, 0.0
  %v944 = vmax.f32 %v586, 0.0
  %v945 = vmax.f32 %v784, 0.0
  %v946 = vmax.f32 %v588, 0.0
  %v947 = vmax.f32 %v786, 0.0
  %v948 = vmax.f32 %v591, 0.0
  %v949 = vmax.f32 %v789, 0.0
  %v950 = vmax.f32 %v593, 0.0
  %v951 = vmax.f32 %v791, 0.0
  %v952 = vmax.f32 %v596, 0.0
  %v953 = vmax.f32 %v794, 0.0
  %v954 = vmax.f32 %v598, 0.0
  %v955 = vmax.f32 %v796, 0.0
  %v956 = vmax.f32 %v601, 0.0
  %v957 = vmax.f32 %v799, 0.0
  %v958 = vmax.f32 %v603, 0.0
  %v959 = vmax.f32 %v801, 0.0
  %v960 = vmax.f32 %v606, 0.0
  %v961 = vmax.f32 %v804, 0.0
  %v962 = vmax.f32 %v608, 0.0
  %v963 = vmax.f32 %v806, 0.0
  %v964 = vmax.f32 %v611, 0.0
  %v965 = vmax.f32 %v809, 0.0
  %v966 = vmax.f32 %v613, 0.0
  %v967 = vmax.f32 %v811, 0.0
  %v968 = vmax.f32 %v616, 0.0
  %v969 = vmax.f32 %v814, 0.0
  %v970 = vmax.f32 %v618, 0.0
  %v971 = vmax.f32 %v816, 0.0
  %v972 = vmax.f32 %v621, 0.0
  %v973 = vmax.f32 %v819, 0.0
  %v974 = vmax.f32 %v623, 0.0
  %v975 = vmax.f32 %v821, 0.0
  %v976 = vmax.f32 %v626, 0.0
  %v977 = vmax.f32 %v824, 0.0
  %v978 = vmax.f32 %v628, 0.0
  %v979 = vmax.f32 %v826, 0.0
  %v980 = vmax.f32 %v631, 0.0
  %v981 = vmax.f32 %v829, 0.0
  %v982 = vpack.c.bf16 %v834, %v832
  %v983 = vpack.c.bf16 %v835, %v833
  %v984 = vpack.c.bf16 %v838, %v836
  %v985 = vpack.c.bf16 %v839, %v837
  %v986 = vpack.c.bf16 %v842, %v840
  %v987 = vpack.c.bf16 %v843, %v841
  %v988 = vpack.c.bf16 %v846, %v844
  %v989 = vpack.c.bf16 %v847, %v845
  %v990 = vpack.c.bf16 %v850, %v848
  %v991 = vpack.c.bf16 %v851, %v849
  %v992 = vpack.c.bf16 %v854, %v852
  %v993 = vpack.c.bf16 %v855, %v853
  %v994 = vpack.c.bf16 %v858, %v856
  %v995 = vpack.c.bf16 %v859, %v857
  %v996 = vpack.c.bf16 %v862, %v860
  %v997 = vpack.c.bf16 %v863, %v861
  %v998 = vpack.c.bf16 %v866, %v864
  %v999 = vpack.c.bf16 %v867, %v865
  %v1000 = vpack.c.bf16 %v870, %v868
  %v1001 = vpack.c.bf16 %v871, %v869
  %v1002 = vpack.c.bf16 %v874, %v872
  %v1003 = vpack.c.bf16 %v875, %v873
  %v1004 = vpack.c.bf16 %v878, %v876
  %v1005 = vpack.c.bf16 %v879, %v877
  %v1006 = vpack.c.bf16 %v882, %v880
  %v1007 = vpack.c.bf16 %v883, %v881
  %v1008 = vpack.c.bf16 %v886, %v884
  %v1009 = vpack.c.bf16 %v887, %v885
  %v1010 = vpack.c.bf16 %v890, %v888
  %v1011 = vpack.c.bf16 %v891, %v889
  %v1012 = vpack.c.bf16 %v894, %v892
  %v1013 = vpack.c.bf16 %v895, %v893
  %v1014 = vpack.c.bf16 %v898, %v896
  %v1015 = vpack.c.bf16 %v899, %v897
  %v1016 = vpack.c.bf16 %v902, %v900
  %v1017 = vpack.c.bf16 %v903, %v901
  %v1018 = vpack.c.bf16 %v906, %v904
  %v1019 = vpack.c.bf16 %v907, %v905
  %v1020 = vpack.c.bf16 %v910, %v908
  %v1021 = vpack.c.bf16 %v911, %v909
  %v1022 = vpack.c.bf16 %v914, %v912
  %v1023 = vpack.c.bf16 %v915, %v913
  %v1024 = vpack.c.bf16 %v918, %v916
  %v1025 = vpack.c.bf16 %v919, %v917
  %v1026 = vpack.c.bf16 %v922, %v920
  %v1027 = vpack.c.bf16 %v923, %v921
  %v1028 = vpack.c.bf16 %v926, %v924
  %v1029 = vpack.c.bf16 %v927, %v925
  %v1030 = vpack.c.bf16 %v930, %v928
  %v1031 = vpack.c.bf16 %v931, %v929
  %v1032 = vpack.c.bf16 %v934, %v932
  %v1033 = vpack.c.bf16 %v935, %v933
  %v1034 = vpack.c.bf16 %v938, %v936
  %v1035 = vpack.c.bf16 %v939, %v937
  %v1036 = vpack.c.bf16 %v942, %v940
  %v1037 = vpack.c.bf16 %v943, %v941
  %v1038 = vpack.c.bf16 %v946, %v944
  %v1039 = vpack.c.bf16 %v947, %v945
  %v1040 = vpack.c.bf16 %v950, %v948
  %v1041 = vpack.c.bf16 %v951, %v949
  %v1042 = vpack.c.bf16 %v954, %v952
  %v1043 = vpack.c.bf16 %v955, %v953
  %v1044 = vpack.c.bf16 %v958, %v956
  %v1045 = vpack.c.bf16 %v959, %v957
  %v1046 = vpack.c.bf16 %v962, %v960
  %v1047 = vpack.c.bf16 %v963, %v961
  %v1048 = vpack.c.bf16 %v966, %v964
  %v1049 = vpack.c.bf16 %v967, %v965
  %v1050 = vpack.c.bf16 %v970, %v968
  %v1051 = vpack.c.bf16 %v971, %v969
  %v1052 = vpack.c.bf16 %v974, %v972
  %v1053 = vpack.c.bf16 %v975, %v973
  %v1054 = vpack.c.bf16 %v978, %v976
  %v1055 = vpack.c.bf16 %v979, %v977
  %v1056 = vpack.c.bf16 %v980, %v980
  %v1057 = vpack.c.bf16 %v981, %v981
  %v1058 = vld [vmem:[%s3] sm:$0xff]
  %v1059 = vld [vmem:[%s3 + $0x8] sm:$0xff]
  %v1060 = vld [vmem:[%s3 + $0x10] sm:$0xff]
  %v1061 = vld [vmem:[%s3 + $0x18] sm:$0xff]
  %v1062 = vld [vmem:[%s3 + $0x20] sm:$0xff]
  %v1063 = vld [vmem:[%s3 + $0x28] sm:$0xff]
  %v1064 = vld [vmem:[%s3 + $0x30] sm:$0xff]
  %v1065 = vld [vmem:[%s3 + $0x38] sm:$0xff]
  %v1066 = vld [vmem:[%s3 + $0x40] sm:$0xff]
  %v1067 = vld [vmem:[%s3 + $0x48] sm:$0xff]
  %v1068 = vld [vmem:[%s3 + $0x50] sm:$0xff]
  %v1069 = vld [vmem:[%s3 + $0x58] sm:$0xff]
  %v1070 = vld [vmem:[%s3 + $0x60] sm:$0xff]
  %v1071 = vld [vmem:[%s3 + $0x68] sm:$0xff]
  %v1072 = vld [vmem:[%s3 + $0x70] sm:$0xff]
  %v1073 = vld [vmem:[%s3 + $0x78] sm:$0xff]
  %v1074 = vld [vmem:[%s3 + $0x80] sm:$0xff]
  %v1075 = vld [vmem:[%s3 + $0x88] sm:$0xff]
  %v1076 = vld [vmem:[%s3 + $0x90] sm:$0xff]
  %v1077 = vld [vmem:[%s3 + $0x98] sm:$0xff]
  %v1078 = vld [vmem:[%s3 + $0xa0] sm:$0xff]
  %v1079 = vld [vmem:[%s3 + $0xa8] sm:$0xff]
  %v1080 = vld [vmem:[%s3 + $0xb0] sm:$0xff]
  %v1081 = vld [vmem:[%s3 + $0xb8] sm:$0xff]
  %v1082 = vld [vmem:[%s3 + $0xc0] sm:$0xff]
  %v1083 = vld [vmem:[%s3 + $0xc8] sm:$0xff]
  %v1084 = vld [vmem:[%s3 + $0xd0] sm:$0xff]
  %v1085 = vld [vmem:[%s3 + $0xd8] sm:$0xff]
  %v1086 = vld [vmem:[%s3 + $0xe0] sm:$0xff]
  %v1087 = vld [vmem:[%s3 + $0xe8] sm:$0xff]
  %v1088 = vld [vmem:[%s3 + $0xf0] sm:$0xff]
  %v1089 = vld [vmem:[%s3 + $0xf8] sm:$0xff]
  %v1090 = vld [vmem:[%s4] sm:$0x3]
  %v1092 = vperm.slane %v1090, 0
  %v1093 = vperm.slane %v1090, 1
  %v1128 = vunpack.c.l.b16 %v1058
  %v1129 = vunpack.c.h.b16 %v1058
  %v1130 = vunpack.c.l.b16 %v1059
  %v1131 = vunpack.c.h.b16 %v1059
  %v1132 = vunpack.c.l.b16 %v1060
  %v1133 = vunpack.c.h.b16 %v1060
  %v1134 = vunpack.c.l.b16 %v1061
  %v1135 = vunpack.c.h.b16 %v1061
  %v1136 = vunpack.c.l.b16 %v1062
  %v1137 = vunpack.c.h.b16 %v1062
  %v1138 = vunpack.c.l.b16 %v1063
  %v1139 = vunpack.c.h.b16 %v1063
  %v1140 = vunpack.c.l.b16 %v1064
  %v1141 = vunpack.c.h.b16 %v1064
  %v1142 = vunpack.c.l.b16 %v1065
  %v1143 = vunpack.c.h.b16 %v1065
  %v1144 = vunpack.c.l.b16 %v1066
  %v1145 = vunpack.c.h.b16 %v1066
  %v1146 = vunpack.c.l.b16 %v1067
  %v1147 = vunpack.c.h.b16 %v1067
  %v1148 = vunpack.c.l.b16 %v1068
  %v1149 = vunpack.c.h.b16 %v1068
  %v1150 = vunpack.c.l.b16 %v1069
  %v1151 = vunpack.c.h.b16 %v1069
  %v1152 = vunpack.c.l.b16 %v1070
  %v1153 = vunpack.c.h.b16 %v1070
  %v1154 = vunpack.c.l.b16 %v1071
  %v1155 = vunpack.c.h.b16 %v1071
  %v1156 = vunpack.c.l.b16 %v1072
  %v1157 = vunpack.c.h.b16 %v1072
  %v1158 = vunpack.c.l.b16 %v1073
  %v1159 = vunpack.c.h.b16 %v1073
  %v1160 = vunpack.c.l.b16 %v1074
  %v1161 = vunpack.c.h.b16 %v1074
  %v1162 = vunpack.c.l.b16 %v1075
  %v1163 = vunpack.c.h.b16 %v1075
  %v1164 = vunpack.c.l.b16 %v1076
  %v1165 = vunpack.c.h.b16 %v1076
  %v1166 = vunpack.c.l.b16 %v1077
  %v1167 = vunpack.c.h.b16 %v1077
  %v1168 = vunpack.c.l.b16 %v1078
  %v1169 = vunpack.c.h.b16 %v1078
  %v1170 = vunpack.c.l.b16 %v1079
  %v1171 = vunpack.c.h.b16 %v1079
  %v1172 = vunpack.c.l.b16 %v1080
  %v1173 = vunpack.c.h.b16 %v1080
  %v1174 = vunpack.c.l.b16 %v1081
  %v1175 = vunpack.c.h.b16 %v1081
  %v1176 = vunpack.c.l.b16 %v1082
  %v1177 = vunpack.c.h.b16 %v1082
  %v1178 = vunpack.c.l.b16 %v1083
  %v1179 = vunpack.c.h.b16 %v1083
  %v1180 = vunpack.c.l.b16 %v1084
  %v1181 = vunpack.c.h.b16 %v1084
  %v1182 = vunpack.c.l.b16 %v1085
  %v1183 = vunpack.c.h.b16 %v1085
  %v1184 = vunpack.c.l.b16 %v1086
  %v1185 = vunpack.c.h.b16 %v1086
  %v1186 = vunpack.c.l.b16 %v1087
  %v1187 = vunpack.c.h.b16 %v1087
  %v1188 = vunpack.c.l.b16 %v1088
  %v1189 = vunpack.c.h.b16 %v1088
  %v1190 = vunpack.c.l.b16 %v1089
  %v1191 = vunpack.c.h.b16 %v1089
  %v1192 = vpack.c.b16 %v1130, %v1128
  %v1193 = vpack.c.b16 %v1131, %v1129
  %v1194 = vpack.c.b16 %v1134, %v1132
  %v1195 = vpack.c.b16 %v1135, %v1133
  %v1196 = vpack.c.b16 %v1138, %v1136
  %v1197 = vpack.c.b16 %v1139, %v1137
  %v1198 = vpack.c.b16 %v1142, %v1140
  %v1199 = vpack.c.b16 %v1143, %v1141
  %v1200 = vpack.c.b16 %v1146, %v1144
  %v1201 = vpack.c.b16 %v1147, %v1145
  %v1202 = vpack.c.b16 %v1150, %v1148
  %v1203 = vpack.c.b16 %v1151, %v1149
  %v1204 = vpack.c.b16 %v1154, %v1152
  %v1205 = vpack.c.b16 %v1155, %v1153
  %v1206 = vpack.c.b16 %v1158, %v1156
  %v1207 = vpack.c.b16 %v1159, %v1157
  %v1208 = vpack.c.b16 %v1162, %v1160
  %v1209 = vpack.c.b16 %v1163, %v1161
  %v1210 = vpack.c.b16 %v1166, %v1164
  %v1211 = vpack.c.b16 %v1167, %v1165
  %v1212 = vpack.c.b16 %v1170, %v1168
  %v1213 = vpack.c.b16 %v1171, %v1169
  %v1214 = vpack.c.b16 %v1174, %v1172
  %v1215 = vpack.c.b16 %v1175, %v1173
  %v1216 = vpack.c.b16 %v1178, %v1176
  %v1217 = vpack.c.b16 %v1179, %v1177
  %v1218 = vpack.c.b16 %v1182, %v1180
  %v1219 = vpack.c.b16 %v1183, %v1181
  %v1220 = vpack.c.b16 %v1186, %v1184
  %v1221 = vpack.c.b16 %v1187, %v1185
  %v1222 = vpack.c.b16 %v1190, %v1188
  %v1223 = vpack.c.b16 %v1191, %v1189
  %1256 = vmatpush.bf16.msra.mxu0 %v1206
  %1257 = vmatpush.bf16.msra.mxu0 %v1204
  %1258 = vmatpush.bf16.msra.mxu0 %v1202
  %1259 = vmatpush.bf16.msra.mxu0 %v1200
  %1260 = vmatpush.bf16.msra.mxu0 %v1198
  %1261 = vmatpush.bf16.msra.mxu0 %v1196
  %1262 = vmatpush.bf16.msra.mxu0 %v1194
  %1263 = vmatpush.bf16.msra.mxu0 %v1192
  %1264 = vmatmul.bf16.gmra.mxu0 %v982
  %v1265 = vpop.f32.mrf.mxu0
  %v1266 = vadd.f32 %v1092, %v1265
  %v1267 = vpop.f32.mrf.mxu0
  %v1268 = vadd.f32 %v1092, %v1267
  %1269 = vmatmul.bf16.gmra.mxu0 %v984
  %v1270 = vpop.f32.mrf.mxu0
  %v1271 = vadd.f32 %v1092, %v1270
  %v1272 = vpop.f32.mrf.mxu0
  %v1273 = vadd.f32 %v1092, %v1272
  %1274 = vmatmul.bf16.gmra.mxu0 %v986
  %v1275 = vpop.f32.mrf.mxu0
  %v1276 = vadd.f32 %v1092, %v1275
  %v1277 = vpop.f32.mrf.mxu0
  %v1278 = vadd.f32 %v1092, %v1277
  %1279 = vmatmul.bf16.gmra.mxu0 %v988
  %v1280 = vpop.f32.mrf.mxu0
  %v1281 = vadd.f32 %v1092, %v1280
  %v1282 = vpop.f32.mrf.mxu0
  %v1283 = vadd.f32 %v1092, %v1282
  %1284 = vmatmul.bf16.gmra.mxu0 %v990
  %v1285 = vpop.f32.mrf.mxu0
  %v1286 = vadd.f32 %v1092, %v1285
  %v1287 = vpop.f32.mrf.mxu0
  %v1288 = vadd.f32 %v1092, %v1287
  %1289 = vmatmul.bf16.gmra.mxu0 %v992
  %v1290 = vpop.f32.mrf.mxu0
  %v1291 = vadd.f32 %v1092, %v1290
  %v1292 = vpop.f32.mrf.mxu0
  %v1293 = vadd.f32 %v1092, %v1292
  %1294 = vmatmul.bf16.gmra.mxu0 %v994
  %v1295 = vpop.f32.mrf.mxu0
  %v1296 = vadd.f32 %v1092, %v1295
  %v1297 = vpop.f32.mrf.mxu0
  %v1298 = vadd.f32 %v1092, %v1297
  %1299 = vmatmul.bf16.gmra.mxu0 %v996
  %v1300 = vpop.f32.mrf.mxu0
  %v1301 = vadd.f32 %v1092, %v1300
  %v1302 = vpop.f32.mrf.mxu0
  %v1303 = vadd.f32 %v1092, %v1302
  %1304 = vmatmul.bf16.gmra.mxu0 %v998
  %v1305 = vpop.f32.mrf.mxu0
  %v1306 = vadd.f32 %v1092, %v1305
  %v1307 = vpop.f32.mrf.mxu0
  %v1308 = vadd.f32 %v1092, %v1307
  %1309 = vmatmul.bf16.gmra.mxu0 %v1000
  %v1310 = vpop.f32.mrf.mxu0
  %v1311 = vadd.f32 %v1092, %v1310
  %v1312 = vpop.f32.mrf.mxu0
  %v1313 = vadd.f32 %v1092, %v1312
  %1314 = vmatmul.bf16.gmra.mxu0 %v1002
  %v1315 = vpop.f32.mrf.mxu0
  %v1316 = vadd.f32 %v1092, %v1315
  %v1317 = vpop.f32.mrf.mxu0
  %v1318 = vadd.f32 %v1092, %v1317
  %1319 = vmatmul.bf16.gmra.mxu0 %v1004
  %v1320 = vpop.f32.mrf.mxu0
  %v1321 = vadd.f32 %v1092, %v1320
  %v1322 = vpop.f32.mrf.mxu0
  %v1323 = vadd.f32 %v1092, %v1322
  %1324 = vmatmul.bf16.gmra.mxu0 %v1006
  %v1325 = vpop.f32.mrf.mxu0
  %v1326 = vadd.f32 %v1092, %v1325
  %v1327 = vpop.f32.mrf.mxu0
  %v1328 = vadd.f32 %v1092, %v1327
  %1329 = vmatmul.bf16.gmra.mxu0 %v1008
  %v1330 = vpop.f32.mrf.mxu0
  %v1331 = vadd.f32 %v1092, %v1330
  %v1332 = vpop.f32.mrf.mxu0
  %v1333 = vadd.f32 %v1092, %v1332
  %1334 = vmatmul.bf16.gmra.mxu0 %v1010
  %v1335 = vpop.f32.mrf.mxu0
  %v1336 = vadd.f32 %v1092, %v1335
  %v1337 = vpop.f32.mrf.mxu0
  %v1338 = vadd.f32 %v1092, %v1337
  %1339 = vmatmul.bf16.gmra.mxu0 %v1012
  %v1340 = vpop.f32.mrf.mxu0
  %v1341 = vadd.f32 %v1092, %v1340
  %v1342 = vpop.f32.mrf.mxu0
  %v1343 = vadd.f32 %v1092, %v1342
  %1344 = vmatmul.bf16.gmra.mxu0 %v1014
  %v1345 = vpop.f32.mrf.mxu0
  %v1346 = vadd.f32 %v1092, %v1345
  %v1347 = vpop.f32.mrf.mxu0
  %v1348 = vadd.f32 %v1092, %v1347
  %1349 = vmatmul.bf16.gmra.mxu0 %v1016
  %v1350 = vpop.f32.mrf.mxu0
  %v1351 = vadd.f32 %v1092, %v1350
  %v1352 = vpop.f32.mrf.mxu0
  %v1353 = vadd.f32 %v1092, %v1352
  %1354 = vmatmul.bf16.gmra.mxu0 %v1018
  %v1355 = vpop.f32.mrf.mxu0
  %v1356 = vadd.f32 %v1092, %v1355
  %v1357 = vpop.f32.mrf.mxu0
  %v1358 = vadd.f32 %v1092, %v1357
  %1359 = vmatmul.bf16.gmra.mxu0 %v1020
  %v1360 = vpop.f32.mrf.mxu0
  %v1361 = vadd.f32 %v1092, %v1360
  %v1362 = vpop.f32.mrf.mxu0
  %v1363 = vadd.f32 %v1092, %v1362
  %1364 = vmatmul.bf16.gmra.mxu0 %v1022
  %v1365 = vpop.f32.mrf.mxu0
  %v1366 = vadd.f32 %v1092, %v1365
  %v1367 = vpop.f32.mrf.mxu0
  %v1368 = vadd.f32 %v1092, %v1367
  %1369 = vmatmul.bf16.gmra.mxu0 %v1024
  %v1370 = vpop.f32.mrf.mxu0
  %v1371 = vadd.f32 %v1092, %v1370
  %v1372 = vpop.f32.mrf.mxu0
  %v1373 = vadd.f32 %v1092, %v1372
  %1374 = vmatmul.bf16.gmra.mxu0 %v1026
  %v1375 = vpop.f32.mrf.mxu0
  %v1376 = vadd.f32 %v1092, %v1375
  %v1377 = vpop.f32.mrf.mxu0
  %v1378 = vadd.f32 %v1092, %v1377
  %1379 = vmatmul.bf16.gmra.mxu0 %v1028
  %v1380 = vpop.f32.mrf.mxu0
  %v1381 = vadd.f32 %v1092, %v1380
  %v1382 = vpop.f32.mrf.mxu0
  %v1383 = vadd.f32 %v1092, %v1382
  %1384 = vmatmul.bf16.gmra.mxu0 %v1030
  %v1385 = vpop.f32.mrf.mxu0
  %v1386 = vadd.f32 %v1092, %v1385
  %v1387 = vpop.f32.mrf.mxu0
  %v1388 = vadd.f32 %v1092, %v1387
  %1389 = vmatmul.bf16.gmra.mxu0 %v1032
  %v1390 = vpop.f32.mrf.mxu0
  %v1391 = vadd.f32 %v1092, %v1390
  %v1392 = vpop.f32.mrf.mxu0
  %v1393 = vadd.f32 %v1092, %v1392
  %1394 = vmatmul.bf16.gmra.mxu0 %v1034
  %v1395 = vpop.f32.mrf.mxu0
  %v1396 = vadd.f32 %v1092, %v1395
  %v1397 = vpop.f32.mrf.mxu0
  %v1398 = vadd.f32 %v1092, %v1397
  %1399 = vmatmul.bf16.gmra.mxu0 %v1036
  %v1400 = vpop.f32.mrf.mxu0
  %v1401 = vadd.f32 %v1092, %v1400
  %v1402 = vpop.f32.mrf.mxu0
  %v1403 = vadd.f32 %v1092, %v1402
  %1404 = vmatmul.bf16.gmra.mxu0 %v1038
  %v1405 = vpop.f32.mrf.mxu0
  %v1406 = vadd.f32 %v1092, %v1405
  %v1407 = vpop.f32.mrf.mxu0
  %v1408 = vadd.f32 %v1092, %v1407
  %1409 = vmatmul.bf16.gmra.mxu0 %v1040
  %v1410 = vpop.f32.mrf.mxu0
  %v1411 = vadd.f32 %v1092, %v1410
  %v1412 = vpop.f32.mrf.mxu0
  %v1413 = vadd.f32 %v1092, %v1412
  %1414 = vmatmul.bf16.gmra.mxu0 %v1042
  %v1415 = vpop.f32.mrf.mxu0
  %v1416 = vadd.f32 %v1092, %v1415
  %v1417 = vpop.f32.mrf.mxu0
  %v1418 = vadd.f32 %v1092, %v1417
  %1419 = vmatmul.bf16.gmra.mxu0 %v1044
  %v1420 = vpop.f32.mrf.mxu0
  %v1421 = vadd.f32 %v1092, %v1420
  %v1422 = vpop.f32.mrf.mxu0
  %v1423 = vadd.f32 %v1092, %v1422
  %1424 = vmatmul.bf16.gmra.mxu0 %v1046
  %v1425 = vpop.f32.mrf.mxu0
  %v1426 = vadd.f32 %v1092, %v1425
  %v1427 = vpop.f32.mrf.mxu0
  %v1428 = vadd.f32 %v1092, %v1427
  %1429 = vmatmul.bf16.gmra.mxu0 %v1048
  %v1430 = vpop.f32.mrf.mxu0
  %v1431 = vadd.f32 %v1092, %v1430
  %v1432 = vpop.f32.mrf.mxu0
  %v1433 = vadd.f32 %v1092, %v1432
  %1434 = vmatmul.bf16.gmra.mxu0 %v1050
  %v1435 = vpop.f32.mrf.mxu0
  %v1436 = vadd.f32 %v1092, %v1435
  %v1437 = vpop.f32.mrf.mxu0
  %v1438 = vadd.f32 %v1092, %v1437
  %1439 = vmatmul.bf16.gmra.mxu0 %v1052
  %v1440 = vpop.f32.mrf.mxu0
  %v1441 = vadd.f32 %v1092, %v1440
  %v1442 = vpop.f32.mrf.mxu0
  %v1443 = vadd.f32 %v1092, %v1442
  %1444 = vmatmul.bf16.gmra.mxu0 %v1054
  %v1445 = vpop.f32.mrf.mxu0
  %v1446 = vadd.f32 %v1092, %v1445
  %v1447 = vpop.f32.mrf.mxu0
  %v1448 = vadd.f32 %v1092, %v1447
  %1449 = vmatmul.bf16.gmra.mxu0 %v1056
  %v1450 = vpop.f32.mrf.mxu0
  %v1451 = vadd.f32 %v1092, %v1450
  %v1452 = vpop.f32.mrf.mxu0
  %1453 = vdwg.mxu0
  %1454 = vmatpush.bf16.msra.mxu0 %v1222
  %1455 = vmatpush.bf16.msra.mxu0 %v1220
  %1456 = vmatpush.bf16.msra.mxu0 %v1218
  %1457 = vmatpush.bf16.msra.mxu0 %v1216
  %1458 = vmatpush.bf16.msra.mxu0 %v1214
  %1459 = vmatpush.bf16.msra.mxu0 %v1212
  %1460 = vmatpush.bf16.msra.mxu0 %v1210
  %1461 = vmatpush.bf16.msra.mxu0 %v1208
  %1462 = vmatmul.bf16.gmra.mxu0 %v983
  %v1463 = vpop.f32.mrf.mxu0
  %v1464 = vadd.f32 %v1266, %v1463
  %v1465 = vpop.f32.mrf.mxu0
  %v1466 = vadd.f32 %v1268, %v1465
  %1467 = vmatmul.bf16.gmra.mxu0 %v985
  %v1468 = vpop.f32.mrf.mxu0
  %v1469 = vadd.f32 %v1271, %v1468
  %v1470 = vpop.f32.mrf.mxu0
  %v1471 = vadd.f32 %v1273, %v1470
  %1472 = vmatmul.bf16.gmra.mxu0 %v987
  %v1473 = vpop.f32.mrf.mxu0
  %v1474 = vadd.f32 %v1276, %v1473
  %v1475 = vpop.f32.mrf.mxu0
  %v1476 = vadd.f32 %v1278, %v1475
  %1477 = vmatmul.bf16.gmra.mxu0 %v989
  %v1478 = vpop.f32.mrf.mxu0
  %v1479 = vadd.f32 %v1281, %v1478
  %v1480 = vpop.f32.mrf.mxu0
  %v1481 = vadd.f32 %v1283, %v1480
  %1482 = vmatmul.bf16.gmra.mxu0 %v991
  %v1483 = vpop.f32.mrf.mxu0
  %v1484 = vadd.f32 %v1286, %v1483
  %v1485 = vpop.f32.mrf.mxu0
  %v1486 = vadd.f32 %v1288, %v1485
  %1487 = vmatmul.bf16.gmra.mxu0 %v993
  %v1488 = vpop.f32.mrf.mxu0
  %v1489 = vadd.f32 %v1291, %v1488
  %v1490 = vpop.f32.mrf.mxu0
  %v1491 = vadd.f32 %v1293, %v1490
  %1492 = vmatmul.bf16.gmra.mxu0 %v995
  %v1493 = vpop.f32.mrf.mxu0
  %v1494 = vadd.f32 %v1296, %v1493
  %v1495 = vpop.f32.mrf.mxu0
  %v1496 = vadd.f32 %v1298, %v1495
  %1497 = vmatmul.bf16.gmra.mxu0 %v997
  %v1498 = vpop.f32.mrf.mxu0
  %v1499 = vadd.f32 %v1301, %v1498
  %v1500 = vpop.f32.mrf.mxu0
  %v1501 = vadd.f32 %v1303, %v1500
  %1502 = vmatmul.bf16.gmra.mxu0 %v999
  %v1503 = vpop.f32.mrf.mxu0
  %v1504 = vadd.f32 %v1306, %v1503
  %v1505 = vpop.f32.mrf.mxu0
  %v1506 = vadd.f32 %v1308, %v1505
  %1507 = vmatmul.bf16.gmra.mxu0 %v1001
  %v1508 = vpop.f32.mrf.mxu0
  %v1509 = vadd.f32 %v1311, %v1508
  %v1510 = vpop.f32.mrf.mxu0
  %v1511 = vadd.f32 %v1313, %v1510
  %1512 = vmatmul.bf16.gmra.mxu0 %v1003
  %v1513 = vpop.f32.mrf.mxu0
  %v1514 = vadd.f32 %v1316, %v1513
  %v1515 = vpop.f32.mrf.mxu0
  %v1516 = vadd.f32 %v1318, %v1515
  %1517 = vmatmul.bf16.gmra.mxu0 %v1005
  %v1518 = vpop.f32.mrf.mxu0
  %v1519 = vadd.f32 %v1321, %v1518
  %v1520 = vpop.f32.mrf.mxu0
  %v1521 = vadd.f32 %v1323, %v1520
  %1522 = vmatmul.bf16.gmra.mxu0 %v1007
  %v1523 = vpop.f32.mrf.mxu0
  %v1524 = vadd.f32 %v1326, %v1523
  %v1525 = vpop.f32.mrf.mxu0
  %v1526 = vadd.f32 %v1328, %v1525
  %1527 = vmatmul.bf16.gmra.mxu0 %v1009
  %v1528 = vpop.f32.mrf.mxu0
  %v1529 = vadd.f32 %v1331, %v1528
  %v1530 = vpop.f32.mrf.mxu0
  %v1531 = vadd.f32 %v1333, %v1530
  %1532 = vmatmul.bf16.gmra.mxu0 %v1011
  %v1533 = vpop.f32.mrf.mxu0
  %v1534 = vadd.f32 %v1336, %v1533
  %v1535 = vpop.f32.mrf.mxu0
  %v1536 = vadd.f32 %v1338, %v1535
  %1537 = vmatmul.bf16.gmra.mxu0 %v1013
  %v1538 = vpop.f32.mrf.mxu0
  %v1539 = vadd.f32 %v1341, %v1538
  %v1540 = vpop.f32.mrf.mxu0
  %v1541 = vadd.f32 %v1343, %v1540
  %1542 = vmatmul.bf16.gmra.mxu0 %v1015
  %v1543 = vpop.f32.mrf.mxu0
  %v1544 = vadd.f32 %v1346, %v1543
  %v1545 = vpop.f32.mrf.mxu0
  %v1546 = vadd.f32 %v1348, %v1545
  %1547 = vmatmul.bf16.gmra.mxu0 %v1017
  %v1548 = vpop.f32.mrf.mxu0
  %v1549 = vadd.f32 %v1351, %v1548
  %v1550 = vpop.f32.mrf.mxu0
  %v1551 = vadd.f32 %v1353, %v1550
  %1552 = vmatmul.bf16.gmra.mxu0 %v1019
  %v1553 = vpop.f32.mrf.mxu0
  %v1554 = vadd.f32 %v1356, %v1553
  %v1555 = vpop.f32.mrf.mxu0
  %v1556 = vadd.f32 %v1358, %v1555
  %1557 = vmatmul.bf16.gmra.mxu0 %v1021
  %v1558 = vpop.f32.mrf.mxu0
  %v1559 = vadd.f32 %v1361, %v1558
  %v1560 = vpop.f32.mrf.mxu0
  %v1561 = vadd.f32 %v1363, %v1560
  %1562 = vmatmul.bf16.gmra.mxu0 %v1023
  %v1563 = vpop.f32.mrf.mxu0
  %v1564 = vadd.f32 %v1366, %v1563
  %v1565 = vpop.f32.mrf.mxu0
  %v1566 = vadd.f32 %v1368, %v1565
  %1567 = vmatmul.bf16.gmra.mxu0 %v1025
  %v1568 = vpop.f32.mrf.mxu0
  %v1569 = vadd.f32 %v1371, %v1568
  %v1570 = vpop.f32.mrf.mxu0
  %v1571 = vadd.f32 %v1373, %v1570
  %1572 = vmatmul.bf16.gmra.mxu0 %v1027
  %v1573 = vpop.f32.mrf.mxu0
  %v1574 = vadd.f32 %v1376, %v1573
  %v1575 = vpop.f32.mrf.mxu0
  %v1576 = vadd.f32 %v1378, %v1575
  %1577 = vmatmul.bf16.gmra.mxu0 %v1029
  %v1578 = vpop.f32.mrf.mxu0
  %v1579 = vadd.f32 %v1381, %v1578
  %v1580 = vpop.f32.mrf.mxu0
  %v1581 = vadd.f32 %v1383, %v1580
  %1582 = vmatmul.bf16.gmra.mxu0 %v1031
  %v1583 = vpop.f32.mrf.mxu0
  %v1584 = vadd.f32 %v1386, %v1583
  %v1585 = vpop.f32.mrf.mxu0
  %v1586 = vadd.f32 %v1388, %v1585
  %1587 = vmatmul.bf16.gmra.mxu0 %v1033
  %v1588 = vpop.f32.mrf.mxu0
  %v1589 = vadd.f32 %v1391, %v1588
  %v1590 = vpop.f32.mrf.mxu0
  %v1591 = vadd.f32 %v1393, %v1590
  %1592 = vmatmul.bf16.gmra.mxu0 %v1035
  %v1593 = vpop.f32.mrf.mxu0
  %v1594 = vadd.f32 %v1396, %v1593
  %v1595 = vpop.f32.mrf.mxu0
  %v1596 = vadd.f32 %v1398, %v1595
  %1597 = vmatmul.bf16.gmra.mxu0 %v1037
  %v1598 = vpop.f32.mrf.mxu0
  %v1599 = vadd.f32 %v1401, %v1598
  %v1600 = vpop.f32.mrf.mxu0
  %v1601 = vadd.f32 %v1403, %v1600
  %1602 = vmatmul.bf16.gmra.mxu0 %v1039
  %v1603 = vpop.f32.mrf.mxu0
  %v1604 = vadd.f32 %v1406, %v1603
  %v1605 = vpop.f32.mrf.mxu0
  %v1606 = vadd.f32 %v1408, %v1605
  %1607 = vmatmul.bf16.gmra.mxu0 %v1041
  %v1608 = vpop.f32.mrf.mxu0
  %v1609 = vadd.f32 %v1411, %v1608
  %v1610 = vpop.f32.mrf.mxu0
  %v1611 = vadd.f32 %v1413, %v1610
  %1612 = vmatmul.bf16.gmra.mxu0 %v1043
  %v1613 = vpop.f32.mrf.mxu0
  %v1614 = vadd.f32 %v1416, %v1613
  %v1615 = vpop.f32.mrf.mxu0
  %v1616 = vadd.f32 %v1418, %v1615
  %1617 = vmatmul.bf16.gmra.mxu0 %v1045
  %v1618 = vpop.f32.mrf.mxu0
  %v1619 = vadd.f32 %v1421, %v1618
  %v1620 = vpop.f32.mrf.mxu0
  %v1621 = vadd.f32 %v1423, %v1620
  %1622 = vmatmul.bf16.gmra.mxu0 %v1047
  %v1623 = vpop.f32.mrf.mxu0
  %v1624 = vadd.f32 %v1426, %v1623
  %v1625 = vpop.f32.mrf.mxu0
  %v1626 = vadd.f32 %v1428, %v1625
  %1627 = vmatmul.bf16.gmra.mxu0 %v1049
  %v1628 = vpop.f32.mrf.mxu0
  %v1629 = vadd.f32 %v1431, %v1628
  %v1630 = vpop.f32.mrf.mxu0
  %v1631 = vadd.f32 %v1433, %v1630
  %1632 = vmatmul.bf16.gmra.mxu0 %v1051
  %v1633 = vpop.f32.mrf.mxu0
  %v1634 = vadd.f32 %v1436, %v1633
  %v1635 = vpop.f32.mrf.mxu0
  %v1636 = vadd.f32 %v1438, %v1635
  %1637 = vmatmul.bf16.gmra.mxu0 %v1053
  %v1638 = vpop.f32.mrf.mxu0
  %v1639 = vadd.f32 %v1441, %v1638
  %v1640 = vpop.f32.mrf.mxu0
  %v1641 = vadd.f32 %v1443, %v1640
  %1642 = vmatmul.bf16.gmra.mxu0 %v1055
  %v1643 = vpop.f32.mrf.mxu0
  %v1644 = vadd.f32 %v1446, %v1643
  %v1645 = vpop.f32.mrf.mxu0
  %v1646 = vadd.f32 %v1448, %v1645
  %1647 = vmatmul.bf16.gmra.mxu0 %v1057
  %v1648 = vpop.f32.mrf.mxu0
  %v1649 = vadd.f32 %v1451, %v1648
  %v1650 = vpop.f32.mrf.mxu0
  %1651 = vdwg.mxu0
  %1652 = vmatpush.bf16.msra.mxu0 %v1207
  %1653 = vmatpush.bf16.msra.mxu0 %v1205
  %1654 = vmatpush.bf16.msra.mxu0 %v1203
  %1655 = vmatpush.bf16.msra.mxu0 %v1201
  %1656 = vmatpush.bf16.msra.mxu0 %v1199
  %1657 = vmatpush.bf16.msra.mxu0 %v1197
  %1658 = vmatpush.bf16.msra.mxu0 %v1195
  %1659 = vmatpush.bf16.msra.mxu0 %v1193
  %1660 = vmatmul.bf16.gmra.mxu0 %v982
  %v1661 = vpop.f32.mrf.mxu0
  %v1662 = vadd.f32 %v1093, %v1661
  %v1663 = vpop.f32.mrf.mxu0
  %v1664 = vadd.f32 %v1093, %v1663
  %1665 = vmatmul.bf16.gmra.mxu0 %v984
  %v1666 = vpop.f32.mrf.mxu0
  %v1667 = vadd.f32 %v1093, %v1666
  %v1668 = vpop.f32.mrf.mxu0
  %v1669 = vadd.f32 %v1093, %v1668
  %1670 = vmatmul.bf16.gmra.mxu0 %v986
  %v1671 = vpop.f32.mrf.mxu0
  %v1672 = vadd.f32 %v1093, %v1671
  %v1673 = vpop.f32.mrf.mxu0
  %v1674 = vadd.f32 %v1093, %v1673
  %1675 = vmatmul.bf16.gmra.mxu0 %v988
  %v1676 = vpop.f32.mrf.mxu0
  %v1677 = vadd.f32 %v1093, %v1676
  %v1678 = vpop.f32.mrf.mxu0
  %v1679 = vadd.f32 %v1093, %v1678
  %1680 = vmatmul.bf16.gmra.mxu0 %v990
  %v1681 = vpop.f32.mrf.mxu0
  %v1682 = vadd.f32 %v1093, %v1681
  %v1683 = vpop.f32.mrf.mxu0
  %v1684 = vadd.f32 %v1093, %v1683
  %1685 = vmatmul.bf16.gmra.mxu0 %v992
  %v1686 = vpop.f32.mrf.mxu0
  %v1687 = vadd.f32 %v1093, %v1686
  %v1688 = vpop.f32.mrf.mxu0
  %v1689 = vadd.f32 %v1093, %v1688
  %1690 = vmatmul.bf16.gmra.mxu0 %v994
  %v1691 = vpop.f32.mrf.mxu0
  %v1692 = vadd.f32 %v1093, %v1691
  %v1693 = vpop.f32.mrf.mxu0
  %v1694 = vadd.f32 %v1093, %v1693
  %1695 = vmatmul.bf16.gmra.mxu0 %v996
  %v1696 = vpop.f32.mrf.mxu0
  %v1697 = vadd.f32 %v1093, %v1696
  %v1698 = vpop.f32.mrf.mxu0
  %v1699 = vadd.f32 %v1093, %v1698
  %1700 = vmatmul.bf16.gmra.mxu0 %v998
  %v1701 = vpop.f32.mrf.mxu0
  %v1702 = vadd.f32 %v1093, %v1701
  %v1703 = vpop.f32.mrf.mxu0
  %v1704 = vadd.f32 %v1093, %v1703
  %1705 = vmatmul.bf16.gmra.mxu0 %v1000
  %v1706 = vpop.f32.mrf.mxu0
  %v1707 = vadd.f32 %v1093, %v1706
  %v1708 = vpop.f32.mrf.mxu0
  %v1709 = vadd.f32 %v1093, %v1708
  %1710 = vmatmul.bf16.gmra.mxu0 %v1002
  %v1711 = vpop.f32.mrf.mxu0
  %v1712 = vadd.f32 %v1093, %v1711
  %v1713 = vpop.f32.mrf.mxu0
  %v1714 = vadd.f32 %v1093, %v1713
  %1715 = vmatmul.bf16.gmra.mxu0 %v1004
  %v1716 = vpop.f32.mrf.mxu0
  %v1717 = vadd.f32 %v1093, %v1716
  %v1718 = vpop.f32.mrf.mxu0
  %v1719 = vadd.f32 %v1093, %v1718
  %1720 = vmatmul.bf16.gmra.mxu0 %v1006
  %v1721 = vpop.f32.mrf.mxu0
  %v1722 = vadd.f32 %v1093, %v1721
  %v1723 = vpop.f32.mrf.mxu0
  %v1724 = vadd.f32 %v1093, %v1723
  %1725 = vmatmul.bf16.gmra.mxu0 %v1008
  %v1726 = vpop.f32.mrf.mxu0
  %v1727 = vadd.f32 %v1093, %v1726
  %v1728 = vpop.f32.mrf.mxu0
  %v1729 = vadd.f32 %v1093, %v1728
  %1730 = vmatmul.bf16.gmra.mxu0 %v1010
  %v1731 = vpop.f32.mrf.mxu0
  %v1732 = vadd.f32 %v1093, %v1731
  %v1733 = vpop.f32.mrf.mxu0
  %v1734 = vadd.f32 %v1093, %v1733
  %1735 = vmatmul.bf16.gmra.mxu0 %v1012
  %v1736 = vpop.f32.mrf.mxu0
  %v1737 = vadd.f32 %v1093, %v1736
  %v1738 = vpop.f32.mrf.mxu0
  %v1739 = vadd.f32 %v1093, %v1738
  %1740 = vmatmul.bf16.gmra.mxu0 %v1014
  %v1741 = vpop.f32.mrf.mxu0
  %v1742 = vadd.f32 %v1093, %v1741
  %v1743 = vpop.f32.mrf.mxu0
  %v1744 = vadd.f32 %v1093, %v1743
  %1745 = vmatmul.bf16.gmra.mxu0 %v1016
  %v1746 = vpop.f32.mrf.mxu0
  %v1747 = vadd.f32 %v1093, %v1746
  %v1748 = vpop.f32.mrf.mxu0
  %v1749 = vadd.f32 %v1093, %v1748
  %1750 = vmatmul.bf16.gmra.mxu0 %v1018
  %v1751 = vpop.f32.mrf.mxu0
  %v1752 = vadd.f32 %v1093, %v1751
  %v1753 = vpop.f32.mrf.mxu0
  %v1754 = vadd.f32 %v1093, %v1753
  %1755 = vmatmul.bf16.gmra.mxu0 %v1020
  %v1756 = vpop.f32.mrf.mxu0
  %v1757 = vadd.f32 %v1093, %v1756
  %v1758 = vpop.f32.mrf.mxu0
  %v1759 = vadd.f32 %v1093, %v1758
  %1760 = vmatmul.bf16.gmra.mxu0 %v1022
  %v1761 = vpop.f32.mrf.mxu0
  %v1762 = vadd.f32 %v1093, %v1761
  %v1763 = vpop.f32.mrf.mxu0
  %v1764 = vadd.f32 %v1093, %v1763
  %1765 = vmatmul.bf16.gmra.mxu0 %v1024
  %v1766 = vpop.f32.mrf.mxu0
  %v1767 = vadd.f32 %v1093, %v1766
  %v1768 = vpop.f32.mrf.mxu0
  %v1769 = vadd.f32 %v1093, %v1768
  %1770 = vmatmul.bf16.gmra.mxu0 %v1026
  %v1771 = vpop.f32.mrf.mxu0
  %v1772 = vadd.f32 %v1093, %v1771
  %v1773 = vpop.f32.mrf.mxu0
  %v1774 = vadd.f32 %v1093, %v1773
  %1775 = vmatmul.bf16.gmra.mxu0 %v1028
  %v1776 = vpop.f32.mrf.mxu0
  %v1777 = vadd.f32 %v1093, %v1776
  %v1778 = vpop.f32.mrf.mxu0
  %v1779 = vadd.f32 %v1093, %v1778
  %1780 = vmatmul.bf16.gmra.mxu0 %v1030
  %v1781 = vpop.f32.mrf.mxu0
  %v1782 = vadd.f32 %v1093, %v1781
  %v1783 = vpop.f32.mrf.mxu0
  %v1784 = vadd.f32 %v1093, %v1783
  %1785 = vmatmul.bf16.gmra.mxu0 %v1032
  %v1786 = vpop.f32.mrf.mxu0
  %v1787 = vadd.f32 %v1093, %v1786
  %v1788 = vpop.f32.mrf.mxu0
  %v1789 = vadd.f32 %v1093, %v1788
  %1790 = vmatmul.bf16.gmra.mxu0 %v1034
  %v1791 = vpop.f32.mrf.mxu0
  %v1792 = vadd.f32 %v1093, %v1791
  %v1793 = vpop.f32.mrf.mxu0
  %v1794 = vadd.f32 %v1093, %v1793
  %1795 = vmatmul.bf16.gmra.mxu0 %v1036
  %v1796 = vpop.f32.mrf.mxu0
  %v1797 = vadd.f32 %v1093, %v1796
  %v1798 = vpop.f32.mrf.mxu0
  %v1799 = vadd.f32 %v1093, %v1798
  %1800 = vmatmul.bf16.gmra.mxu0 %v1038
  %v1801 = vpop.f32.mrf.mxu0
  %v1802 = vadd.f32 %v1093, %v1801
  %v1803 = vpop.f32.mrf.mxu0
  %v1804 = vadd.f32 %v1093, %v1803
  %1805 = vmatmul.bf16.gmra.mxu0 %v1040
  %v1806 = vpop.f32.mrf.mxu0
  %v1807 = vadd.f32 %v1093, %v1806
  %v1808 = vpop.f32.mrf.mxu0
  %v1809 = vadd.f32 %v1093, %v1808
  %1810 = vmatmul.bf16.gmra.mxu0 %v1042
  %v1811 = vpop.f32.mrf.mxu0
  %v1812 = vadd.f32 %v1093, %v1811
  %v1813 = vpop.f32.mrf.mxu0
  %v1814 = vadd.f32 %v1093, %v1813
  %1815 = vmatmul.bf16.gmra.mxu0 %v1044
  %v1816 = vpop.f32.mrf.mxu0
  %v1817 = vadd.f32 %v1093, %v1816
  %v1818 = vpop.f32.mrf.mxu0
  %v1819 = vadd.f32 %v1093, %v1818
  %1820 = vmatmul.bf16.gmra.mxu0 %v1046
  %v1821 = vpop.f32.mrf.mxu0
  %v1822 = vadd.f32 %v1093, %v1821
  %v1823 = vpop.f32.mrf.mxu0
  %v1824 = vadd.f32 %v1093, %v1823
  %1825 = vmatmul.bf16.gmra.mxu0 %v1048
  %v1826 = vpop.f32.mrf.mxu0
  %v1827 = vadd.f32 %v1093, %v1826
  %v1828 = vpop.f32.mrf.mxu0
  %v1829 = vadd.f32 %v1093, %v1828
  %1830 = vmatmul.bf16.gmra.mxu0 %v1050
  %v1831 = vpop.f32.mrf.mxu0
  %v1832 = vadd.f32 %v1093, %v1831
  %v1833 = vpop.f32.mrf.mxu0
  %v1834 = vadd.f32 %v1093, %v1833
  %1835 = vmatmul.bf16.gmra.mxu0 %v1052
  %v1836 = vpop.f32.mrf.mxu0
  %v1837 = vadd.f32 %v1093, %v1836
  %v1838 = vpop.f32.mrf.mxu0
  %v1839 = vadd.f32 %v1093, %v1838
  %1840 = vmatmul.bf16.gmra.mxu0 %v1054
  %v1841 = vpop.f32.mrf.mxu0
  %v1842 = vadd.f32 %v1093, %v1841
  %v1843 = vpop.f32.mrf.mxu0
  %v1844 = vadd.f32 %v1093, %v1843
  %1845 = vmatmul.bf16.gmra.mxu0 %v1056
  %v1846 = vpop.f32.mrf.mxu0
  %v1847 = vadd.f32 %v1093, %v1846
  %v1848 = vpop.f32.mrf.mxu0
  %1849 = vdwg.mxu0
  %1850 = vmatpush.bf16.msra.mxu0 %v1223
  %1851 = vmatpush.bf16.msra.mxu0 %v1221
  %1852 = vmatpush.bf16.msra.mxu0 %v1219
  %1853 = vmatpush.bf16.msra.mxu0 %v1217
  %1854 = vmatpush.bf16.msra.mxu0 %v1215
  %1855 = vmatpush.bf16.msra.mxu0 %v1213
  %1856 = vmatpush.bf16.msra.mxu0 %v1211
  %1857 = vmatpush.bf16.msra.mxu0 %v1209
  %1858 = vmatmul.bf16.gmra.mxu0 %v983
  %v1859 = vpop.f32.mrf.mxu0
  %v1860 = vadd.f32 %v1662, %v1859
  %v1861 = vpop.f32.mrf.mxu0
  %v1862 = vadd.f32 %v1664, %v1861
  %1863 = vmatmul.bf16.gmra.mxu0 %v985
  %v1864 = vpop.f32.mrf.mxu0
  %v1865 = vadd.f32 %v1667, %v1864
  %v1866 = vpop.f32.mrf.mxu0
  %v1867 = vadd.f32 %v1669, %v1866
  %1868 = vmatmul.bf16.gmra.mxu0 %v987
  %v1869 = vpop.f32.mrf.mxu0
  %v1870 = vadd.f32 %v1672, %v1869
  %v1871 = vpop.f32.mrf.mxu0
  %v1872 = vadd.f32 %v1674, %v1871
  %1873 = vmatmul.bf16.gmra.mxu0 %v989
  %v1874 = vpop.f32.mrf.mxu0
  %v1875 = vadd.f32 %v1677, %v1874
  %v1876 = vpop.f32.mrf.mxu0
  %v1877 = vadd.f32 %v1679, %v1876
  %1878 = vmatmul.bf16.gmra.mxu0 %v991
  %v1879 = vpop.f32.mrf.mxu0
  %v1880 = vadd.f32 %v1682, %v1879
  %v1881 = vpop.f32.mrf.mxu0
  %v1882 = vadd.f32 %v1684, %v1881
  %1883 = vmatmul.bf16.gmra.mxu0 %v993
  %v1884 = vpop.f32.mrf.mxu0
  %v1885 = vadd.f32 %v1687, %v1884
  %v1886 = vpop.f32.mrf.mxu0
  %v1887 = vadd.f32 %v1689, %v1886
  %1888 = vmatmul.bf16.gmra.mxu0 %v995
  %v1889 = vpop.f32.mrf.mxu0
  %v1890 = vadd.f32 %v1692, %v1889
  %v1891 = vpop.f32.mrf.mxu0
  %v1892 = vadd.f32 %v1694, %v1891
  %1893 = vmatmul.bf16.gmra.mxu0 %v997
  %v1894 = vpop.f32.mrf.mxu0
  %v1895 = vadd.f32 %v1697, %v1894
  %v1896 = vpop.f32.mrf.mxu0
  %v1897 = vadd.f32 %v1699, %v1896
  %1898 = vmatmul.bf16.gmra.mxu0 %v999
  %v1899 = vpop.f32.mrf.mxu0
  %v1900 = vadd.f32 %v1702, %v1899
  %v1901 = vpop.f32.mrf.mxu0
  %v1902 = vadd.f32 %v1704, %v1901
  %1903 = vmatmul.bf16.gmra.mxu0 %v1001
  %v1904 = vpop.f32.mrf.mxu0
  %v1905 = vadd.f32 %v1707, %v1904
  %v1906 = vpop.f32.mrf.mxu0
  %v1907 = vadd.f32 %v1709, %v1906
  %1908 = vmatmul.bf16.gmra.mxu0 %v1003
  %v1909 = vpop.f32.mrf.mxu0
  %v1910 = vadd.f32 %v1712, %v1909
  %v1911 = vpop.f32.mrf.mxu0
  %v1912 = vadd.f32 %v1714, %v1911
  %1913 = vmatmul.bf16.gmra.mxu0 %v1005
  %v1914 = vpop.f32.mrf.mxu0
  %v1915 = vadd.f32 %v1717, %v1914
  %v1916 = vpop.f32.mrf.mxu0
  %v1917 = vadd.f32 %v1719, %v1916
  %1918 = vmatmul.bf16.gmra.mxu0 %v1007
  %v1919 = vpop.f32.mrf.mxu0
  %v1920 = vadd.f32 %v1722, %v1919
  %v1921 = vpop.f32.mrf.mxu0
  %v1922 = vadd.f32 %v1724, %v1921
  %1923 = vmatmul.bf16.gmra.mxu0 %v1009
  %v1924 = vpop.f32.mrf.mxu0
  %v1925 = vadd.f32 %v1727, %v1924
  %v1926 = vpop.f32.mrf.mxu0
  %v1927 = vadd.f32 %v1729, %v1926
  %1928 = vmatmul.bf16.gmra.mxu0 %v1011
  %v1929 = vpop.f32.mrf.mxu0
  %v1930 = vadd.f32 %v1732, %v1929
  %v1931 = vpop.f32.mrf.mxu0
  %v1932 = vadd.f32 %v1734, %v1931
  %1933 = vmatmul.bf16.gmra.mxu0 %v1013
  %v1934 = vpop.f32.mrf.mxu0
  %v1935 = vadd.f32 %v1737, %v1934
  %v1936 = vpop.f32.mrf.mxu0
  %v1937 = vadd.f32 %v1739, %v1936
  %1938 = vmatmul.bf16.gmra.mxu0 %v1015
  %v1939 = vpop.f32.mrf.mxu0
  %v1940 = vadd.f32 %v1742, %v1939
  %v1941 = vpop.f32.mrf.mxu0
  %v1942 = vadd.f32 %v1744, %v1941
  %1943 = vmatmul.bf16.gmra.mxu0 %v1017
  %v1944 = vpop.f32.mrf.mxu0
  %v1945 = vadd.f32 %v1747, %v1944
  %v1946 = vpop.f32.mrf.mxu0
  %v1947 = vadd.f32 %v1749, %v1946
  %1948 = vmatmul.bf16.gmra.mxu0 %v1019
  %v1949 = vpop.f32.mrf.mxu0
  %v1950 = vadd.f32 %v1752, %v1949
  %v1951 = vpop.f32.mrf.mxu0
  %v1952 = vadd.f32 %v1754, %v1951
  %1953 = vmatmul.bf16.gmra.mxu0 %v1021
  %v1954 = vpop.f32.mrf.mxu0
  %v1955 = vadd.f32 %v1757, %v1954
  %v1956 = vpop.f32.mrf.mxu0
  %v1957 = vadd.f32 %v1759, %v1956
  %1958 = vmatmul.bf16.gmra.mxu0 %v1023
  %v1959 = vpop.f32.mrf.mxu0
  %v1960 = vadd.f32 %v1762, %v1959
  %v1961 = vpop.f32.mrf.mxu0
  %v1962 = vadd.f32 %v1764, %v1961
  %1963 = vmatmul.bf16.gmra.mxu0 %v1025
  %v1964 = vpop.f32.mrf.mxu0
  %v1965 = vadd.f32 %v1767, %v1964
  %v1966 = vpop.f32.mrf.mxu0
  %v1967 = vadd.f32 %v1769, %v1966
  %1968 = vmatmul.bf16.gmra.mxu0 %v1027
  %v1969 = vpop.f32.mrf.mxu0
  %v1970 = vadd.f32 %v1772, %v1969
  %v1971 = vpop.f32.mrf.mxu0
  %v1972 = vadd.f32 %v1774, %v1971
  %1973 = vmatmul.bf16.gmra.mxu0 %v1029
  %v1974 = vpop.f32.mrf.mxu0
  %v1975 = vadd.f32 %v1777, %v1974
  %v1976 = vpop.f32.mrf.mxu0
  %v1977 = vadd.f32 %v1779, %v1976
  %1978 = vmatmul.bf16.gmra.mxu0 %v1031
  %v1979 = vpop.f32.mrf.mxu0
  %v1980 = vadd.f32 %v1782, %v1979
  %v1981 = vpop.f32.mrf.mxu0
  %v1982 = vadd.f32 %v1784, %v1981
  %1983 = vmatmul.bf16.gmra.mxu0 %v1033
  %v1984 = vpop.f32.mrf.mxu0
  %v1985 = vadd.f32 %v1787, %v1984
  %v1986 = vpop.f32.mrf.mxu0
  %v1987 = vadd.f32 %v1789, %v1986
  %1988 = vmatmul.bf16.gmra.mxu0 %v1035
  %v1989 = vpop.f32.mrf.mxu0
  %v1990 = vadd.f32 %v1792, %v1989
  %v1991 = vpop.f32.mrf.mxu0
  %v1992 = vadd.f32 %v1794, %v1991
  %1993 = vmatmul.bf16.gmra.mxu0 %v1037
  %v1994 = vpop.f32.mrf.mxu0
  %v1995 = vadd.f32 %v1797, %v1994
  %v1996 = vpop.f32.mrf.mxu0
  %v1997 = vadd.f32 %v1799, %v1996
  %1998 = vmatmul.bf16.gmra.mxu0 %v1039
  %v1999 = vpop.f32.mrf.mxu0
  %v2000 = vadd.f32 %v1802, %v1999
  %v2001 = vpop.f32.mrf.mxu0
  %v2002 = vadd.f32 %v1804, %v2001
  %2003 = vmatmul.bf16.gmra.mxu0 %v1041
  %v2004 = vpop.f32.mrf.mxu0
  %v2005 = vadd.f32 %v1807, %v2004
  %v2006 = vpop.f32.mrf.mxu0
  %v2007 = vadd.f32 %v1809, %v2006
  %2008 = vmatmul.bf16.gmra.mxu0 %v1043
  %v2009 = vpop.f32.mrf.mxu0
  %v2010 = vadd.f32 %v1812, %v2009
  %v2011 = vpop.f32.mrf.mxu0
  %v2012 = vadd.f32 %v1814, %v2011
  %2013 = vmatmul.bf16.gmra.mxu0 %v1045
  %v2014 = vpop.f32.mrf.mxu0
  %v2015 = vadd.f32 %v1817, %v2014
  %v2016 = vpop.f32.mrf.mxu0
  %v2017 = vadd.f32 %v1819, %v2016
  %2018 = vmatmul.bf16.gmra.mxu0 %v1047
  %v2019 = vpop.f32.mrf.mxu0
  %v2020 = vadd.f32 %v1822, %v2019
  %v2021 = vpop.f32.mrf.mxu0
  %v2022 = vadd.f32 %v1824, %v2021
  %2023 = vmatmul.bf16.gmra.mxu0 %v1049
  %v2024 = vpop.f32.mrf.mxu0
  %v2025 = vadd.f32 %v1827, %v2024
  %v2026 = vpop.f32.mrf.mxu0
  %v2027 = vadd.f32 %v1829, %v2026
  %2028 = vmatmul.bf16.gmra.mxu0 %v1051
  %v2029 = vpop.f32.mrf.mxu0
  %v2030 = vadd.f32 %v1832, %v2029
  %v2031 = vpop.f32.mrf.mxu0
  %v2032 = vadd.f32 %v1834, %v2031
  %2033 = vmatmul.bf16.gmra.mxu0 %v1053
  %v2034 = vpop.f32.mrf.mxu0
  %v2035 = vadd.f32 %v1837, %v2034
  %v2036 = vpop.f32.mrf.mxu0
  %v2037 = vadd.f32 %v1839, %v2036
  %2038 = vmatmul.bf16.gmra.mxu0 %v1055
  %v2039 = vpop.f32.mrf.mxu0
  %v2040 = vadd.f32 %v1842, %v2039
  %v2041 = vpop.f32.mrf.mxu0
  %v2042 = vadd.f32 %v1844, %v2041
  %2043 = vmatmul.bf16.gmra.mxu0 %v1057
  %v2044 = vpop.f32.mrf.mxu0
  %v2045 = vadd.f32 %v1847, %v2044
  %v2046 = vpop.f32.mrf.mxu0
  %2047 = vdwg.mxu0
  %v2048 = vpack.c.bf16 %v1466, %v1464
  %v2049 = vpack.c.bf16 %v1862, %v1860
  %v2050 = vpack.c.bf16 %v1471, %v1469
  %v2051 = vpack.c.bf16 %v1867, %v1865
  %v2052 = vpack.c.bf16 %v1476, %v1474
  %v2053 = vpack.c.bf16 %v1872, %v1870
  %v2054 = vpack.c.bf16 %v1481, %v1479
  %v2055 = vpack.c.bf16 %v1877, %v1875
  %v2056 = vpack.c.bf16 %v1486, %v1484
  %v2057 = vpack.c.bf16 %v1882, %v1880
  %v2058 = vpack.c.bf16 %v1491, %v1489
  %v2059 = vpack.c.bf16 %v1887, %v1885
  %v2060 = vpack.c.bf16 %v1496, %v1494
  %v2061 = vpack.c.bf16 %v1892, %v1890
  %v2062 = vpack.c.bf16 %v1501, %v1499
  %v2063 = vpack.c.bf16 %v1897, %v1895
  %v2064 = vpack.c.bf16 %v1506, %v1504
  %v2065 = vpack.c.bf16 %v1902, %v1900
  %v2066 = vpack.c.bf16 %v1511, %v1509
  %v2067 = vpack.c.bf16 %v1907, %v1905
  %v2068 = vpack.c.bf16 %v1516, %v1514
  %v2069 = vpack.c.bf16 %v1912, %v1910
  %v2070 = vpack.c.bf16 %v1521, %v1519
  %v2071 = vpack.c.bf16 %v1917, %v1915
  %v2072 = vpack.c.bf16 %v1526, %v1524
  %v2073 = vpack.c.bf16 %v1922, %v1920
  %v2074 = vpack.c.bf16 %v1531, %v1529
  %v2075 = vpack.c.bf16 %v1927, %v1925
  %v2076 = vpack.c.bf16 %v1536, %v1534
  %v2077 = vpack.c.bf16 %v1932, %v1930
  %v2078 = vpack.c.bf16 %v1541, %v1539
  %v2079 = vpack.c.bf16 %v1937, %v1935
  %v2080 = vpack.c.bf16 %v1546, %v1544
  %v2081 = vpack.c.bf16 %v1942, %v1940
  %v2082 = vpack.c.bf16 %v1551, %v1549
  %v2083 = vpack.c.bf16 %v1947, %v1945
  %v2084 = vpack.c.bf16 %v1556, %v1554
  %v2085 = vpack.c.bf16 %v1952, %v1950
  %v2086 = vpack.c.bf16 %v1561, %v1559
  %v2087 = vpack.c.bf16 %v1957, %v1955
  %v2088 = vpack.c.bf16 %v1566, %v1564
  %v2089 = vpack.c.bf16 %v1962, %v1960
  %v2090 = vpack.c.bf16 %v1571, %v1569
  %v2091 = vpack.c.bf16 %v1967, %v1965
  %v2092 = vpack.c.bf16 %v1576, %v1574
  %v2093 = vpack.c.bf16 %v1972, %v1970
  %v2094 = vpack.c.bf16 %v1581, %v1579
  %v2095 = vpack.c.bf16 %v1977, %v1975
  %v2096 = vpack.c.bf16 %v1586, %v1584
  %v2097 = vpack.c.bf16 %v1982, %v1980
  %v2098 = vpack.c.bf16 %v1591, %v1589
  %v2099 = vpack.c.bf16 %v1987, %v1985
  %v2100 = vpack.c.bf16 %v1596, %v1594
  %v2101 = vpack.c.bf16 %v1992, %v1990
  %v2102 = vpack.c.bf16 %v1601, %v1599
  %v2103 = vpack.c.bf16 %v1997, %v1995
  %v2104 = vpack.c.bf16 %v1606, %v1604
  %v2105 = vpack.c.bf16 %v2002, %v2000
  %v2106 = vpack.c.bf16 %v1611, %v1609
  %v2107 = vpack.c.bf16 %v2007, %v2005
  %v2108 = vpack.c.bf16 %v1616, %v1614
  %v2109 = vpack.c.bf16 %v2012, %v2010
  %v2110 = vpack.c.bf16 %v1621, %v1619
  %v2111 = vpack.c.bf16 %v2017, %v2015
  %v2112 = vpack.c.bf16 %v1626, %v1624
  %v2113 = vpack.c.bf16 %v2022, %v2020
  %v2114 = vpack.c.bf16 %v1631, %v1629
  %v2115 = vpack.c.bf16 %v2027, %v2025
  %v2116 = vpack.c.bf16 %v1636, %v1634
  %v2117 = vpack.c.bf16 %v2032, %v2030
  %v2118 = vpack.c.bf16 %v1641, %v1639
  %v2119 = vpack.c.bf16 %v2037, %v2035
  %v2120 = vpack.c.bf16 %v1646, %v1644
  %v2121 = vpack.c.bf16 %v2042, %v2040
  %v2122 = vpack.c.bf16 %v1649, %v1649
  %v2123 = vpack.c.bf16 %v2045, %v2045
  %v2124 = vunpack.c.l.bf16 %v2048
  %v2125 = vunpack.c.l.bf16 %v2049
  %v2126 = vunpack.c.h.bf16 %v2048
  %v2127 = vunpack.c.h.bf16 %v2049
  %v2128 = vunpack.c.l.bf16 %v2050
  %v2129 = vunpack.c.l.bf16 %v2051
  %v2130 = vunpack.c.h.bf16 %v2050
  %v2131 = vunpack.c.h.bf16 %v2051
  %v2132 = vunpack.c.l.bf16 %v2052
  %v2133 = vunpack.c.l.bf16 %v2053
  %v2134 = vunpack.c.h.bf16 %v2052
  %v2135 = vunpack.c.h.bf16 %v2053
  %v2136 = vunpack.c.l.bf16 %v2054
  %v2137 = vunpack.c.l.bf16 %v2055
  %v2138 = vunpack.c.h.bf16 %v2054
  %v2139 = vunpack.c.h.bf16 %v2055
  %v2140 = vunpack.c.l.bf16 %v2056
  %v2141 = vunpack.c.l.bf16 %v2057
  %v2142 = vunpack.c.h.bf16 %v2056
  %v2143 = vunpack.c.h.bf16 %v2057
  %v2144 = vunpack.c.l.bf16 %v2058
  %v2145 = vunpack.c.l.bf16 %v2059
  %v2146 = vunpack.c.h.bf16 %v2058
  %v2147 = vunpack.c.h.bf16 %v2059
  %v2148 = vunpack.c.l.bf16 %v2060
  %v2149 = vunpack.c.l.bf16 %v2061
  %v2150 = vunpack.c.h.bf16 %v2060
  %v2151 = vunpack.c.h.bf16 %v2061
  %v2152 = vunpack.c.l.bf16 %v2062
  %v2153 = vunpack.c.l.bf16 %v2063
  %v2154 = vunpack.c.h.bf16 %v2062
  %v2155 = vunpack.c.h.bf16 %v2063
  %v2156 = vunpack.c.l.bf16 %v2064
  %v2157 = vunpack.c.l.bf16 %v2065
  %v2158 = vunpack.c.h.bf16 %v2064
  %v2159 = vunpack.c.h.bf16 %v2065
  %v2160 = vunpack.c.l.bf16 %v2066
  %v2161 = vunpack.c.l.bf16 %v2067
  %v2162 = vunpack.c.h.bf16 %v2066
  %v2163 = vunpack.c.h.bf16 %v2067
  %v2164 = vunpack.c.l.bf16 %v2068
  %v2165 = vunpack.c.l.bf16 %v2069
  %v2166 = vunpack.c.h.bf16 %v2068
  %v2167 = vunpack.c.h.bf16 %v2069
  %v2168 = vunpack.c.l.bf16 %v2070
  %v2169 = vunpack.c.l.bf16 %v2071
  %v2170 = vunpack.c.h.bf16 %v2070
  %v2171 = vunpack.c.h.bf16 %v2071
  %v2172 = vunpack.c.l.bf16 %v2072
  %v2173 = vunpack.c.l.bf16 %v2073
  %v2174 = vunpack.c.h.bf16 %v2072
  %v2175 = vunpack.c.h.bf16 %v2073
  %v2176 = vunpack.c.l.bf16 %v2074
  %v2177 = vunpack.c.l.bf16 %v2075
  %v2178 = vunpack.c.h.bf16 %v2074
  %v2179 = vunpack.c.h.bf16 %v2075
  %v2180 = vunpack.c.l.bf16 %v2076
  %v2181 = vunpack.c.l.bf16 %v2077
  %v2182 = vunpack.c.h.bf16 %v2076
  %v2183 = vunpack.c.h.bf16 %v2077
  %v2184 = vunpack.c.l.bf16 %v2078
  %v2185 = vunpack.c.l.bf16 %v2079
  %v2186 = vunpack.c.h.bf16 %v2078
  %v2187 = vunpack.c.h.bf16 %v2079
  %v2188 = vunpack.c.l.bf16 %v2080
  %v2189 = vunpack.c.l.bf16 %v2081
  %v2190 = vunpack.c.h.bf16 %v2080
  %v2191 = vunpack.c.h.bf16 %v2081
  %v2192 = vunpack.c.l.bf16 %v2082
  %v2193 = vunpack.c.l.bf16 %v2083
  %v2194 = vunpack.c.h.bf16 %v2082
  %v2195 = vunpack.c.h.bf16 %v2083
  %v2196 = vunpack.c.l.bf16 %v2084
  %v2197 = vunpack.c.l.bf16 %v2085
  %v2198 = vunpack.c.h.bf16 %v2084
  %v2199 = vunpack.c.h.bf16 %v2085
  %v2200 = vunpack.c.l.bf16 %v2086
  %v2201 = vunpack.c.l.bf16 %v2087
  %v2202 = vunpack.c.h.bf16 %v2086
  %v2203 = vunpack.c.h.bf16 %v2087
  %v2204 = vunpack.c.l.bf16 %v2088
  %v2205 = vunpack.c.l.bf16 %v2089
  %v2206 = vunpack.c.h.bf16 %v2088
  %v2207 = vunpack.c.h.bf16 %v2089
  %v2208 = vunpack.c.l.bf16 %v2090
  %v2209 = vunpack.c.l.bf16 %v2091
  %v2210 = vunpack.c.h.bf16 %v2090
  %v2211 = vunpack.c.h.bf16 %v2091
  %v2212 = vunpack.c.l.bf16 %v2092
  %v2213 = vunpack.c.l.bf16 %v2093
  %v2214 = vunpack.c.h.bf16 %v2092
  %v2215 = vunpack.c.h.bf16 %v2093
  %v2216 = vunpack.c.l.bf16 %v2094
  %v2217 = vunpack.c.l.bf16 %v2095
  %v2218 = vunpack.c.h.bf16 %v2094
  %v2219 = vunpack.c.h.bf16 %v2095
  %v2220 = vunpack.c.l.bf16 %v2096
  %v2221 = vunpack.c.l.bf16 %v2097
  %v2222 = vunpack.c.h.bf16 %v2096
  %v2223 = vunpack.c.h.bf16 %v2097
  %v2224 = vunpack.c.l.bf16 %v2098
  %v2225 = vunpack.c.l.bf16 %v2099
  %v2226 = vunpack.c.h.bf16 %v2098
  %v2227 = vunpack.c.h.bf16 %v2099
  %v2228 = vunpack.c.l.bf16 %v2100
  %v2229 = vunpack.c.l.bf16 %v2101
  %v2230 = vunpack.c.h.bf16 %v2100
  %v2231 = vunpack.c.h.bf16 %v2101
  %v2232 = vunpack.c.l.bf16 %v2102
  %v2233 = vunpack.c.l.bf16 %v2103
  %v2234 = vunpack.c.h.bf16 %v2102
  %v2235 = vunpack.c.h.bf16 %v2103
  %v2236 = vunpack.c.l.bf16 %v2104
  %v2237 = vunpack.c.l.bf16 %v2105
  %v2238 = vunpack.c.h.bf16 %v2104
  %v2239 = vunpack.c.h.bf16 %v2105
  %v2240 = vunpack.c.l.bf16 %v2106
  %v2241 = vunpack.c.l.bf16 %v2107
  %v2242 = vunpack.c.h.bf16 %v2106
  %v2243 = vunpack.c.h.bf16 %v2107
  %v2244 = vunpack.c.l.bf16 %v2108
  %v2245 = vunpack.c.l.bf16 %v2109
  %v2246 = vunpack.c.h.bf16 %v2108
  %v2247 = vunpack.c.h.bf16 %v2109
  %v2248 = vunpack.c.l.bf16 %v2110
  %v2249 = vunpack.c.l.bf16 %v2111
  %v2250 = vunpack.c.h.bf16 %v2110
  %v2251 = vunpack.c.h.bf16 %v2111
  %v2252 = vunpack.c.l.bf16 %v2112
  %v2253 = vunpack.c.l.bf16 %v2113
  %v2254 = vunpack.c.h.bf16 %v2112
  %v2255 = vunpack.c.h.bf16 %v2113
  %v2256 = vunpack.c.l.bf16 %v2114
  %v2257 = vunpack.c.l.bf16 %v2115
  %v2258 = vunpack.c.h.bf16 %v2114
  %v2259 = vunpack.c.h.bf16 %v2115
  %v2260 = vunpack.c.l.bf16 %v2116
  %v2261 = vunpack.c.l.bf16 %v2117
  %v2262 = vunpack.c.h.bf16 %v2116
  %v2263 = vunpack.c.h.bf16 %v2117
  %v2264 = vunpack.c.l.bf16 %v2118
  %v2265 = vunpack.c.l.bf16 %v2119
  %v2266 = vunpack.c.h.bf16 %v2118
  %v2267 = vunpack.c.h.bf16 %v2119
  %v2268 = vunpack.c.l.bf16 %v2120
  %v2269 = vunpack.c.l.bf16 %v2121
  %v2270 = vunpack.c.h.bf16 %v2120
  %v2271 = vunpack.c.h.bf16 %v2121
  %v2272 = vunpack.c.l.bf16 %v2122
  %v2273 = vunpack.c.l.bf16 %v2123
  %v2274 = vtanh.pop %v2124
  %v2275 = vtanh.pop %v2125
  %v2276 = vtanh.pop %v2126
  %v2277 = vtanh.pop %v2127
  %v2278 = vtanh.pop %v2128
  %v2279 = vtanh.pop %v2129
  %v2280 = vtanh.pop %v2130
  %v2281 = vtanh.pop %v2131
  %v2282 = vtanh.pop %v2132
  %v2283 = vtanh.pop %v2133
  %v2284 = vtanh.pop %v2134
  %v2285 = vtanh.pop %v2135
  %v2286 = vtanh.pop %v2136
  %v2287 = vtanh.pop %v2137
  %v2288 = vtanh.pop %v2138
  %v2289 = vtanh.pop %v2139
  %v2290 = vtanh.pop %v2140
  %v2291 = vtanh.pop %v2141
  %v2292 = vtanh.pop %v2142
  %v2293 = vtanh.pop %v2143
  %v2294 = vtanh.pop %v2144
  %v2295 = vtanh.pop %v2145
  %v2296 = vtanh.pop %v2146
  %v2297 = vtanh.pop %v2147
  %v2298 = vtanh.pop %v2148
  %v2299 = vtanh.pop %v2149
  %v2300 = vtanh.pop %v2150
  %v2301 = vtanh.pop %v2151
  %v2302 = vtanh.pop %v2152
  %v2303 = vtanh.pop %v2153
  %v2304 = vtanh.pop %v2154
  %v2305 = vtanh.pop %v2155
  %v2306 = vtanh.pop %v2156
  %v2307 = vtanh.pop %v2157
  %v2308 = vtanh.pop %v2158
  %v2309 = vtanh.pop %v2159
  %v2310 = vtanh.pop %v2160
  %v2311 = vtanh.pop %v2161
  %v2312 = vtanh.pop %v2162
  %v2313 = vtanh.pop %v2163
  %v2314 = vtanh.pop %v2164
  %v2315 = vtanh.pop %v2165
  %v2316 = vtanh.pop %v2166
  %v2317 = vtanh.pop %v2167
  %v2318 = vtanh.pop %v2168
  %v2319 = vtanh.pop %v2169
  %v2320 = vtanh.pop %v2170
  %v2321 = vtanh.pop %v2171
  %v2322 = vtanh.pop %v2172
  %v2323 = vtanh.pop %v2173
  %v2324 = vtanh.pop %v2174
  %v2325 = vtanh.pop %v2175
  %v2326 = vtanh.pop %v2176
  %v2327 = vtanh.pop %v2177
  %v2328 = vtanh.pop %v2178
  %v2329 = vtanh.pop %v2179
  %v2330 = vtanh.pop %v2180
  %v2331 = vtanh.pop %v2181
  %v2332 = vtanh.pop %v2182
  %v2333 = vtanh.pop %v2183
  %v2334 = vtanh.pop %v2184
  %v2335 = vtanh.pop %v2185
  %v2336 = vtanh.pop %v2186
  %v2337 = vtanh.pop %v2187
  %v2338 = vtanh.pop %v2188
  %v2339 = vtanh.pop %v2189
  %v2340 = vtanh.pop %v2190
  %v2341 = vtanh.pop %v2191
  %v2342 = vtanh.pop %v2192
  %v2343 = vtanh.pop %v2193
  %v2344 = vtanh.pop %v2194
  %v2345 = vtanh.pop %v2195
  %v2346 = vtanh.pop %v2196
  %v2347 = vtanh.pop %v2197
  %v2348 = vtanh.pop %v2198
  %v2349 = vtanh.pop %v2199
  %v2350 = vtanh.pop %v2200
  %v2351 = vtanh.pop %v2201
  %v2352 = vtanh.pop %v2202
  %v2353 = vtanh.pop %v2203
  %v2354 = vtanh.pop %v2204
  %v2355 = vtanh.pop %v2205
  %v2356 = vtanh.pop %v2206
  %v2357 = vtanh.pop %v2207
  %v2358 = vtanh.pop %v2208
  %v2359 = vtanh.pop %v2209
  %v2360 = vtanh.pop %v2210
  %v2361 = vtanh.pop %v2211
  %v2362 = vtanh.pop %v2212
  %v2363 = vtanh.pop %v2213
  %v2364 = vtanh.pop %v2214
  %v2365 = vtanh.pop %v2215
  %v2366 = vtanh.pop %v2216
  %v2367 = vtanh.pop %v2217
  %v2368 = vtanh.pop %v2218
  %v2369 = vtanh.pop %v2219
  %v2370 = vtanh.pop %v2220
  %v2371 = vtanh.pop %v2221
  %v2372 = vtanh.pop %v2222
  %v2373 = vtanh.pop %v2223
  %v2374 = vtanh.pop %v2224
  %v2375 = vtanh.pop %v2225
  %v2376 = vtanh.pop %v2226
  %v2377 = vtanh.pop %v2227
  %v2378 = vtanh.pop %v2228
  %v2379 = vtanh.pop %v2229
  %v2380 = vtanh.pop %v2230
  %v2381 = vtanh.pop %v2231
  %v2382 = vtanh.pop %v2232
  %v2383 = vtanh.pop %v2233
  %v2384 = vtanh.pop %v2234
  %v2385 = vtanh.pop %v2235
  %v2386 = vtanh.pop %v2236
  %v2387 = vtanh.pop %v2237
  %v2388 = vtanh.pop %v2238
  %v2389 = vtanh.pop %v2239
  %v2390 = vtanh.pop %v2240
  %v2391 = vtanh.pop %v2241
  %v2392 = vtanh.pop %v2242
  %v2393 = vtanh.pop %v2243
  %v2394 = vtanh.pop %v2244
  %v2395 = vtanh.pop %v2245
  %v2396 = vtanh.pop %v2246
  %v2397 = vtanh.pop %v2247
  %v2398 = vtanh.pop %v2248
  %v2399 = vtanh.pop %v2249
  %v2400 = vtanh.pop %v2250
  %v2401 = vtanh.pop %v2251
  %v2402 = vtanh.pop %v2252
  %v2403 = vtanh.pop %v2253
  %v2404 = vtanh.pop %v2254
  %v2405 = vtanh.pop %v2255
  %v2406 = vtanh.pop %v2256
  %v2407 = vtanh.pop %v2257
  %v2408 = vtanh.pop %v2258
  %v2409 = vtanh.pop %v2259
  %v2410 = vtanh.pop %v2260
  %v2411 = vtanh.pop %v2261
  %v2412 = vtanh.pop %v2262
  %v2413 = vtanh.pop %v2263
  %v2414 = vtanh.pop %v2264
  %v2415 = vtanh.pop %v2265
  %v2416 = vtanh.pop %v2266
  %v2417 = vtanh.pop %v2267
  %v2418 = vtanh.pop %v2268
  %v2419 = vtanh.pop %v2269
  %v2420 = vtanh.pop %v2270
  %v2421 = vtanh.pop %v2271
  %v2422 = vtanh.pop %v2272
  %v2423 = vtanh.pop %v2273
  %v2424 = vpack.c.bf16 %v2276, %v2274
  %v2425 = vpack.c.bf16 %v2277, %v2275
  %v2426 = vpack.c.bf16 %v2280, %v2278
  %v2427 = vpack.c.bf16 %v2281, %v2279
  %v2428 = vpack.c.bf16 %v2284, %v2282
  %v2429 = vpack.c.bf16 %v2285, %v2283
  %v2430 = vpack.c.bf16 %v2288, %v2286
  %v2431 = vpack.c.bf16 %v2289, %v2287
  %v2432 = vpack.c.bf16 %v2292, %v2290
  %v2433 = vpack.c.bf16 %v2293, %v2291
  %v2434 = vpack.c.bf16 %v2296, %v2294
  %v2435 = vpack.c.bf16 %v2297, %v2295
  %v2436 = vpack.c.bf16 %v2300, %v2298
  %v2437 = vpack.c.bf16 %v2301, %v2299
  %v2438 = vpack.c.bf16 %v2304, %v2302
  %v2439 = vpack.c.bf16 %v2305, %v2303
  %v2440 = vpack.c.bf16 %v2308, %v2306
  %v2441 = vpack.c.bf16 %v2309, %v2307
  %v2442 = vpack.c.bf16 %v2312, %v2310
  %v2443 = vpack.c.bf16 %v2313, %v2311
  %v2444 = vpack.c.bf16 %v2316, %v2314
  %v2445 = vpack.c.bf16 %v2317, %v2315
  %v2446 = vpack.c.bf16 %v2320, %v2318
  %v2447 = vpack.c.bf16 %v2321, %v2319
  %v2448 = vpack.c.bf16 %v2324, %v2322
  %v2449 = vpack.c.bf16 %v2325, %v2323
  %v2450 = vpack.c.bf16 %v2328, %v2326
  %v2451 = vpack.c.bf16 %v2329, %v2327
  %v2452 = vpack.c.bf16 %v2332, %v2330
  %v2453 = vpack.c.bf16 %v2333, %v2331
  %v2454 = vpack.c.bf16 %v2336, %v2334
  %v2455 = vpack.c.bf16 %v2337, %v2335
  %v2456 = vpack.c.bf16 %v2340, %v2338
  %v2457 = vpack.c.bf16 %v2341, %v2339
  %v2458 = vpack.c.bf16 %v2344, %v2342
  %v2459 = vpack.c.bf16 %v2345, %v2343
  %v2460 = vpack.c.bf16 %v2348, %v2346
  %v2461 = vpack.c.bf16 %v2349, %v2347
  %v2462 = vpack.c.bf16 %v2352, %v2350
  %v2463 = vpack.c.bf16 %v2353, %v2351
  %v2464 = vpack.c.bf16 %v2356, %v2354
  %v2465 = vpack.c.bf16 %v2357, %v2355
  %v2466 = vpack.c.bf16 %v2360, %v2358
  %v2467 = vpack.c.bf16 %v2361, %v2359
  %v2468 = vpack.c.bf16 %v2364, %v2362
  %v2469 = vpack.c.bf16 %v2365, %v2363
  %v2470 = vpack.c.bf16 %v2368, %v2366
  %v2471 = vpack.c.bf16 %v2369, %v2367
  %v2472 = vpack.c.bf16 %v2372, %v2370
  %v2473 = vpack.c.bf16 %v2373, %v2371
  %v2474 = vpack.c.bf16 %v2376, %v2374
  %v2475 = vpack.c.bf16 %v2377, %v2375
  %v2476 = vpack.c.bf16 %v2380, %v2378
  %v2477 = vpack.c.bf16 %v2381, %v2379
  %v2478 = vpack.c.bf16 %v2384, %v2382
  %v2479 = vpack.c.bf16 %v2385, %v2383
  %v2480 = vpack.c.bf16 %v2388, %v2386
  %v2481 = vpack.c.bf16 %v2389, %v2387
  %v2482 = vpack.c.bf16 %v2392, %v2390
  %v2483 = vpack.c.bf16 %v2393, %v2391
  %v2484 = vpack.c.bf16 %v2396, %v2394
  %v2485 = vpack.c.bf16 %v2397, %v2395
  %v2486 = vpack.c.bf16 %v2400, %v2398
  %v2487 = vpack.c.bf16 %v2401, %v2399
  %v2488 = vpack.c.bf16 %v2404, %v2402
  %v2489 = vpack.c.bf16 %v2405, %v2403
  %v2490 = vpack.c.bf16 %v2408, %v2406
  %v2491 = vpack.c.bf16 %v2409, %v2407
  %v2492 = vpack.c.bf16 %v2412, %v2410
  %v2493 = vpack.c.bf16 %v2413, %v2411
  %v2494 = vpack.c.bf16 %v2416, %v2414
  %v2495 = vpack.c.bf16 %v2417, %v2415
  %v2496 = vpack.c.bf16 %v2420, %v2418
  %v2497 = vpack.c.bf16 %v2421, %v2419
  %v2498 = vpack.c.bf16 %v2422, %v2422
  %v2499 = vpack.c.bf16 %v2423, %v2423
  %v2500 = vld [vmem:[%s5] sm:$0xff]
  %v2501 = vld [vmem:[%s5 + $0x8] sm:$0xff]
  %v2502 = vld [vmem:[%s5 + $0x10] sm:$0xff]
  %v2503 = vld [vmem:[%s5 + $0x18] sm:$0xff]
  %v2504 = vld [vmem:[%s5 + $0x20] sm:$0xff]
  %v2505 = vld [vmem:[%s5 + $0x28] sm:$0xff]
  %v2506 = vld [vmem:[%s5 + $0x30] sm:$0xff]
  %v2507 = vld [vmem:[%s5 + $0x38] sm:$0xff]
  %v2508 = vld [vmem:[%s5 + $0x40] sm:$0xff]
  %v2509 = vld [vmem:[%s5 + $0x48] sm:$0xff]
  %v2510 = vld [vmem:[%s5 + $0x50] sm:$0xff]
  %v2511 = vld [vmem:[%s5 + $0x58] sm:$0xff]
  %v2512 = vld [vmem:[%s5 + $0x60] sm:$0xff]
  %v2513 = vld [vmem:[%s5 + $0x68] sm:$0xff]
  %v2514 = vld [vmem:[%s5 + $0x70] sm:$0xff]
  %v2515 = vld [vmem:[%s5 + $0x78] sm:$0xff]
  %v2516 = vld [vmem:[%s5 + $0x80] sm:$0xff]
  %v2517 = vld [vmem:[%s5 + $0x88] sm:$0xff]
  %v2518 = vld [vmem:[%s5 + $0x90] sm:$0xff]
  %v2519 = vld [vmem:[%s5 + $0x98] sm:$0xff]
  %v2520 = vld [vmem:[%s5 + $0xa0] sm:$0xff]
  %v2521 = vld [vmem:[%s5 + $0xa8] sm:$0xff]
  %v2522 = vld [vmem:[%s5 + $0xb0] sm:$0xff]
  %v2523 = vld [vmem:[%s5 + $0xb8] sm:$0xff]
  %v2524 = vld [vmem:[%s5 + $0xc0] sm:$0xff]
  %v2525 = vld [vmem:[%s5 + $0xc8] sm:$0xff]
  %v2526 = vld [vmem:[%s5 + $0xd0] sm:$0xff]
  %v2527 = vld [vmem:[%s5 + $0xd8] sm:$0xff]
  %v2528 = vld [vmem:[%s5 + $0xe0] sm:$0xff]
  %v2529 = vld [vmem:[%s5 + $0xe8] sm:$0xff]
  %v2530 = vld [vmem:[%s5 + $0xf0] sm:$0xff]
  %v2531 = vld [vmem:[%s5 + $0xf8] sm:$0xff]
  %v2532 = vld [vmem:[%s6] sm:$0x3]
  %v2534 = vperm.slane %v2532, 0
  %v2535 = vperm.slane %v2532, 1
  %v2570 = vunpack.c.l.b16 %v2500
  %v2571 = vunpack.c.h.b16 %v2500
  %v2572 = vunpack.c.l.b16 %v2501
  %v2573 = vunpack.c.h.b16 %v2501
  %v2574 = vunpack.c.l.b16 %v2502
  %v2575 = vunpack.c.h.b16 %v2502
  %v2576 = vunpack.c.l.b16 %v2503
  %v2577 = vunpack.c.h.b16 %v2503
  %v2578 = vunpack.c.l.b16 %v2504
  %v2579 = vunpack.c.h.b16 %v2504
  %v2580 = vunpack.c.l.b16 %v2505
  %v2581 = vunpack.c.h.b16 %v2505
  %v2582 = vunpack.c.l.b16 %v2506
  %v2583 = vunpack.c.h.b16 %v2506
  %v2584 = vunpack.c.l.b16 %v2507
  %v2585 = vunpack.c.h.b16 %v2507
  %v2586 = vunpack.c.l.b16 %v2508
  %v2587 = vunpack.c.h.b16 %v2508
  %v2588 = vunpack.c.l.b16 %v2509
  %v2589 = vunpack.c.h.b16 %v2509
  %v2590 = vunpack.c.l.b16 %v2510
  %v2591 = vunpack.c.h.b16 %v2510
  %v2592 = vunpack.c.l.b16 %v2511
  %v2593 = vunpack.c.h.b16 %v2511
  %v2594 = vunpack.c.l.b16 %v2512
  %v2595 = vunpack.c.h.b16 %v2512
  %v2596 = vunpack.c.l.b16 %v2513
  %v2597 = vunpack.c.h.b16 %v2513
  %v2598 = vunpack.c.l.b16 %v2514
  %v2599 = vunpack.c.h.b16 %v2514
  %v2600 = vunpack.c.l.b16 %v2515
  %v2601 = vunpack.c.h.b16 %v2515
  %v2602 = vunpack.c.l.b16 %v2516
  %v2603 = vunpack.c.h.b16 %v2516
  %v2604 = vunpack.c.l.b16 %v2517
  %v2605 = vunpack.c.h.b16 %v2517
  %v2606 = vunpack.c.l.b16 %v2518
  %v2607 = vunpack.c.h.b16 %v2518
  %v2608 = vunpack.c.l.b16 %v2519
  %v2609 = vunpack.c.h.b16 %v2519
  %v2610 = vunpack.c.l.b16 %v2520
  %v2611 = vunpack.c.h.b16 %v2520
  %v2612 = vunpack.c.l.b16 %v2521
  %v2613 = vunpack.c.h.b16 %v2521
  %v2614 = vunpack.c.l.b16 %v2522
  %v2615 = vunpack.c.h.b16 %v2522
  %v2616 = vunpack.c.l.b16 %v2523
  %v2617 = vunpack.c.h.b16 %v2523
  %v2618 = vunpack.c.l.b16 %v2524
  %v2619 = vunpack.c.h.b16 %v2524
  %v2620 = vunpack.c.l.b16 %v2525
  %v2621 = vunpack.c.h.b16 %v2525
  %v2622 = vunpack.c.l.b16 %v2526
  %v2623 = vunpack.c.h.b16 %v2526
  %v2624 = vunpack.c.l.b16 %v2527
  %v2625 = vunpack.c.h.b16 %v2527
  %v2626 = vunpack.c.l.b16 %v2528
  %v2627 = vunpack.c.h.b16 %v2528
  %v2628 = vunpack.c.l.b16 %v2529
  %v2629 = vunpack.c.h.b16 %v2529
  %v2630 = vunpack.c.l.b16 %v2530
  %v2631 = vunpack.c.h.b16 %v2530
  %v2632 = vunpack.c.l.b16 %v2531
  %v2633 = vunpack.c.h.b16 %v2531
  %v2634 = vpack.c.b16 %v2572, %v2570
  %v2635 = vpack.c.b16 %v2573, %v2571
  %v2636 = vpack.c.b16 %v2576, %v2574
  %v2637 = vpack.c.b16 %v2577, %v2575
  %v2638 = vpack.c.b16 %v2580, %v2578
  %v2639 = vpack.c.b16 %v2581, %v2579
  %v2640 = vpack.c.b16 %v2584, %v2582
  %v2641 = vpack.c.b16 %v2585, %v2583
  %v2642 = vpack.c.b16 %v2588, %v2586
  %v2643 = vpack.c.b16 %v2589, %v2587
  %v2644 = vpack.c.b16 %v2592, %v2590
  %v2645 = vpack.c.b16 %v2593, %v2591
  %v2646 = vpack.c.b16 %v2596, %v2594
  %v2647 = vpack.c.b16 %v2597, %v2595
  %v2648 = vpack.c.b16 %v2600, %v2598
  %v2649 = vpack.c.b16 %v2601, %v2599
  %v2650 = vpack.c.b16 %v2604, %v2602
  %v2651 = vpack.c.b16 %v2605, %v2603
  %v2652 = vpack.c.b16 %v2608, %v2606
  %v2653 = vpack.c.b16 %v2609, %v2607
  %v2654 = vpack.c.b16 %v2612, %v2610
  %v2655 = vpack.c.b16 %v2613, %v2611
  %v2656 = vpack.c.b16 %v2616, %v2614
  %v2657 = vpack.c.b16 %v2617, %v2615
  %v2658 = vpack.c.b16 %v2620, %v2618
  %v2659 = vpack.c.b16 %v2621, %v2619
  %v2660 = vpack.c.b16 %v2624, %v2622
  %v2661 = vpack.c.b16 %v2625, %v2623
  %v2662 = vpack.c.b16 %v2628, %v2626
  %v2663 = vpack.c.b16 %v2629, %v2627
  %v2664 = vpack.c.b16 %v2632, %v2630
  %v2665 = vpack.c.b16 %v2633, %v2631
  %2698 = vmatpush.bf16.msra.mxu0 %v2648
  %2699 = vmatpush.bf16.msra.mxu0 %v2646
  %2700 = vmatpush.bf16.msra.mxu0 %v2644
  %2701 = vmatpush.bf16.msra.mxu0 %v2642
  %2702 = vmatpush.bf16.msra.mxu0 %v2640
  %2703 = vmatpush.bf16.msra.mxu0 %v2638
  %2704 = vmatpush.bf16.msra.mxu0 %v2636
  %2705 = vmatpush.bf16.msra.mxu0 %v2634
  %2706 = vmatmul.bf16.gmra.mxu0 %v2424
  %v2707 = vpop.f32.mrf.mxu0
  %v2708 = vadd.f32 %v2534, %v2707
  %v2709 = vpop.f32.mrf.mxu0
  %v2710 = vadd.f32 %v2534, %v2709
  %2711 = vmatmul.bf16.gmra.mxu0 %v2426
  %v2712 = vpop.f32.mrf.mxu0
  %v2713 = vadd.f32 %v2534, %v2712
  %v2714 = vpop.f32.mrf.mxu0
  %v2715 = vadd.f32 %v2534, %v2714
  %2716 = vmatmul.bf16.gmra.mxu0 %v2428
  %v2717 = vpop.f32.mrf.mxu0
  %v2718 = vadd.f32 %v2534, %v2717
  %v2719 = vpop.f32.mrf.mxu0
  %v2720 = vadd.f32 %v2534, %v2719
  %2721 = vmatmul.bf16.gmra.mxu0 %v2430
  %v2722 = vpop.f32.mrf.mxu0
  %v2723 = vadd.f32 %v2534, %v2722
  %v2724 = vpop.f32.mrf.mxu0
  %v2725 = vadd.f32 %v2534, %v2724
  %2726 = vmatmul.bf16.gmra.mxu0 %v2432
  %v2727 = vpop.f32.mrf.mxu0
  %v2728 = vadd.f32 %v2534, %v2727
  %v2729 = vpop.f32.mrf.mxu0
  %v2730 = vadd.f32 %v2534, %v2729
  %2731 = vmatmul.bf16.gmra.mxu0 %v2434
  %v2732 = vpop.f32.mrf.mxu0
  %v2733 = vadd.f32 %v2534, %v2732
  %v2734 = vpop.f32.mrf.mxu0
  %v2735 = vadd.f32 %v2534, %v2734
  %2736 = vmatmul.bf16.gmra.mxu0 %v2436
  %v2737 = vpop.f32.mrf.mxu0
  %v2738 = vadd.f32 %v2534, %v2737
  %v2739 = vpop.f32.mrf.mxu0
  %v2740 = vadd.f32 %v2534, %v2739
  %2741 = vmatmul.bf16.gmra.mxu0 %v2438
  %v2742 = vpop.f32.mrf.mxu0
  %v2743 = vadd.f32 %v2534, %v2742
  %v2744 = vpop.f32.mrf.mxu0
  %v2745 = vadd.f32 %v2534, %v2744
  %2746 = vmatmul.bf16.gmra.mxu0 %v2440
  %v2747 = vpop.f32.mrf.mxu0
  %v2748 = vadd.f32 %v2534, %v2747
  %v2749 = vpop.f32.mrf.mxu0
  %v2750 = vadd.f32 %v2534, %v2749
  %2751 = vmatmul.bf16.gmra.mxu0 %v2442
  %v2752 = vpop.f32.mrf.mxu0
  %v2753 = vadd.f32 %v2534, %v2752
  %v2754 = vpop.f32.mrf.mxu0
  %v2755 = vadd.f32 %v2534, %v2754
  %2756 = vmatmul.bf16.gmra.mxu0 %v2444
  %v2757 = vpop.f32.mrf.mxu0
  %v2758 = vadd.f32 %v2534, %v2757
  %v2759 = vpop.f32.mrf.mxu0
  %v2760 = vadd.f32 %v2534, %v2759
  %2761 = vmatmul.bf16.gmra.mxu0 %v2446
  %v2762 = vpop.f32.mrf.mxu0
  %v2763 = vadd.f32 %v2534, %v2762
  %v2764 = vpop.f32.mrf.mxu0
  %v2765 = vadd.f32 %v2534, %v2764
  %2766 = vmatmul.bf16.gmra.mxu0 %v2448
  %v2767 = vpop.f32.mrf.mxu0
  %v2768 = vadd.f32 %v2534, %v2767
  %v2769 = vpop.f32.mrf.mxu0
  %v2770 = vadd.f32 %v2534, %v2769
  %2771 = vmatmul.bf16.gmra.mxu0 %v2450
  %v2772 = vpop.f32.mrf.mxu0
  %v2773 = vadd.f32 %v2534, %v2772
  %v2774 = vpop.f32.mrf.mxu0
  %v2775 = vadd.f32 %v2534, %v2774
  %2776 = vmatmul.bf16.gmra.mxu0 %v2452
  %v2777 = vpop.f32.mrf.mxu0
  %v2778 = vadd.f32 %v2534, %v2777
  %v2779 = vpop.f32.mrf.mxu0
  %v2780 = vadd.f32 %v2534, %v2779
  %2781 = vmatmul.bf16.gmra.mxu0 %v2454
  %v2782 = vpop.f32.mrf.mxu0
  %v2783 = vadd.f32 %v2534, %v2782
  %v2784 = vpop.f32.mrf.mxu0
  %v2785 = vadd.f32 %v2534, %v2784
  %2786 = vmatmul.bf16.gmra.mxu0 %v2456
  %v2787 = vpop.f32.mrf.mxu0
  %v2788 = vadd.f32 %v2534, %v2787
  %v2789 = vpop.f32.mrf.mxu0
  %v2790 = vadd.f32 %v2534, %v2789
  %2791 = vmatmul.bf16.gmra.mxu0 %v2458
  %v2792 = vpop.f32.mrf.mxu0
  %v2793 = vadd.f32 %v2534, %v2792
  %v2794 = vpop.f32.mrf.mxu0
  %v2795 = vadd.f32 %v2534, %v2794
  %2796 = vmatmul.bf16.gmra.mxu0 %v2460
  %v2797 = vpop.f32.mrf.mxu0
  %v2798 = vadd.f32 %v2534, %v2797
  %v2799 = vpop.f32.mrf.mxu0
  %v2800 = vadd.f32 %v2534, %v2799
  %2801 = vmatmul.bf16.gmra.mxu0 %v2462
  %v2802 = vpop.f32.mrf.mxu0
  %v2803 = vadd.f32 %v2534, %v2802
  %v2804 = vpop.f32.mrf.mxu0
  %v2805 = vadd.f32 %v2534, %v2804
  %2806 = vmatmul.bf16.gmra.mxu0 %v2464
  %v2807 = vpop.f32.mrf.mxu0
  %v2808 = vadd.f32 %v2534, %v2807
  %v2809 = vpop.f32.mrf.mxu0
  %v2810 = vadd.f32 %v2534, %v2809
  %2811 = vmatmul.bf16.gmra.mxu0 %v2466
  %v2812 = vpop.f32.mrf.mxu0
  %v2813 = vadd.f32 %v2534, %v2812
  %v2814 = vpop.f32.mrf.mxu0
  %v2815 = vadd.f32 %v2534, %v2814
  %2816 = vmatmul.bf16.gmra.mxu0 %v2468
  %v2817 = vpop.f32.mrf.mxu0
  %v2818 = vadd.f32 %v2534, %v2817
  %v2819 = vpop.f32.mrf.mxu0
  %v2820 = vadd.f32 %v2534, %v2819
  %2821 = vmatmul.bf16.gmra.mxu0 %v2470
  %v2822 = vpop.f32.mrf.mxu0
  %v2823 = vadd.f32 %v2534, %v2822
  %v2824 = vpop.f32.mrf.mxu0
  %v2825 = vadd.f32 %v2534, %v2824
  %2826 = vmatmul.bf16.gmra.mxu0 %v2472
  %v2827 = vpop.f32.mrf.mxu0
  %v2828 = vadd.f32 %v2534, %v2827
  %v2829 = vpop.f32.mrf.mxu0
  %v2830 = vadd.f32 %v2534, %v2829
  %2831 = vmatmul.bf16.gmra.mxu0 %v2474
  %v2832 = vpop.f32.mrf.mxu0
  %v2833 = vadd.f32 %v2534, %v2832
  %v2834 = vpop.f32.mrf.mxu0
  %v2835 = vadd.f32 %v2534, %v2834
  %2836 = vmatmul.bf16.gmra.mxu0 %v2476
  %v2837 = vpop.f32.mrf.mxu0
  %v2838 = vadd.f32 %v2534, %v2837
  %v2839 = vpop.f32.mrf.mxu0
  %v2840 = vadd.f32 %v2534, %v2839
  %2841 = vmatmul.bf16.gmra.mxu0 %v2478
  %v2842 = vpop.f32.mrf.mxu0
  %v2843 = vadd.f32 %v2534, %v2842
  %v2844 = vpop.f32.mrf.mxu0
  %v2845 = vadd.f32 %v2534, %v2844
  %2846 = vmatmul.bf16.gmra.mxu0 %v2480
  %v2847 = vpop.f32.mrf.mxu0
  %v2848 = vadd.f32 %v2534, %v2847
  %v2849 = vpop.f32.mrf.mxu0
  %v2850 = vadd.f32 %v2534, %v2849
  %2851 = vmatmul.bf16.gmra.mxu0 %v2482
  %v2852 = vpop.f32.mrf.mxu0
  %v2853 = vadd.f32 %v2534, %v2852
  %v2854 = vpop.f32.mrf.mxu0
  %v2855 = vadd.f32 %v2534, %v2854
  %2856 = vmatmul.bf16.gmra.mxu0 %v2484
  %v2857 = vpop.f32.mrf.mxu0
  %v2858 = vadd.f32 %v2534, %v2857
  %v2859 = vpop.f32.mrf.mxu0
  %v2860 = vadd.f32 %v2534, %v2859
  %2861 = vmatmul.bf16.gmra.mxu0 %v2486
  %v2862 = vpop.f32.mrf.mxu0
  %v2863 = vadd.f32 %v2534, %v2862
  %v2864 = vpop.f32.mrf.mxu0
  %v2865 = vadd.f32 %v2534, %v2864
  %2866 = vmatmul.bf16.gmra.mxu0 %v2488
  %v2867 = vpop.f32.mrf.mxu0
  %v2868 = vadd.f32 %v2534, %v2867
  %v2869 = vpop.f32.mrf.mxu0
  %v2870 = vadd.f32 %v2534, %v2869
  %2871 = vmatmul.bf16.gmra.mxu0 %v2490
  %v2872 = vpop.f32.mrf.mxu0
  %v2873 = vadd.f32 %v2534, %v2872
  %v2874 = vpop.f32.mrf.mxu0
  %v2875 = vadd.f32 %v2534, %v2874
  %2876 = vmatmul.bf16.gmra.mxu0 %v2492
  %v2877 = vpop.f32.mrf.mxu0
  %v2878 = vadd.f32 %v2534, %v2877
  %v2879 = vpop.f32.mrf.mxu0
  %v2880 = vadd.f32 %v2534, %v2879
  %2881 = vmatmul.bf16.gmra.mxu0 %v2494
  %v2882 = vpop.f32.mrf.mxu0
  %v2883 = vadd.f32 %v2534, %v2882
  %v2884 = vpop.f32.mrf.mxu0
  %v2885 = vadd.f32 %v2534, %v2884
  %2886 = vmatmul.bf16.gmra.mxu0 %v2496
  %v2887 = vpop.f32.mrf.mxu0
  %v2888 = vadd.f32 %v2534, %v2887
  %v2889 = vpop.f32.mrf.mxu0
  %v2890 = vadd.f32 %v2534, %v2889
  %2891 = vmatmul.bf16.gmra.mxu0 %v2498
  %v2892 = vpop.f32.mrf.mxu0
  %v2893 = vadd.f32 %v2534, %v2892
  %v2894 = vpop.f32.mrf.mxu0
  %2895 = vdwg.mxu0
  %2896 = vmatpush.bf16.msra.mxu0 %v2664
  %2897 = vmatpush.bf16.msra.mxu0 %v2662
  %2898 = vmatpush.bf16.msra.mxu0 %v2660
  %2899 = vmatpush.bf16.msra.mxu0 %v2658
  %2900 = vmatpush.bf16.msra.mxu0 %v2656
  %2901 = vmatpush.bf16.msra.mxu0 %v2654
  %2902 = vmatpush.bf16.msra.mxu0 %v2652
  %2903 = vmatpush.bf16.msra.mxu0 %v2650
  %2904 = vmatmul.bf16.gmra.mxu0 %v2425
  %v2905 = vpop.f32.mrf.mxu0
  %v2906 = vadd.f32 %v2708, %v2905
  %v2907 = vpop.f32.mrf.mxu0
  %v2908 = vadd.f32 %v2710, %v2907
  %2909 = vmatmul.bf16.gmra.mxu0 %v2427
  %v2910 = vpop.f32.mrf.mxu0
  %v2911 = vadd.f32 %v2713, %v2910
  %v2912 = vpop.f32.mrf.mxu0
  %v2913 = vadd.f32 %v2715, %v2912
  %2914 = vmatmul.bf16.gmra.mxu0 %v2429
  %v2915 = vpop.f32.mrf.mxu0
  %v2916 = vadd.f32 %v2718, %v2915
  %v2917 = vpop.f32.mrf.mxu0
  %v2918 = vadd.f32 %v2720, %v2917
  %2919 = vmatmul.bf16.gmra.mxu0 %v2431
  %v2920 = vpop.f32.mrf.mxu0
  %v2921 = vadd.f32 %v2723, %v2920
  %v2922 = vpop.f32.mrf.mxu0
  %v2923 = vadd.f32 %v2725, %v2922
  %2924 = vmatmul.bf16.gmra.mxu0 %v2433
  %v2925 = vpop.f32.mrf.mxu0
  %v2926 = vadd.f32 %v2728, %v2925
  %v2927 = vpop.f32.mrf.mxu0
  %v2928 = vadd.f32 %v2730, %v2927
  %2929 = vmatmul.bf16.gmra.mxu0 %v2435
  %v2930 = vpop.f32.mrf.mxu0
  %v2931 = vadd.f32 %v2733, %v2930
  %v2932 = vpop.f32.mrf.mxu0
  %v2933 = vadd.f32 %v2735, %v2932
  %2934 = vmatmul.bf16.gmra.mxu0 %v2437
  %v2935 = vpop.f32.mrf.mxu0
  %v2936 = vadd.f32 %v2738, %v2935
  %v2937 = vpop.f32.mrf.mxu0
  %v2938 = vadd.f32 %v2740, %v2937
  %2939 = vmatmul.bf16.gmra.mxu0 %v2439
  %v2940 = vpop.f32.mrf.mxu0
  %v2941 = vadd.f32 %v2743, %v2940
  %v2942 = vpop.f32.mrf.mxu0
  %v2943 = vadd.f32 %v2745, %v2942
  %2944 = vmatmul.bf16.gmra.mxu0 %v2441
  %v2945 = vpop.f32.mrf.mxu0
  %v2946 = vadd.f32 %v2748, %v2945
  %v2947 = vpop.f32.mrf.mxu0
  %v2948 = vadd.f32 %v2750, %v2947
  %2949 = vmatmul.bf16.gmra.mxu0 %v2443
  %v2950 = vpop.f32.mrf.mxu0
  %v2951 = vadd.f32 %v2753, %v2950
  %v2952 = vpop.f32.mrf.mxu0
  %v2953 = vadd.f32 %v2755, %v2952
  %2954 = vmatmul.bf16.gmra.mxu0 %v2445
  %v2955 = vpop.f32.mrf.mxu0
  %v2956 = vadd.f32 %v2758, %v2955
  %v2957 = vpop.f32.mrf.mxu0
  %v2958 = vadd.f32 %v2760, %v2957
  %2959 = vmatmul.bf16.gmra.mxu0 %v2447
  %v2960 = vpop.f32.mrf.mxu0
  %v2961 = vadd.f32 %v2763, %v2960
  %v2962 = vpop.f32.mrf.mxu0
  %v2963 = vadd.f32 %v2765, %v2962
  %2964 = vmatmul.bf16.gmra.mxu0 %v2449
  %v2965 = vpop.f32.mrf.mxu0
  %v2966 = vadd.f32 %v2768, %v2965
  %v2967 = vpop.f32.mrf.mxu0
  %v2968 = vadd.f32 %v2770, %v2967
  %2969 = vmatmul.bf16.gmra.mxu0 %v2451
  %v2970 = vpop.f32.mrf.mxu0
  %v2971 = vadd.f32 %v2773, %v2970
  %v2972 = vpop.f32.mrf.mxu0
  %v2973 = vadd.f32 %v2775, %v2972
  %2974 = vmatmul.bf16.gmra.mxu0 %v2453
  %v2975 = vpop.f32.mrf.mxu0
  %v2976 = vadd.f32 %v2778, %v2975
  %v2977 = vpop.f32.mrf.mxu0
  %v2978 = vadd.f32 %v2780, %v2977
  %2979 = vmatmul.bf16.gmra.mxu0 %v2455
  %v2980 = vpop.f32.mrf.mxu0
  %v2981 = vadd.f32 %v2783, %v2980
  %v2982 = vpop.f32.mrf.mxu0
  %v2983 = vadd.f32 %v2785, %v2982
  %2984 = vmatmul.bf16.gmra.mxu0 %v2457
  %v2985 = vpop.f32.mrf.mxu0
  %v2986 = vadd.f32 %v2788, %v2985
  %v2987 = vpop.f32.mrf.mxu0
  %v2988 = vadd.f32 %v2790, %v2987
  %2989 = vmatmul.bf16.gmra.mxu0 %v2459
  %v2990 = vpop.f32.mrf.mxu0
  %v2991 = vadd.f32 %v2793, %v2990
  %v2992 = vpop.f32.mrf.mxu0
  %v2993 = vadd.f32 %v2795, %v2992
  %2994 = vmatmul.bf16.gmra.mxu0 %v2461
  %v2995 = vpop.f32.mrf.mxu0
  %v2996 = vadd.f32 %v2798, %v2995
  %v2997 = vpop.f32.mrf.mxu0
  %v2998 = vadd.f32 %v2800, %v2997
  %2999 = vmatmul.bf16.gmra.mxu0 %v2463
  %v3000 = vpop.f32.mrf.mxu0
  %v3001 = vadd.f32 %v2803, %v3000
  %v3002 = vpop.f32.mrf.mxu0
  %v3003 = vadd.f32 %v2805, %v3002
  %3004 = vmatmul.bf16.gmra.mxu0 %v2465
  %v3005 = vpop.f32.mrf.mxu0
  %v3006 = vadd.f32 %v2808, %v3005
  %v3007 = vpop.f32.mrf.mxu0
  %v3008 = vadd.f32 %v2810, %v3007
  %3009 = vmatmul.bf16.gmra.mxu0 %v2467
  %v3010 = vpop.f32.mrf.mxu0
  %v3011 = vadd.f32 %v2813, %v3010
  %v3012 = vpop.f32.mrf.mxu0
  %v3013 = vadd.f32 %v2815, %v3012
  %3014 = vmatmul.bf16.gmra.mxu0 %v2469
  %v3015 = vpop.f32.mrf.mxu0
  %v3016 = vadd.f32 %v2818, %v3015
  %v3017 = vpop.f32.mrf.mxu0
  %v3018 = vadd.f32 %v2820, %v3017
  %3019 = vmatmul.bf16.gmra.mxu0 %v2471
  %v3020 = vpop.f32.mrf.mxu0
  %v3021 = vadd.f32 %v2823, %v3020
  %v3022 = vpop.f32.mrf.mxu0
  %v3023 = vadd.f32 %v2825, %v3022
  %3024 = vmatmul.bf16.gmra.mxu0 %v2473
  %v3025 = vpop.f32.mrf.mxu0
  %v3026 = vadd.f32 %v2828, %v3025
  %v3027 = vpop.f32.mrf.mxu0
  %v3028 = vadd.f32 %v2830, %v3027
  %3029 = vmatmul.bf16.gmra.mxu0 %v2475
  %v3030 = vpop.f32.mrf.mxu0
  %v3031 = vadd.f32 %v2833, %v3030
  %v3032 = vpop.f32.mrf.mxu0
  %v3033 = vadd.f32 %v2835, %v3032
  %3034 = vmatmul.bf16.gmra.mxu0 %v2477
  %v3035 = vpop.f32.mrf.mxu0
  %v3036 = vadd.f32 %v2838, %v3035
  %v3037 = vpop.f32.mrf.mxu0
  %v3038 = vadd.f32 %v2840, %v3037
  %3039 = vmatmul.bf16.gmra.mxu0 %v2479
  %v3040 = vpop.f32.mrf.mxu0
  %v3041 = vadd.f32 %v2843, %v3040
  %v3042 = vpop.f32.mrf.mxu0
  %v3043 = vadd.f32 %v2845, %v3042
  %3044 = vmatmul.bf16.gmra.mxu0 %v2481
  %v3045 = vpop.f32.mrf.mxu0
  %v3046 = vadd.f32 %v2848, %v3045
  %v3047 = vpop.f32.mrf.mxu0
  %v3048 = vadd.f32 %v2850, %v3047
  %3049 = vmatmul.bf16.gmra.mxu0 %v2483
  %v3050 = vpop.f32.mrf.mxu0
  %v3051 = vadd.f32 %v2853, %v3050
  %v3052 = vpop.f32.mrf.mxu0
  %v3053 = vadd.f32 %v2855, %v3052
  %3054 = vmatmul.bf16.gmra.mxu0 %v2485
  %v3055 = vpop.f32.mrf.mxu0
  %v3056 = vadd.f32 %v2858, %v3055
  %v3057 = vpop.f32.mrf.mxu0
  %v3058 = vadd.f32 %v2860, %v3057
  %3059 = vmatmul.bf16.gmra.mxu0 %v2487
  %v3060 = vpop.f32.mrf.mxu0
  %v3061 = vadd.f32 %v2863, %v3060
  %v3062 = vpop.f32.mrf.mxu0
  %v3063 = vadd.f32 %v2865, %v3062
  %3064 = vmatmul.bf16.gmra.mxu0 %v2489
  %v3065 = vpop.f32.mrf.mxu0
  %v3066 = vadd.f32 %v2868, %v3065
  %v3067 = vpop.f32.mrf.mxu0
  %v3068 = vadd.f32 %v2870, %v3067
  %3069 = vmatmul.bf16.gmra.mxu0 %v2491
  %v3070 = vpop.f32.mrf.mxu0
  %v3071 = vadd.f32 %v2873, %v3070
  %v3072 = vpop.f32.mrf.mxu0
  %v3073 = vadd.f32 %v2875, %v3072
  %3074 = vmatmul.bf16.gmra.mxu0 %v2493
  %v3075 = vpop.f32.mrf.mxu0
  %v3076 = vadd.f32 %v2878, %v3075
  %v3077 = vpop.f32.mrf.mxu0
  %v3078 = vadd.f32 %v2880, %v3077
  %3079 = vmatmul.bf16.gmra.mxu0 %v2495
  %v3080 = vpop.f32.mrf.mxu0
  %v3081 = vadd.f32 %v2883, %v3080
  %v3082 = vpop.f32.mrf.mxu0
  %v3083 = vadd.f32 %v2885, %v3082
  %3084 = vmatmul.bf16.gmra.mxu0 %v2497
  %v3085 = vpop.f32.mrf.mxu0
  %v3086 = vadd.f32 %v2888, %v3085
  %v3087 = vpop.f32.mrf.mxu0
  %v3088 = vadd.f32 %v2890, %v3087
  %3089 = vmatmul.bf16.gmra.mxu0 %v2499
  %v3090 = vpop.f32.mrf.mxu0
  %v3091 = vadd.f32 %v2893, %v3090
  %v3092 = vpop.f32.mrf.mxu0
  %3093 = vdwg.mxu0
  %3094 = vmatpush.bf16.msra.mxu0 %v2649
  %3095 = vmatpush.bf16.msra.mxu0 %v2647
  %3096 = vmatpush.bf16.msra.mxu0 %v2645
  %3097 = vmatpush.bf16.msra.mxu0 %v2643
  %3098 = vmatpush.bf16.msra.mxu0 %v2641
  %3099 = vmatpush.bf16.msra.mxu0 %v2639
  %3100 = vmatpush.bf16.msra.mxu0 %v2637
  %3101 = vmatpush.bf16.msra.mxu0 %v2635
  %3102 = vmatmul.bf16.gmra.mxu0 %v2424
  %v3103 = vpop.f32.mrf.mxu0
  %v3104 = vadd.f32 %v2535, %v3103
  %v3105 = vpop.f32.mrf.mxu0
  %v3106 = vadd.f32 %v2535, %v3105
  %3107 = vmatmul.bf16.gmra.mxu0 %v2426
  %v3108 = vpop.f32.mrf.mxu0
  %v3109 = vadd.f32 %v2535, %v3108
  %v3110 = vpop.f32.mrf.mxu0
  %v3111 = vadd.f32 %v2535, %v3110
  %3112 = vmatmul.bf16.gmra.mxu0 %v2428
  %v3113 = vpop.f32.mrf.mxu0
  %v3114 = vadd.f32 %v2535, %v3113
  %v3115 = vpop.f32.mrf.mxu0
  %v3116 = vadd.f32 %v2535, %v3115
  %3117 = vmatmul.bf16.gmra.mxu0 %v2430
  %v3118 = vpop.f32.mrf.mxu0
  %v3119 = vadd.f32 %v2535, %v3118
  %v3120 = vpop.f32.mrf.mxu0
  %v3121 = vadd.f32 %v2535, %v3120
  %3122 = vmatmul.bf16.gmra.mxu0 %v2432
  %v3123 = vpop.f32.mrf.mxu0
  %v3124 = vadd.f32 %v2535, %v3123
  %v3125 = vpop.f32.mrf.mxu0
  %v3126 = vadd.f32 %v2535, %v3125
  %3127 = vmatmul.bf16.gmra.mxu0 %v2434
  %v3128 = vpop.f32.mrf.mxu0
  %v3129 = vadd.f32 %v2535, %v3128
  %v3130 = vpop.f32.mrf.mxu0
  %v3131 = vadd.f32 %v2535, %v3130
  %3132 = vmatmul.bf16.gmra.mxu0 %v2436
  %v3133 = vpop.f32.mrf.mxu0
  %v3134 = vadd.f32 %v2535, %v3133
  %v3135 = vpop.f32.mrf.mxu0
  %v3136 = vadd.f32 %v2535, %v3135
  %3137 = vmatmul.bf16.gmra.mxu0 %v2438
  %v3138 = vpop.f32.mrf.mxu0
  %v3139 = vadd.f32 %v2535, %v3138
  %v3140 = vpop.f32.mrf.mxu0
  %v3141 = vadd.f32 %v2535, %v3140
  %3142 = vmatmul.bf16.gmra.mxu0 %v2440
  %v3143 = vpop.f32.mrf.mxu0
  %v3144 = vadd.f32 %v2535, %v3143
  %v3145 = vpop.f32.mrf.mxu0
  %v3146 = vadd.f32 %v2535, %v3145
  %3147 = vmatmul.bf16.gmra.mxu0 %v2442
  %v3148 = vpop.f32.mrf.mxu0
  %v3149 = vadd.f32 %v2535, %v3148
  %v3150 = vpop.f32.mrf.mxu0
  %v3151 = vadd.f32 %v2535, %v3150
  %3152 = vmatmul.bf16.gmra.mxu0 %v2444
  %v3153 = vpop.f32.mrf.mxu0
  %v3154 = vadd.f32 %v2535, %v3153
  %v3155 = vpop.f32.mrf.mxu0
  %v3156 = vadd.f32 %v2535, %v3155
  %3157 = vmatmul.bf16.gmra.mxu0 %v2446
  %v3158 = vpop.f32.mrf.mxu0
  %v3159 = vadd.f32 %v2535, %v3158
  %v3160 = vpop.f32.mrf.mxu0
  %v3161 = vadd.f32 %v2535, %v3160
  %3162 = vmatmul.bf16.gmra.mxu0 %v2448
  %v3163 = vpop.f32.mrf.mxu0
  %v3164 = vadd.f32 %v2535, %v3163
  %v3165 = vpop.f32.mrf.mxu0
  %v3166 = vadd.f32 %v2535, %v3165
  %3167 = vmatmul.bf16.gmra.mxu0 %v2450
  %v3168 = vpop.f32.mrf.mxu0
  %v3169 = vadd.f32 %v2535, %v3168
  %v3170 = vpop.f32.mrf.mxu0
  %v3171 = vadd.f32 %v2535, %v3170
  %3172 = vmatmul.bf16.gmra.mxu0 %v2452
  %v3173 = vpop.f32.mrf.mxu0
  %v3174 = vadd.f32 %v2535, %v3173
  %v3175 = vpop.f32.mrf.mxu0
  %v3176 = vadd.f32 %v2535, %v3175
  %3177 = vmatmul.bf16.gmra.mxu0 %v2454
  %v3178 = vpop.f32.mrf.mxu0
  %v3179 = vadd.f32 %v2535, %v3178
  %v3180 = vpop.f32.mrf.mxu0
  %v3181 = vadd.f32 %v2535, %v3180
  %3182 = vmatmul.bf16.gmra.mxu0 %v2456
  %v3183 = vpop.f32.mrf.mxu0
  %v3184 = vadd.f32 %v2535, %v3183
  %v3185 = vpop.f32.mrf.mxu0
  %v3186 = vadd.f32 %v2535, %v3185
  %3187 = vmatmul.bf16.gmra.mxu0 %v2458
  %v3188 = vpop.f32.mrf.mxu0
  %v3189 = vadd.f32 %v2535, %v3188
  %v3190 = vpop.f32.mrf.mxu0
  %v3191 = vadd.f32 %v2535, %v3190
  %3192 = vmatmul.bf16.gmra.mxu0 %v2460
  %v3193 = vpop.f32.mrf.mxu0
  %v3194 = vadd.f32 %v2535, %v3193
  %v3195 = vpop.f32.mrf.mxu0
  %v3196 = vadd.f32 %v2535, %v3195
  %3197 = vmatmul.bf16.gmra.mxu0 %v2462
  %v3198 = vpop.f32.mrf.mxu0
  %v3199 = vadd.f32 %v2535, %v3198
  %v3200 = vpop.f32.mrf.mxu0
  %v3201 = vadd.f32 %v2535, %v3200
  %3202 = vmatmul.bf16.gmra.mxu0 %v2464
  %v3203 = vpop.f32.mrf.mxu0
  %v3204 = vadd.f32 %v2535, %v3203
  %v3205 = vpop.f32.mrf.mxu0
  %v3206 = vadd.f32 %v2535, %v3205
  %3207 = vmatmul.bf16.gmra.mxu0 %v2466
  %v3208 = vpop.f32.mrf.mxu0
  %v3209 = vadd.f32 %v2535, %v3208
  %v3210 = vpop.f32.mrf.mxu0
  %v3211 = vadd.f32 %v2535, %v3210
  %3212 = vmatmul.bf16.gmra.mxu0 %v2468
  %v3213 = vpop.f32.mrf.mxu0
  %v3214 = vadd.f32 %v2535, %v3213
  %v3215 = vpop.f32.mrf.mxu0
  %v3216 = vadd.f32 %v2535, %v3215
  %3217 = vmatmul.bf16.gmra.mxu0 %v2470
  %v3218 = vpop.f32.mrf.mxu0
  %v3219 = vadd.f32 %v2535, %v3218
  %v3220 = vpop.f32.mrf.mxu0
  %v3221 = vadd.f32 %v2535, %v3220
  %3222 = vmatmul.bf16.gmra.mxu0 %v2472
  %v3223 = vpop.f32.mrf.mxu0
  %v3224 = vadd.f32 %v2535, %v3223
  %v3225 = vpop.f32.mrf.mxu0
  %v3226 = vadd.f32 %v2535, %v3225
  %3227 = vmatmul.bf16.gmra.mxu0 %v2474
  %v3228 = vpop.f32.mrf.mxu0
  %v3229 = vadd.f32 %v2535, %v3228
  %v3230 = vpop.f32.mrf.mxu0
  %v3231 = vadd.f32 %v2535, %v3230
  %3232 = vmatmul.bf16.gmra.mxu0 %v2476
  %v3233 = vpop.f32.mrf.mxu0
  %v3234 = vadd.f32 %v2535, %v3233
  %v3235 = vpop.f32.mrf.mxu0
  %v3236 = vadd.f32 %v2535, %v3235
  %3237 = vmatmul.bf16.gmra.mxu0 %v2478
  %v3238 = vpop.f32.mrf.mxu0
  %v3239 = vadd.f32 %v2535, %v3238
  %v3240 = vpop.f32.mrf.mxu0
  %v3241 = vadd.f32 %v2535, %v3240
  %3242 = vmatmul.bf16.gmra.mxu0 %v2480
  %v3243 = vpop.f32.mrf.mxu0
  %v3244 = vadd.f32 %v2535, %v3243
  %v3245 = vpop.f32.mrf.mxu0
  %v3246 = vadd.f32 %v2535, %v3245
  %3247 = vmatmul.bf16.gmra.mxu0 %v2482
  %v3248 = vpop.f32.mrf.mxu0
  %v3249 = vadd.f32 %v2535, %v3248
  %v3250 = vpop.f32.mrf.mxu0
  %v3251 = vadd.f32 %v2535, %v3250
  %3252 = vmatmul.bf16.gmra.mxu0 %v2484
  %v3253 = vpop.f32.mrf.mxu0
  %v3254 = vadd.f32 %v2535, %v3253
  %v3255 = vpop.f32.mrf.mxu0
  %v3256 = vadd.f32 %v2535, %v3255
  %3257 = vmatmul.bf16.gmra.mxu0 %v2486
  %v3258 = vpop.f32.mrf.mxu0
  %v3259 = vadd.f32 %v2535, %v3258
  %v3260 = vpop.f32.mrf.mxu0
  %v3261 = vadd.f32 %v2535, %v3260
  %3262 = vmatmul.bf16.gmra.mxu0 %v2488
  %v3263 = vpop.f32.mrf.mxu0
  %v3264 = vadd.f32 %v2535, %v3263
  %v3265 = vpop.f32.mrf.mxu0
  %v3266 = vadd.f32 %v2535, %v3265
  %3267 = vmatmul.bf16.gmra.mxu0 %v2490
  %v3268 = vpop.f32.mrf.mxu0
  %v3269 = vadd.f32 %v2535, %v3268
  %v3270 = vpop.f32.mrf.mxu0
  %v3271 = vadd.f32 %v2535, %v3270
  %3272 = vmatmul.bf16.gmra.mxu0 %v2492
  %v3273 = vpop.f32.mrf.mxu0
  %v3274 = vadd.f32 %v2535, %v3273
  %v3275 = vpop.f32.mrf.mxu0
  %v3276 = vadd.f32 %v2535, %v3275
  %3277 = vmatmul.bf16.gmra.mxu0 %v2494
  %v3278 = vpop.f32.mrf.mxu0
  %v3279 = vadd.f32 %v2535, %v3278
  %v3280 = vpop.f32.mrf.mxu0
  %v3281 = vadd.f32 %v2535, %v3280
  %3282 = vmatmul.bf16.gmra.mxu0 %v2496
  %v3283 = vpop.f32.mrf.mxu0
  %v3284 = vadd.f32 %v2535, %v3283
  %v3285 = vpop.f32.mrf.mxu0
  %v3286 = vadd.f32 %v2535, %v3285
  %3287 = vmatmul.bf16.gmra.mxu0 %v2498
  %v3288 = vpop.f32.mrf.mxu0
  %v3289 = vadd.f32 %v2535, %v3288
  %v3290 = vpop.f32.mrf.mxu0
  %3291 = vdwg.mxu0
  %3292 = vmatpush.bf16.msra.mxu0 %v2665
  %3293 = vmatpush.bf16.msra.mxu0 %v2663
  %3294 = vmatpush.bf16.msra.mxu0 %v2661
  %3295 = vmatpush.bf16.msra.mxu0 %v2659
  %3296 = vmatpush.bf16.msra.mxu0 %v2657
  %3297 = vmatpush.bf16.msra.mxu0 %v2655
  %3298 = vmatpush.bf16.msra.mxu0 %v2653
  %3299 = vmatpush.bf16.msra.mxu0 %v2651
  %3300 = vmatmul.bf16.gmra.mxu0 %v2425
  %v3301 = vpop.f32.mrf.mxu0
  %v3302 = vadd.f32 %v3104, %v3301
  %v3303 = vpop.f32.mrf.mxu0
  %v3304 = vadd.f32 %v3106, %v3303
  %3305 = vmatmul.bf16.gmra.mxu0 %v2427
  %v3306 = vpop.f32.mrf.mxu0
  %v3307 = vadd.f32 %v3109, %v3306
  %v3308 = vpop.f32.mrf.mxu0
  %v3309 = vadd.f32 %v3111, %v3308
  %3310 = vmatmul.bf16.gmra.mxu0 %v2429
  %v3311 = vpop.f32.mrf.mxu0
  %v3312 = vadd.f32 %v3114, %v3311
  %v3313 = vpop.f32.mrf.mxu0
  %v3314 = vadd.f32 %v3116, %v3313
  %3315 = vmatmul.bf16.gmra.mxu0 %v2431
  %v3316 = vpop.f32.mrf.mxu0
  %v3317 = vadd.f32 %v3119, %v3316
  %v3318 = vpop.f32.mrf.mxu0
  %v3319 = vadd.f32 %v3121, %v3318
  %3320 = vmatmul.bf16.gmra.mxu0 %v2433
  %v3321 = vpop.f32.mrf.mxu0
  %v3322 = vadd.f32 %v3124, %v3321
  %v3323 = vpop.f32.mrf.mxu0
  %v3324 = vadd.f32 %v3126, %v3323
  %3325 = vmatmul.bf16.gmra.mxu0 %v2435
  %v3326 = vpop.f32.mrf.mxu0
  %v3327 = vadd.f32 %v3129, %v3326
  %v3328 = vpop.f32.mrf.mxu0
  %v3329 = vadd.f32 %v3131, %v3328
  %3330 = vmatmul.bf16.gmra.mxu0 %v2437
  %v3331 = vpop.f32.mrf.mxu0
  %v3332 = vadd.f32 %v3134, %v3331
  %v3333 = vpop.f32.mrf.mxu0
  %v3334 = vadd.f32 %v3136, %v3333
  %3335 = vmatmul.bf16.gmra.mxu0 %v2439
  %v3336 = vpop.f32.mrf.mxu0
  %v3337 = vadd.f32 %v3139, %v3336
  %v3338 = vpop.f32.mrf.mxu0
  %v3339 = vadd.f32 %v3141, %v3338
  %3340 = vmatmul.bf16.gmra.mxu0 %v2441
  %v3341 = vpop.f32.mrf.mxu0
  %v3342 = vadd.f32 %v3144, %v3341
  %v3343 = vpop.f32.mrf.mxu0
  %v3344 = vadd.f32 %v3146, %v3343
  %3345 = vmatmul.bf16.gmra.mxu0 %v2443
  %v3346 = vpop.f32.mrf.mxu0
  %v3347 = vadd.f32 %v3149, %v3346
  %v3348 = vpop.f32.mrf.mxu0
  %v3349 = vadd.f32 %v3151, %v3348
  %3350 = vmatmul.bf16.gmra.mxu0 %v2445
  %v3351 = vpop.f32.mrf.mxu0
  %v3352 = vadd.f32 %v3154, %v3351
  %v3353 = vpop.f32.mrf.mxu0
  %v3354 = vadd.f32 %v3156, %v3353
  %3355 = vmatmul.bf16.gmra.mxu0 %v2447
  %v3356 = vpop.f32.mrf.mxu0
  %v3357 = vadd.f32 %v3159, %v3356
  %v3358 = vpop.f32.mrf.mxu0
  %v3359 = vadd.f32 %v3161, %v3358
  %3360 = vmatmul.bf16.gmra.mxu0 %v2449
  %v3361 = vpop.f32.mrf.mxu0
  %v3362 = vadd.f32 %v3164, %v3361
  %v3363 = vpop.f32.mrf.mxu0
  %v3364 = vadd.f32 %v3166, %v3363
  %3365 = vmatmul.bf16.gmra.mxu0 %v2451
  %v3366 = vpop.f32.mrf.mxu0
  %v3367 = vadd.f32 %v3169, %v3366
  %v3368 = vpop.f32.mrf.mxu0
  %v3369 = vadd.f32 %v3171, %v3368
  %3370 = vmatmul.bf16.gmra.mxu0 %v2453
  %v3371 = vpop.f32.mrf.mxu0
  %v3372 = vadd.f32 %v3174, %v3371
  %v3373 = vpop.f32.mrf.mxu0
  %v3374 = vadd.f32 %v3176, %v3373
  %3375 = vmatmul.bf16.gmra.mxu0 %v2455
  %v3376 = vpop.f32.mrf.mxu0
  %v3377 = vadd.f32 %v3179, %v3376
  %v3378 = vpop.f32.mrf.mxu0
  %v3379 = vadd.f32 %v3181, %v3378
  %3380 = vmatmul.bf16.gmra.mxu0 %v2457
  %v3381 = vpop.f32.mrf.mxu0
  %v3382 = vadd.f32 %v3184, %v3381
  %v3383 = vpop.f32.mrf.mxu0
  %v3384 = vadd.f32 %v3186, %v3383
  %3385 = vmatmul.bf16.gmra.mxu0 %v2459
  %v3386 = vpop.f32.mrf.mxu0
  %v3387 = vadd.f32 %v3189, %v3386
  %v3388 = vpop.f32.mrf.mxu0
  %v3389 = vadd.f32 %v3191, %v3388
  %3390 = vmatmul.bf16.gmra.mxu0 %v2461
  %v3391 = vpop.f32.mrf.mxu0
  %v3392 = vadd.f32 %v3194, %v3391
  %v3393 = vpop.f32.mrf.mxu0
  %v3394 = vadd.f32 %v3196, %v3393
  %3395 = vmatmul.bf16.gmra.mxu0 %v2463
  %v3396 = vpop.f32.mrf.mxu0
  %v3397 = vadd.f32 %v3199, %v3396
  %v3398 = vpop.f32.mrf.mxu0
  %v3399 = vadd.f32 %v3201, %v3398
  %3400 = vmatmul.bf16.gmra.mxu0 %v2465
  %v3401 = vpop.f32.mrf.mxu0
  %v3402 = vadd.f32 %v3204, %v3401
  %v3403 = vpop.f32.mrf.mxu0
  %v3404 = vadd.f32 %v3206, %v3403
  %3405 = vmatmul.bf16.gmra.mxu0 %v2467
  %v3406 = vpop.f32.mrf.mxu0
  %v3407 = vadd.f32 %v3209, %v3406
  %v3408 = vpop.f32.mrf.mxu0
  %v3409 = vadd.f32 %v3211, %v3408
  %3410 = vmatmul.bf16.gmra.mxu0 %v2469
  %v3411 = vpop.f32.mrf.mxu0
  %v3412 = vadd.f32 %v3214, %v3411
  %v3413 = vpop.f32.mrf.mxu0
  %v3414 = vadd.f32 %v3216, %v3413
  %3415 = vmatmul.bf16.gmra.mxu0 %v2471
  %v3416 = vpop.f32.mrf.mxu0
  %v3417 = vadd.f32 %v3219, %v3416
  %v3418 = vpop.f32.mrf.mxu0
  %v3419 = vadd.f32 %v3221, %v3418
  %3420 = vmatmul.bf16.gmra.mxu0 %v2473
  %v3421 = vpop.f32.mrf.mxu0
  %v3422 = vadd.f32 %v3224, %v3421
  %v3423 = vpop.f32.mrf.mxu0
  %v3424 = vadd.f32 %v3226, %v3423
  %3425 = vmatmul.bf16.gmra.mxu0 %v2475
  %v3426 = vpop.f32.mrf.mxu0
  %v3427 = vadd.f32 %v3229, %v3426
  %v3428 = vpop.f32.mrf.mxu0
  %v3429 = vadd.f32 %v3231, %v3428
  %3430 = vmatmul.bf16.gmra.mxu0 %v2477
  %v3431 = vpop.f32.mrf.mxu0
  %v3432 = vadd.f32 %v3234, %v3431
  %v3433 = vpop.f32.mrf.mxu0
  %v3434 = vadd.f32 %v3236, %v3433
  %3435 = vmatmul.bf16.gmra.mxu0 %v2479
  %v3436 = vpop.f32.mrf.mxu0
  %v3437 = vadd.f32 %v3239, %v3436
  %v3438 = vpop.f32.mrf.mxu0
  %v3439 = vadd.f32 %v3241, %v3438
  %3440 = vmatmul.bf16.gmra.mxu0 %v2481
  %v3441 = vpop.f32.mrf.mxu0
  %v3442 = vadd.f32 %v3244, %v3441
  %v3443 = vpop.f32.mrf.mxu0
  %v3444 = vadd.f32 %v3246, %v3443
  %3445 = vmatmul.bf16.gmra.mxu0 %v2483
  %v3446 = vpop.f32.mrf.mxu0
  %v3447 = vadd.f32 %v3249, %v3446
  %v3448 = vpop.f32.mrf.mxu0
  %v3449 = vadd.f32 %v3251, %v3448
  %3450 = vmatmul.bf16.gmra.mxu0 %v2485
  %v3451 = vpop.f32.mrf.mxu0
  %v3452 = vadd.f32 %v3254, %v3451
  %v3453 = vpop.f32.mrf.mxu0
  %v3454 = vadd.f32 %v3256, %v3453
  %3455 = vmatmul.bf16.gmra.mxu0 %v2487
  %v3456 = vpop.f32.mrf.mxu0
  %v3457 = vadd.f32 %v3259, %v3456
  %v3458 = vpop.f32.mrf.mxu0
  %v3459 = vadd.f32 %v3261, %v3458
  %3460 = vmatmul.bf16.gmra.mxu0 %v2489
  %v3461 = vpop.f32.mrf.mxu0
  %v3462 = vadd.f32 %v3264, %v3461
  %v3463 = vpop.f32.mrf.mxu0
  %v3464 = vadd.f32 %v3266, %v3463
  %3465 = vmatmul.bf16.gmra.mxu0 %v2491
  %v3466 = vpop.f32.mrf.mxu0
  %v3467 = vadd.f32 %v3269, %v3466
  %v3468 = vpop.f32.mrf.mxu0
  %v3469 = vadd.f32 %v3271, %v3468
  %3470 = vmatmul.bf16.gmra.mxu0 %v2493
  %v3471 = vpop.f32.mrf.mxu0
  %v3472 = vadd.f32 %v3274, %v3471
  %v3473 = vpop.f32.mrf.mxu0
  %v3474 = vadd.f32 %v3276, %v3473
  %3475 = vmatmul.bf16.gmra.mxu0 %v2495
  %v3476 = vpop.f32.mrf.mxu0
  %v3477 = vadd.f32 %v3279, %v3476
  %v3478 = vpop.f32.mrf.mxu0
  %v3479 = vadd.f32 %v3281, %v3478
  %3480 = vmatmul.bf16.gmra.mxu0 %v2497
  %v3481 = vpop.f32.mrf.mxu0
  %v3482 = vadd.f32 %v3284, %v3481
  %v3483 = vpop.f32.mrf.mxu0
  %v3484 = vadd.f32 %v3286, %v3483
  %3485 = vmatmul.bf16.gmra.mxu0 %v2499
  %v3486 = vpop.f32.mrf.mxu0
  %v3487 = vadd.f32 %v3289, %v3486
  %v3488 = vpop.f32.mrf.mxu0
  %3489 = vdwg.mxu0
  %v3490 = vpack.c.bf16 %v2908, %v2906
  %v3491 = vpack.c.bf16 %v3304, %v3302
  %v3492 = vpack.c.bf16 %v2913, %v2911
  %v3493 = vpack.c.bf16 %v3309, %v3307
  %v3494 = vpack.c.bf16 %v2918, %v2916
  %v3495 = vpack.c.bf16 %v3314, %v3312
  %v3496 = vpack.c.bf16 %v2923, %v2921
  %v3497 = vpack.c.bf16 %v3319, %v3317
  %v3498 = vpack.c.bf16 %v2928, %v2926
  %v3499 = vpack.c.bf16 %v3324, %v3322
  %v3500 = vpack.c.bf16 %v2933, %v2931
  %v3501 = vpack.c.bf16 %v3329, %v3327
  %v3502 = vpack.c.bf16 %v2938, %v2936
  %v3503 = vpack.c.bf16 %v3334, %v3332
  %v3504 = vpack.c.bf16 %v2943, %v2941
  %v3505 = vpack.c.bf16 %v3339, %v3337
  %v3506 = vpack.c.bf16 %v2948, %v2946
  %v3507 = vpack.c.bf16 %v3344, %v3342
  %v3508 = vpack.c.bf16 %v2953, %v2951
  %v3509 = vpack.c.bf16 %v3349, %v3347
  %v3510 = vpack.c.bf16 %v2958, %v2956
  %v3511 = vpack.c.bf16 %v3354, %v3352
  %v3512 = vpack.c.bf16 %v2963, %v2961
  %v3513 = vpack.c.bf16 %v3359, %v3357
  %v3514 = vpack.c.bf16 %v2968, %v2966
  %v3515 = vpack.c.bf16 %v3364, %v3362
  %v3516 = vpack.c.bf16 %v2973, %v2971
  %v3517 = vpack.c.bf16 %v3369, %v3367
  %v3518 = vpack.c.bf16 %v2978, %v2976
  %v3519 = vpack.c.bf16 %v3374, %v3372
  %v3520 = vpack.c.bf16 %v2983, %v2981
  %v3521 = vpack.c.bf16 %v3379, %v3377
  %v3522 = vpack.c.bf16 %v2988, %v2986
  %v3523 = vpack.c.bf16 %v3384, %v3382
  %v3524 = vpack.c.bf16 %v2993, %v2991
  %v3525 = vpack.c.bf16 %v3389, %v3387
  %v3526 = vpack.c.bf16 %v2998, %v2996
  %v3527 = vpack.c.bf16 %v3394, %v3392
  %v3528 = vpack.c.bf16 %v3003, %v3001
  %v3529 = vpack.c.bf16 %v3399, %v3397
  %v3530 = vpack.c.bf16 %v3008, %v3006
  %v3531 = vpack.c.bf16 %v3404, %v3402
  %v3532 = vpack.c.bf16 %v3013, %v3011
  %v3533 = vpack.c.bf16 %v3409, %v3407
  %v3534 = vpack.c.bf16 %v3018, %v3016
  %v3535 = vpack.c.bf16 %v3414, %v3412
  %v3536 = vpack.c.bf16 %v3023, %v3021
  %v3537 = vpack.c.bf16 %v3419, %v3417
  %v3538 = vpack.c.bf16 %v3028, %v3026
  %v3539 = vpack.c.bf16 %v3424, %v3422
  %v3540 = vpack.c.bf16 %v3033, %v3031
  %v3541 = vpack.c.bf16 %v3429, %v3427
  %v3542 = vpack.c.bf16 %v3038, %v3036
  %v3543 = vpack.c.bf16 %v3434, %v3432
  %v3544 = vpack.c.bf16 %v3043, %v3041
  %v3545 = vpack.c.bf16 %v3439, %v3437
  %v3546 = vpack.c.bf16 %v3048, %v3046
  %v3547 = vpack.c.bf16 %v3444, %v3442
  %v3548 = vpack.c.bf16 %v3053, %v3051
  %v3549 = vpack.c.bf16 %v3449, %v3447
  %v3550 = vpack.c.bf16 %v3058, %v3056
  %v3551 = vpack.c.bf16 %v3454, %v3452
  %v3552 = vpack.c.bf16 %v3063, %v3061
  %v3553 = vpack.c.bf16 %v3459, %v3457
  %v3554 = vpack.c.bf16 %v3068, %v3066
  %v3555 = vpack.c.bf16 %v3464, %v3462
  %v3556 = vpack.c.bf16 %v3073, %v3071
  %v3557 = vpack.c.bf16 %v3469, %v3467
  %v3558 = vpack.c.bf16 %v3078, %v3076
  %v3559 = vpack.c.bf16 %v3474, %v3472
  %v3560 = vpack.c.bf16 %v3083, %v3081
  %v3561 = vpack.c.bf16 %v3479, %v3477
  %v3562 = vpack.c.bf16 %v3088, %v3086
  %v3563 = vpack.c.bf16 %v3484, %v3482
  %v3564 = vpack.c.bf16 %v3091, %v3091
  %v3565 = vpack.c.bf16 %v3487, %v3487
  %v3566 = vunpack.c.l.bf16 %v3490
  %v3567 = vunpack.c.l.bf16 %v3491
  %v3568 = vunpack.c.h.bf16 %v3490
  %v3569 = vunpack.c.h.bf16 %v3491
  %v3570 = vunpack.c.l.bf16 %v3492
  %v3571 = vunpack.c.l.bf16 %v3493
  %v3572 = vunpack.c.h.bf16 %v3492
  %v3573 = vunpack.c.h.bf16 %v3493
  %v3574 = vunpack.c.l.bf16 %v3494
  %v3575 = vunpack.c.l.bf16 %v3495
  %v3576 = vunpack.c.h.bf16 %v3494
  %v3577 = vunpack.c.h.bf16 %v3495
  %v3578 = vunpack.c.l.bf16 %v3496
  %v3579 = vunpack.c.l.bf16 %v3497
  %v3580 = vunpack.c.h.bf16 %v3496
  %v3581 = vunpack.c.h.bf16 %v3497
  %v3582 = vunpack.c.l.bf16 %v3498
  %v3583 = vunpack.c.l.bf16 %v3499
  %v3584 = vunpack.c.h.bf16 %v3498
  %v3585 = vunpack.c.h.bf16 %v3499
  %v3586 = vunpack.c.l.bf16 %v3500
  %v3587 = vunpack.c.l.bf16 %v3501
  %v3588 = vunpack.c.h.bf16 %v3500
  %v3589 = vunpack.c.h.bf16 %v3501
  %v3590 = vunpack.c.l.bf16 %v3502
  %v3591 = vunpack.c.l.bf16 %v3503
  %v3592 = vunpack.c.h.bf16 %v3502
  %v3593 = vunpack.c.h.bf16 %v3503
  %v3594 = vunpack.c.l.bf16 %v3504
  %v3595 = vunpack.c.l.bf16 %v3505
  %v3596 = vunpack.c.h.bf16 %v3504
  %v3597 = vunpack.c.h.bf16 %v3505
  %v3598 = vunpack.c.l.bf16 %v3506
  %v3599 = vunpack.c.l.bf16 %v3507
  %v3600 = vunpack.c.h.bf16 %v3506
  %v3601 = vunpack.c.h.bf16 %v3507
  %v3602 = vunpack.c.l.bf16 %v3508
  %v3603 = vunpack.c.l.bf16 %v3509
  %v3604 = vunpack.c.h.bf16 %v3508
  %v3605 = vunpack.c.h.bf16 %v3509
  %v3606 = vunpack.c.l.bf16 %v3510
  %v3607 = vunpack.c.l.bf16 %v3511
  %v3608 = vunpack.c.h.bf16 %v3510
  %v3609 = vunpack.c.h.bf16 %v3511
  %v3610 = vunpack.c.l.bf16 %v3512
  %v3611 = vunpack.c.l.bf16 %v3513
  %v3612 = vunpack.c.h.bf16 %v3512
  %v3613 = vunpack.c.h.bf16 %v3513
  %v3614 = vunpack.c.l.bf16 %v3514
  %v3615 = vunpack.c.l.bf16 %v3515
  %v3616 = vunpack.c.h.bf16 %v3514
  %v3617 = vunpack.c.h.bf16 %v3515
  %v3618 = vunpack.c.l.bf16 %v3516
  %v3619 = vunpack.c.l.bf16 %v3517
  %v3620 = vunpack.c.h.bf16 %v3516
  %v3621 = vunpack.c.h.bf16 %v3517
  %v3622 = vunpack.c.l.bf16 %v3518
  %v3623 = vunpack.c.l.bf16 %v3519
  %v3624 = vunpack.c.h.bf16 %v3518
  %v3625 = vunpack.c.h.bf16 %v3519
  %v3626 = vunpack.c.l.bf16 %v3520
  %v3627 = vunpack.c.l.bf16 %v3521
  %v3628 = vunpack.c.h.bf16 %v3520
  %v3629 = vunpack.c.h.bf16 %v3521
  %v3630 = vunpack.c.l.bf16 %v3522
  %v3631 = vunpack.c.l.bf16 %v3523
  %v3632 = vunpack.c.h.bf16 %v3522
  %v3633 = vunpack.c.h.bf16 %v3523
  %v3634 = vunpack.c.l.bf16 %v3524
  %v3635 = vunpack.c.l.bf16 %v3525
  %v3636 = vunpack.c.h.bf16 %v3524
  %v3637 = vunpack.c.h.bf16 %v3525
  %v3638 = vunpack.c.l.bf16 %v3526
  %v3639 = vunpack.c.l.bf16 %v3527
  %v3640 = vunpack.c.h.bf16 %v3526
  %v3641 = vunpack.c.h.bf16 %v3527
  %v3642 = vunpack.c.l.bf16 %v3528
  %v3643 = vunpack.c.l.bf16 %v3529
  %v3644 = vunpack.c.h.bf16 %v3528
  %v3645 = vunpack.c.h.bf16 %v3529
  %v3646 = vunpack.c.l.bf16 %v3530
  %v3647 = vunpack.c.l.bf16 %v3531
  %v3648 = vunpack.c.h.bf16 %v3530
  %v3649 = vunpack.c.h.bf16 %v3531
  %v3650 = vunpack.c.l.bf16 %v3532
  %v3651 = vunpack.c.l.bf16 %v3533
  %v3652 = vunpack.c.h.bf16 %v3532
  %v3653 = vunpack.c.h.bf16 %v3533
  %v3654 = vunpack.c.l.bf16 %v3534
  %v3655 = vunpack.c.l.bf16 %v3535
  %v3656 = vunpack.c.h.bf16 %v3534
  %v3657 = vunpack.c.h.bf16 %v3535
  %v3658 = vunpack.c.l.bf16 %v3536
  %v3659 = vunpack.c.l.bf16 %v3537
  %v3660 = vunpack.c.h.bf16 %v3536
  %v3661 = vunpack.c.h.bf16 %v3537
  %v3662 = vunpack.c.l.bf16 %v3538
  %v3663 = vunpack.c.l.bf16 %v3539
  %v3664 = vunpack.c.h.bf16 %v3538
  %v3665 = vunpack.c.h.bf16 %v3539
  %v3666 = vunpack.c.l.bf16 %v3540
  %v3667 = vunpack.c.l.bf16 %v3541
  %v3668 = vunpack.c.h.bf16 %v3540
  %v3669 = vunpack.c.h.bf16 %v3541
  %v3670 = vunpack.c.l.bf16 %v3542
  %v3671 = vunpack.c.l.bf16 %v3543
  %v3672 = vunpack.c.h.bf16 %v3542
  %v3673 = vunpack.c.h.bf16 %v3543
  %v3674 = vunpack.c.l.bf16 %v3544
  %v3675 = vunpack.c.l.bf16 %v3545
  %v3676 = vunpack.c.h.bf16 %v3544
  %v3677 = vunpack.c.h.bf16 %v3545
  %v3678 = vunpack.c.l.bf16 %v3546
  %v3679 = vunpack.c.l.bf16 %v3547
  %v3680 = vunpack.c.h.bf16 %v3546
  %v3681 = vunpack.c.h.bf16 %v3547
  %v3682 = vunpack.c.l.bf16 %v3548
  %v3683 = vunpack.c.l.bf16 %v3549
  %v3684 = vunpack.c.h.bf16 %v3548
  %v3685 = vunpack.c.h.bf16 %v3549
  %v3686 = vunpack.c.l.bf16 %v3550
  %v3687 = vunpack.c.l.bf16 %v3551
  %v3688 = vunpack.c.h.bf16 %v3550
  %v3689 = vunpack.c.h.bf16 %v3551
  %v3690 = vunpack.c.l.bf16 %v3552
  %v3691 = vunpack.c.l.bf16 %v3553
  %v3692 = vunpack.c.h.bf16 %v3552
  %v3693 = vunpack.c.h.bf16 %v3553
  %v3694 = vunpack.c.l.bf16 %v3554
  %v3695 = vunpack.c.l.bf16 %v3555
  %v3696 = vunpack.c.h.bf16 %v3554
  %v3697 = vunpack.c.h.bf16 %v3555
  %v3698 = vunpack.c.l.bf16 %v3556
  %v3699 = vunpack.c.l.bf16 %v3557
  %v3700 = vunpack.c.h.bf16 %v3556
  %v3701 = vunpack.c.h.bf16 %v3557
  %v3702 = vunpack.c.l.bf16 %v3558
  %v3703 = vunpack.c.l.bf16 %v3559
  %v3704 = vunpack.c.h.bf16 %v3558
  %v3705 = vunpack.c.h.bf16 %v3559
  %v3706 = vunpack.c.l.bf16 %v3560
  %v3707 = vunpack.c.l.bf16 %v3561
  %v3708 = vunpack.c.h.bf16 %v3560
  %v3709 = vunpack.c.h.bf16 %v3561
  %v3710 = vunpack.c.l.bf16 %v3562
  %v3711 = vunpack.c.l.bf16 %v3563
  %v3712 = vunpack.c.h.bf16 %v3562
  %v3713 = vunpack.c.h.bf16 %v3563
  %v3714 = vunpack.c.l.bf16 %v3564
  %v3715 = vunpack.c.l.bf16 %v3565
  %v3716 = vtanh.pop %v3566
  %v3717 = vtanh.pop %v3567
  %v3718 = vtanh.pop %v3568
  %v3719 = vtanh.pop %v3569
  %v3720 = vtanh.pop %v3570
  %v3721 = vtanh.pop %v3571
  %v3722 = vtanh.pop %v3572
  %v3723 = vtanh.pop %v3573
  %v3724 = vtanh.pop %v3574
  %v3725 = vtanh.pop %v3575
  %v3726 = vtanh.pop %v3576
  %v3727 = vtanh.pop %v3577
  %v3728 = vtanh.pop %v3578
  %v3729 = vtanh.pop %v3579
  %v3730 = vtanh.pop %v3580
  %v3731 = vtanh.pop %v3581
  %v3732 = vtanh.pop %v3582
  %v3733 = vtanh.pop %v3583
  %v3734 = vtanh.pop %v3584
  %v3735 = vtanh.pop %v3585
  %v3736 = vtanh.pop %v3586
  %v3737 = vtanh.pop %v3587
  %v3738 = vtanh.pop %v3588
  %v3739 = vtanh.pop %v3589
  %v3740 = vtanh.pop %v3590
  %v3741 = vtanh.pop %v3591
  %v3742 = vtanh.pop %v3592
  %v3743 = vtanh.pop %v3593
  %v3744 = vtanh.pop %v3594
  %v3745 = vtanh.pop %v3595
  %v3746 = vtanh.pop %v3596
  %v3747 = vtanh.pop %v3597
  %v3748 = vtanh.pop %v3598
  %v3749 = vtanh.pop %v3599
  %v3750 = vtanh.pop %v3600
  %v3751 = vtanh.pop %v3601
  %v3752 = vtanh.pop %v3602
  %v3753 = vtanh.pop %v3603
  %v3754 = vtanh.pop %v3604
  %v3755 = vtanh.pop %v3605
  %v3756 = vtanh.pop %v3606
  %v3757 = vtanh.pop %v3607
  %v3758 = vtanh.pop %v3608
  %v3759 = vtanh.pop %v3609
  %v3760 = vtanh.pop %v3610
  %v3761 = vtanh.pop %v3611
  %v3762 = vtanh.pop %v3612
  %v3763 = vtanh.pop %v3613
  %v3764 = vtanh.pop %v3614
  %v3765 = vtanh.pop %v3615
  %v3766 = vtanh.pop %v3616
  %v3767 = vtanh.pop %v3617
  %v3768 = vtanh.pop %v3618
  %v3769 = vtanh.pop %v3619
  %v3770 = vtanh.pop %v3620
  %v3771 = vtanh.pop %v3621
  %v3772 = vtanh.pop %v3622
  %v3773 = vtanh.pop %v3623
  %v3774 = vtanh.pop %v3624
  %v3775 = vtanh.pop %v3625
  %v3776 = vtanh.pop %v3626
  %v3777 = vtanh.pop %v3627
  %v3778 = vtanh.pop %v3628
  %v3779 = vtanh.pop %v3629
  %v3780 = vtanh.pop %v3630
  %v3781 = vtanh.pop %v3631
  %v3782 = vtanh.pop %v3632
  %v3783 = vtanh.pop %v3633
  %v3784 = vtanh.pop %v3634
  %v3785 = vtanh.pop %v3635
  %v3786 = vtanh.pop %v3636
  %v3787 = vtanh.pop %v3637
  %v3788 = vtanh.pop %v3638
  %v3789 = vtanh.pop %v3639
  %v3790 = vtanh.pop %v3640
  %v3791 = vtanh.pop %v3641
  %v3792 = vtanh.pop %v3642
  %v3793 = vtanh.pop %v3643
  %v3794 = vtanh.pop %v3644
  %v3795 = vtanh.pop %v3645
  %v3796 = vtanh.pop %v3646
  %v3797 = vtanh.pop %v3647
  %v3798 = vtanh.pop %v3648
  %v3799 = vtanh.pop %v3649
  %v3800 = vtanh.pop %v3650
  %v3801 = vtanh.pop %v3651
  %v3802 = vtanh.pop %v3652
  %v3803 = vtanh.pop %v3653
  %v3804 = vtanh.pop %v3654
  %v3805 = vtanh.pop %v3655
  %v3806 = vtanh.pop %v3656
  %v3807 = vtanh.pop %v3657
  %v3808 = vtanh.pop %v3658
  %v3809 = vtanh.pop %v3659
  %v3810 = vtanh.pop %v3660
  %v3811 = vtanh.pop %v3661
  %v3812 = vtanh.pop %v3662
  %v3813 = vtanh.pop %v3663
  %v3814 = vtanh.pop %v3664
  %v3815 = vtanh.pop %v3665
  %v3816 = vtanh.pop %v3666
  %v3817 = vtanh.pop %v3667
  %v3818 = vtanh.pop %v3668
  %v3819 = vtanh.pop %v3669
  %v3820 = vtanh.pop %v3670
  %v3821 = vtanh.pop %v3671
  %v3822 = vtanh.pop %v3672
  %v3823 = vtanh.pop %v3673
  %v3824 = vtanh.pop %v3674
  %v3825 = vtanh.pop %v3675
  %v3826 = vtanh.pop %v3676
  %v3827 = vtanh.pop %v3677
  %v3828 = vtanh.pop %v3678
  %v3829 = vtanh.pop %v3679
  %v3830 = vtanh.pop %v3680
  %v3831 = vtanh.pop %v3681
  %v3832 = vtanh.pop %v3682
  %v3833 = vtanh.pop %v3683
  %v3834 = vtanh.pop %v3684
  %v3835 = vtanh.pop %v3685
  %v3836 = vtanh.pop %v3686
  %v3837 = vtanh.pop %v3687
  %v3838 = vtanh.pop %v3688
  %v3839 = vtanh.pop %v3689
  %v3840 = vtanh.pop %v3690
  %v3841 = vtanh.pop %v3691
  %v3842 = vtanh.pop %v3692
  %v3843 = vtanh.pop %v3693
  %v3844 = vtanh.pop %v3694
  %v3845 = vtanh.pop %v3695
  %v3846 = vtanh.pop %v3696
  %v3847 = vtanh.pop %v3697
  %v3848 = vtanh.pop %v3698
  %v3849 = vtanh.pop %v3699
  %v3850 = vtanh.pop %v3700
  %v3851 = vtanh.pop %v3701
  %v3852 = vtanh.pop %v3702
  %v3853 = vtanh.pop %v3703
  %v3854 = vtanh.pop %v3704
  %v3855 = vtanh.pop %v3705
  %v3856 = vtanh.pop %v3706
  %v3857 = vtanh.pop %v3707
  %v3858 = vtanh.pop %v3708
  %v3859 = vtanh.pop %v3709
  %v3860 = vtanh.pop %v3710
  %v3861 = vtanh.pop %v3711
  %v3862 = vtanh.pop %v3712
  %v3863 = vtanh.pop %v3713
  %v3864 = vtanh.pop %v3714
  %v3865 = vtanh.pop %v3715
  %v3866 = vpack.c.bf16 %v3718, %v3716
  %v3867 = vpack.c.bf16 %v3719, %v3717
  %v3868 = vpack.c.bf16 %v3722, %v3720
  %v3869 = vpack.c.bf16 %v3723, %v3721
  %v3870 = vpack.c.bf16 %v3726, %v3724
  %v3871 = vpack.c.bf16 %v3727, %v3725
  %v3872 = vpack.c.bf16 %v3730, %v3728
  %v3873 = vpack.c.bf16 %v3731, %v3729
  %v3874 = vpack.c.bf16 %v3734, %v3732
  %v3875 = vpack.c.bf16 %v3735, %v3733
  %v3876 = vpack.c.bf16 %v3738, %v3736
  %v3877 = vpack.c.bf16 %v3739, %v3737
  %v3878 = vpack.c.bf16 %v3742, %v3740
  %v3879 = vpack.c.bf16 %v3743, %v3741
  %v3880 = vpack.c.bf16 %v3746, %v3744
  %v3881 = vpack.c.bf16 %v3747, %v3745
  %v3882 = vpack.c.bf16 %v3750, %v3748
  %v3883 = vpack.c.bf16 %v3751, %v3749
  %v3884 = vpack.c.bf16 %v3754, %v3752
  %v3885 = vpack.c.bf16 %v3755, %v3753
  %v3886 = vpack.c.bf16 %v3758, %v3756
  %v3887 = vpack.c.bf16 %v3759, %v3757
  %v3888 = vpack.c.bf16 %v3762, %v3760
  %v3889 = vpack.c.bf16 %v3763, %v3761
  %v3890 = vpack.c.bf16 %v3766, %v3764
  %v3891 = vpack.c.bf16 %v3767, %v3765
  %v3892 = vpack.c.bf16 %v3770, %v3768
  %v3893 = vpack.c.bf16 %v3771, %v3769
  %v3894 = vpack.c.bf16 %v3774, %v3772
  %v3895 = vpack.c.bf16 %v3775, %v3773
  %v3896 = vpack.c.bf16 %v3778, %v3776
  %v3897 = vpack.c.bf16 %v3779, %v3777
  %v3898 = vpack.c.bf16 %v3782, %v3780
  %v3899 = vpack.c.bf16 %v3783, %v3781
  %v3900 = vpack.c.bf16 %v3786, %v3784
  %v3901 = vpack.c.bf16 %v3787, %v3785
  %v3902 = vpack.c.bf16 %v3790, %v3788
  %v3903 = vpack.c.bf16 %v3791, %v3789
  %v3904 = vpack.c.bf16 %v3794, %v3792
  %v3905 = vpack.c.bf16 %v3795, %v3793
  %v3906 = vpack.c.bf16 %v3798, %v3796
  %v3907 = vpack.c.bf16 %v3799, %v3797
  %v3908 = vpack.c.bf16 %v3802, %v3800
  %v3909 = vpack.c.bf16 %v3803, %v3801
  %v3910 = vpack.c.bf16 %v3806, %v3804
  %v3911 = vpack.c.bf16 %v3807, %v3805
  %v3912 = vpack.c.bf16 %v3810, %v3808
  %v3913 = vpack.c.bf16 %v3811, %v3809
  %v3914 = vpack.c.bf16 %v3814, %v3812
  %v3915 = vpack.c.bf16 %v3815, %v3813
  %v3916 = vpack.c.bf16 %v3818, %v3816
  %v3917 = vpack.c.bf16 %v3819, %v3817
  %v3918 = vpack.c.bf16 %v3822, %v3820
  %v3919 = vpack.c.bf16 %v3823, %v3821
  %v3920 = vpack.c.bf16 %v3826, %v3824
  %v3921 = vpack.c.bf16 %v3827, %v3825
  %v3922 = vpack.c.bf16 %v3830, %v3828
  %v3923 = vpack.c.bf16 %v3831, %v3829
  %v3924 = vpack.c.bf16 %v3834, %v3832
  %v3925 = vpack.c.bf16 %v3835, %v3833
  %v3926 = vpack.c.bf16 %v3838, %v3836
  %v3927 = vpack.c.bf16 %v3839, %v3837
  %v3928 = vpack.c.bf16 %v3842, %v3840
  %v3929 = vpack.c.bf16 %v3843, %v3841
  %v3930 = vpack.c.bf16 %v3846, %v3844
  %v3931 = vpack.c.bf16 %v3847, %v3845
  %v3932 = vpack.c.bf16 %v3850, %v3848
  %v3933 = vpack.c.bf16 %v3851, %v3849
  %v3934 = vpack.c.bf16 %v3854, %v3852
  %v3935 = vpack.c.bf16 %v3855, %v3853
  %v3936 = vpack.c.bf16 %v3858, %v3856
  %v3937 = vpack.c.bf16 %v3859, %v3857
  %v3938 = vpack.c.bf16 %v3862, %v3860
  %v3939 = vpack.c.bf16 %v3863, %v3861
  %v3940 = vpack.c.bf16 %v3864, %v3864
  %v3941 = vpack.c.bf16 %v3865, %v3865
  %v3942 = vld [vmem:[%s7] sm:$0xff]
  %v3943 = vld [vmem:[%s7 + $0x8] sm:$0xff]
  %v3944 = vld [vmem:[%s7 + $0x10] sm:$0xff]
  %v3945 = vld [vmem:[%s7 + $0x18] sm:$0xff]
  %v3946 = vld [vmem:[%s7 + $0x20] sm:$0xff]
  %v3947 = vld [vmem:[%s7 + $0x28] sm:$0xff]
  %v3948 = vld [vmem:[%s7 + $0x30] sm:$0xff]
  %v3949 = vld [vmem:[%s7 + $0x38] sm:$0xff]
  %v3950 = vld [vmem:[%s7 + $0x40] sm:$0xff]
  %v3951 = vld [vmem:[%s7 + $0x48] sm:$0xff]
  %v3952 = vld [vmem:[%s7 + $0x50] sm:$0xff]
  %v3953 = vld [vmem:[%s7 + $0x58] sm:$0xff]
  %v3954 = vld [vmem:[%s7 + $0x60] sm:$0xff]
  %v3955 = vld [vmem:[%s7 + $0x68] sm:$0xff]
  %v3956 = vld [vmem:[%s7 + $0x70] sm:$0xff]
  %v3957 = vld [vmem:[%s7 + $0x78] sm:$0xff]
  %v3958 = vld [vmem:[%s7 + $0x80] sm:$0xff]
  %v3959 = vld [vmem:[%s7 + $0x88] sm:$0xff]
  %v3960 = vld [vmem:[%s7 + $0x90] sm:$0xff]
  %v3961 = vld [vmem:[%s7 + $0x98] sm:$0xff]
  %v3962 = vld [vmem:[%s7 + $0xa0] sm:$0xff]
  %v3963 = vld [vmem:[%s7 + $0xa8] sm:$0xff]
  %v3964 = vld [vmem:[%s7 + $0xb0] sm:$0xff]
  %v3965 = vld [vmem:[%s7 + $0xb8] sm:$0xff]
  %v3966 = vld [vmem:[%s7 + $0xc0] sm:$0xff]
  %v3967 = vld [vmem:[%s7 + $0xc8] sm:$0xff]
  %v3968 = vld [vmem:[%s7 + $0xd0] sm:$0xff]
  %v3969 = vld [vmem:[%s7 + $0xd8] sm:$0xff]
  %v3970 = vld [vmem:[%s7 + $0xe0] sm:$0xff]
  %v3971 = vld [vmem:[%s7 + $0xe8] sm:$0xff]
  %v3972 = vld [vmem:[%s7 + $0xf0] sm:$0xff]
  %v3973 = vld [vmem:[%s7 + $0xf8] sm:$0xff]
  %v3974 = vld [vmem:[%s8] sm:$0x3]
  %v3976 = vperm.slane %v3974, 0
  %v3977 = vperm.slane %v3974, 1
  %v4012 = vunpack.c.l.b16 %v3942
  %v4013 = vunpack.c.h.b16 %v3942
  %v4014 = vunpack.c.l.b16 %v3943
  %v4015 = vunpack.c.h.b16 %v3943
  %v4016 = vunpack.c.l.b16 %v3944
  %v4017 = vunpack.c.h.b16 %v3944
  %v4018 = vunpack.c.l.b16 %v3945
  %v4019 = vunpack.c.h.b16 %v3945
  %v4020 = vunpack.c.l.b16 %v3946
  %v4021 = vunpack.c.h.b16 %v3946
  %v4022 = vunpack.c.l.b16 %v3947
  %v4023 = vunpack.c.h.b16 %v3947
  %v4024 = vunpack.c.l.b16 %v3948
  %v4025 = vunpack.c.h.b16 %v3948
  %v4026 = vunpack.c.l.b16 %v3949
  %v4027 = vunpack.c.h.b16 %v3949
  %v4028 = vunpack.c.l.b16 %v3950
  %v4029 = vunpack.c.h.b16 %v3950
  %v4030 = vunpack.c.l.b16 %v3951
  %v4031 = vunpack.c.h.b16 %v3951
  %v4032 = vunpack.c.l.b16 %v3952
  %v4033 = vunpack.c.h.b16 %v3952
  %v4034 = vunpack.c.l.b16 %v3953
  %v4035 = vunpack.c.h.b16 %v3953
  %v4036 = vunpack.c.l.b16 %v3954
  %v4037 = vunpack.c.h.b16 %v3954
  %v4038 = vunpack.c.l.b16 %v3955
  %v4039 = vunpack.c.h.b16 %v3955
  %v4040 = vunpack.c.l.b16 %v3956
  %v4041 = vunpack.c.h.b16 %v3956
  %v4042 = vunpack.c.l.b16 %v3957
  %v4043 = vunpack.c.h.b16 %v3957
  %v4044 = vunpack.c.l.b16 %v3958
  %v4045 = vunpack.c.h.b16 %v3958
  %v4046 = vunpack.c.l.b16 %v3959
  %v4047 = vunpack.c.h.b16 %v3959
  %v4048 = vunpack.c.l.b16 %v3960
  %v4049 = vunpack.c.h.b16 %v3960
  %v4050 = vunpack.c.l.b16 %v3961
  %v4051 = vunpack.c.h.b16 %v3961
  %v4052 = vunpack.c.l.b16 %v3962
  %v4053 = vunpack.c.h.b16 %v3962
  %v4054 = vunpack.c.l.b16 %v3963
  %v4055 = vunpack.c.h.b16 %v3963
  %v4056 = vunpack.c.l.b16 %v3964
  %v4057 = vunpack.c.h.b16 %v3964
  %v4058 = vunpack.c.l.b16 %v3965
  %v4059 = vunpack.c.h.b16 %v3965
  %v4060 = vunpack.c.l.b16 %v3966
  %v4061 = vunpack.c.h.b16 %v3966
  %v4062 = vunpack.c.l.b16 %v3967
  %v4063 = vunpack.c.h.b16 %v3967
  %v4064 = vunpack.c.l.b16 %v3968
  %v4065 = vunpack.c.h.b16 %v3968
  %v4066 = vunpack.c.l.b16 %v3969
  %v4067 = vunpack.c.h.b16 %v3969
  %v4068 = vunpack.c.l.b16 %v3970
  %v4069 = vunpack.c.h.b16 %v3970
  %v4070 = vunpack.c.l.b16 %v3971
  %v4071 = vunpack.c.h.b16 %v3971
  %v4072 = vunpack.c.l.b16 %v3972
  %v4073 = vunpack.c.h.b16 %v3972
  %v4074 = vunpack.c.l.b16 %v3973
  %v4075 = vunpack.c.h.b16 %v3973
  %v4076 = vpack.c.b16 %v4014, %v4012
  %v4077 = vpack.c.b16 %v4015, %v4013
  %v4078 = vpack.c.b16 %v4018, %v4016
  %v4079 = vpack.c.b16 %v4019, %v4017
  %v4080 = vpack.c.b16 %v4022, %v4020
  %v4081 = vpack.c.b16 %v4023, %v4021
  %v4082 = vpack.c.b16 %v4026, %v4024
  %v4083 = vpack.c.b16 %v4027, %v4025
  %v4084 = vpack.c.b16 %v4030, %v4028
  %v4085 = vpack.c.b16 %v4031, %v4029
  %v4086 = vpack.c.b16 %v4034, %v4032
  %v4087 = vpack.c.b16 %v4035, %v4033
  %v4088 = vpack.c.b16 %v4038, %v4036
  %v4089 = vpack.c.b16 %v4039, %v4037
  %v4090 = vpack.c.b16 %v4042, %v4040
  %v4091 = vpack.c.b16 %v4043, %v4041
  %v4092 = vpack.c.b16 %v4046, %v4044
  %v4093 = vpack.c.b16 %v4047, %v4045
  %v4094 = vpack.c.b16 %v4050, %v4048
  %v4095 = vpack.c.b16 %v4051, %v4049
  %v4096 = vpack.c.b16 %v4054, %v4052
  %v4097 = vpack.c.b16 %v4055, %v4053
  %v4098 = vpack.c.b16 %v4058, %v4056
  %v4099 = vpack.c.b16 %v4059, %v4057
  %v4100 = vpack.c.b16 %v4062, %v4060
  %v4101 = vpack.c.b16 %v4063, %v4061
  %v4102 = vpack.c.b16 %v4066, %v4064
  %v4103 = vpack.c.b16 %v4067, %v4065
  %v4104 = vpack.c.b16 %v4070, %v4068
  %v4105 = vpack.c.b16 %v4071, %v4069
  %v4106 = vpack.c.b16 %v4074, %v4072
  %v4107 = vpack.c.b16 %v4075, %v4073
  %4140 = vmatpush.bf16.msra.mxu0 %v4090
  %4141 = vmatpush.bf16.msra.mxu0 %v4088
  %4142 = vmatpush.bf16.msra.mxu0 %v4086
  %4143 = vmatpush.bf16.msra.mxu0 %v4084
  %4144 = vmatpush.bf16.msra.mxu0 %v4082
  %4145 = vmatpush.bf16.msra.mxu0 %v4080
  %4146 = vmatpush.bf16.msra.mxu0 %v4078
  %4147 = vmatpush.bf16.msra.mxu0 %v4076
  %4148 = vmatmul.bf16.gmra.mxu0 %v3866
  %v4149 = vpop.f32.mrf.mxu0
  %v4150 = vadd.f32 %v3976, %v4149
  %v4151 = vpop.f32.mrf.mxu0
  %v4152 = vadd.f32 %v3976, %v4151
  %4153 = vmatmul.bf16.gmra.mxu0 %v3868
  %v4154 = vpop.f32.mrf.mxu0
  %v4155 = vadd.f32 %v3976, %v4154
  %v4156 = vpop.f32.mrf.mxu0
  %v4157 = vadd.f32 %v3976, %v4156
  %4158 = vmatmul.bf16.gmra.mxu0 %v3870
  %v4159 = vpop.f32.mrf.mxu0
  %v4160 = vadd.f32 %v3976, %v4159
  %v4161 = vpop.f32.mrf.mxu0
  %v4162 = vadd.f32 %v3976, %v4161
  %4163 = vmatmul.bf16.gmra.mxu0 %v3872
  %v4164 = vpop.f32.mrf.mxu0
  %v4165 = vadd.f32 %v3976, %v4164
  %v4166 = vpop.f32.mrf.mxu0
  %v4167 = vadd.f32 %v3976, %v4166
  %4168 = vmatmul.bf16.gmra.mxu0 %v3874
  %v4169 = vpop.f32.mrf.mxu0
  %v4170 = vadd.f32 %v3976, %v4169
  %v4171 = vpop.f32.mrf.mxu0
  %v4172 = vadd.f32 %v3976, %v4171
  %4173 = vmatmul.bf16.gmra.mxu0 %v3876
  %v4174 = vpop.f32.mrf.mxu0
  %v4175 = vadd.f32 %v3976, %v4174
  %v4176 = vpop.f32.mrf.mxu0
  %v4177 = vadd.f32 %v3976, %v4176
  %4178 = vmatmul.bf16.gmra.mxu0 %v3878
  %v4179 = vpop.f32.mrf.mxu0
  %v4180 = vadd.f32 %v3976, %v4179
  %v4181 = vpop.f32.mrf.mxu0
  %v4182 = vadd.f32 %v3976, %v4181
  %4183 = vmatmul.bf16.gmra.mxu0 %v3880
  %v4184 = vpop.f32.mrf.mxu0
  %v4185 = vadd.f32 %v3976, %v4184
  %v4186 = vpop.f32.mrf.mxu0
  %v4187 = vadd.f32 %v3976, %v4186
  %4188 = vmatmul.bf16.gmra.mxu0 %v3882
  %v4189 = vpop.f32.mrf.mxu0
  %v4190 = vadd.f32 %v3976, %v4189
  %v4191 = vpop.f32.mrf.mxu0
  %v4192 = vadd.f32 %v3976, %v4191
  %4193 = vmatmul.bf16.gmra.mxu0 %v3884
  %v4194 = vpop.f32.mrf.mxu0
  %v4195 = vadd.f32 %v3976, %v4194
  %v4196 = vpop.f32.mrf.mxu0
  %v4197 = vadd.f32 %v3976, %v4196
  %4198 = vmatmul.bf16.gmra.mxu0 %v3886
  %v4199 = vpop.f32.mrf.mxu0
  %v4200 = vadd.f32 %v3976, %v4199
  %v4201 = vpop.f32.mrf.mxu0
  %v4202 = vadd.f32 %v3976, %v4201
  %4203 = vmatmul.bf16.gmra.mxu0 %v3888
  %v4204 = vpop.f32.mrf.mxu0
  %v4205 = vadd.f32 %v3976, %v4204
  %v4206 = vpop.f32.mrf.mxu0
  %v4207 = vadd.f32 %v3976, %v4206
  %4208 = vmatmul.bf16.gmra.mxu0 %v3890
  %v4209 = vpop.f32.mrf.mxu0
  %v4210 = vadd.f32 %v3976, %v4209
  %v4211 = vpop.f32.mrf.mxu0
  %v4212 = vadd.f32 %v3976, %v4211
  %4213 = vmatmul.bf16.gmra.mxu0 %v3892
  %v4214 = vpop.f32.mrf.mxu0
  %v4215 = vadd.f32 %v3976, %v4214
  %v4216 = vpop.f32.mrf.mxu0
  %v4217 = vadd.f32 %v3976, %v4216
  %4218 = vmatmul.bf16.gmra.mxu0 %v3894
  %v4219 = vpop.f32.mrf.mxu0
  %v4220 = vadd.f32 %v3976, %v4219
  %v4221 = vpop.f32.mrf.mxu0
  %v4222 = vadd.f32 %v3976, %v4221
  %4223 = vmatmul.bf16.gmra.mxu0 %v3896
  %v4224 = vpop.f32.mrf.mxu0
  %v4225 = vadd.f32 %v3976, %v4224
  %v4226 = vpop.f32.mrf.mxu0
  %v4227 = vadd.f32 %v3976, %v4226
  %4228 = vmatmul.bf16.gmra.mxu0 %v3898
  %v4229 = vpop.f32.mrf.mxu0
  %v4230 = vadd.f32 %v3976, %v4229
  %v4231 = vpop.f32.mrf.mxu0
  %v4232 = vadd.f32 %v3976, %v4231
  %4233 = vmatmul.bf16.gmra.mxu0 %v3900
  %v4234 = vpop.f32.mrf.mxu0
  %v4235 = vadd.f32 %v3976, %v4234
  %v4236 = vpop.f32.mrf.mxu0
  %v4237 = vadd.f32 %v3976, %v4236
  %4238 = vmatmul.bf16.gmra.mxu0 %v3902
  %v4239 = vpop.f32.mrf.mxu0
  %v4240 = vadd.f32 %v3976, %v4239
  %v4241 = vpop.f32.mrf.mxu0
  %v4242 = vadd.f32 %v3976, %v4241
  %4243 = vmatmul.bf16.gmra.mxu0 %v3904
  %v4244 = vpop.f32.mrf.mxu0
  %v4245 = vadd.f32 %v3976, %v4244
  %v4246 = vpop.f32.mrf.mxu0
  %v4247 = vadd.f32 %v3976, %v4246
  %4248 = vmatmul.bf16.gmra.mxu0 %v3906
  %v4249 = vpop.f32.mrf.mxu0
  %v4250 = vadd.f32 %v3976, %v4249
  %v4251 = vpop.f32.mrf.mxu0
  %v4252 = vadd.f32 %v3976, %v4251
  %4253 = vmatmul.bf16.gmra.mxu0 %v3908
  %v4254 = vpop.f32.mrf.mxu0
  %v4255 = vadd.f32 %v3976, %v4254
  %v4256 = vpop.f32.mrf.mxu0
  %v4257 = vadd.f32 %v3976, %v4256
  %4258 = vmatmul.bf16.gmra.mxu0 %v3910
  %v4259 = vpop.f32.mrf.mxu0
  %v4260 = vadd.f32 %v3976, %v4259
  %v4261 = vpop.f32.mrf.mxu0
  %v4262 = vadd.f32 %v3976, %v4261
  %4263 = vmatmul.bf16.gmra.mxu0 %v3912
  %v4264 = vpop.f32.mrf.mxu0
  %v4265 = vadd.f32 %v3976, %v4264
  %v4266 = vpop.f32.mrf.mxu0
  %v4267 = vadd.f32 %v3976, %v4266
  %4268 = vmatmul.bf16.gmra.mxu0 %v3914
  %v4269 = vpop.f32.mrf.mxu0
  %v4270 = vadd.f32 %v3976, %v4269
  %v4271 = vpop.f32.mrf.mxu0
  %v4272 = vadd.f32 %v3976, %v4271
  %4273 = vmatmul.bf16.gmra.mxu0 %v3916
  %v4274 = vpop.f32.mrf.mxu0
  %v4275 = vadd.f32 %v3976, %v4274
  %v4276 = vpop.f32.mrf.mxu0
  %v4277 = vadd.f32 %v3976, %v4276
  %4278 = vmatmul.bf16.gmra.mxu0 %v3918
  %v4279 = vpop.f32.mrf.mxu0
  %v4280 = vadd.f32 %v3976, %v4279
  %v4281 = vpop.f32.mrf.mxu0
  %v4282 = vadd.f32 %v3976, %v4281
  %4283 = vmatmul.bf16.gmra.mxu0 %v3920
  %v4284 = vpop.f32.mrf.mxu0
  %v4285 = vadd.f32 %v3976, %v4284
  %v4286 = vpop.f32.mrf.mxu0
  %v4287 = vadd.f32 %v3976, %v4286
  %4288 = vmatmul.bf16.gmra.mxu0 %v3922
  %v4289 = vpop.f32.mrf.mxu0
  %v4290 = vadd.f32 %v3976, %v4289
  %v4291 = vpop.f32.mrf.mxu0
  %v4292 = vadd.f32 %v3976, %v4291
  %4293 = vmatmul.bf16.gmra.mxu0 %v3924
  %v4294 = vpop.f32.mrf.mxu0
  %v4295 = vadd.f32 %v3976, %v4294
  %v4296 = vpop.f32.mrf.mxu0
  %v4297 = vadd.f32 %v3976, %v4296
  %4298 = vmatmul.bf16.gmra.mxu0 %v3926
  %v4299 = vpop.f32.mrf.mxu0
  %v4300 = vadd.f32 %v3976, %v4299
  %v4301 = vpop.f32.mrf.mxu0
  %v4302 = vadd.f32 %v3976, %v4301
  %4303 = vmatmul.bf16.gmra.mxu0 %v3928
  %v4304 = vpop.f32.mrf.mxu0
  %v4305 = vadd.f32 %v3976, %v4304
  %v4306 = vpop.f32.mrf.mxu0
  %v4307 = vadd.f32 %v3976, %v4306
  %4308 = vmatmul.bf16.gmra.mxu0 %v3930
  %v4309 = vpop.f32.mrf.mxu0
  %v4310 = vadd.f32 %v3976, %v4309
  %v4311 = vpop.f32.mrf.mxu0
  %v4312 = vadd.f32 %v3976, %v4311
  %4313 = vmatmul.bf16.gmra.mxu0 %v3932
  %v4314 = vpop.f32.mrf.mxu0
  %v4315 = vadd.f32 %v3976, %v4314
  %v4316 = vpop.f32.mrf.mxu0
  %v4317 = vadd.f32 %v3976, %v4316
  %4318 = vmatmul.bf16.gmra.mxu0 %v3934
  %v4319 = vpop.f32.mrf.mxu0
  %v4320 = vadd.f32 %v3976, %v4319
  %v4321 = vpop.f32.mrf.mxu0
  %v4322 = vadd.f32 %v3976, %v4321
  %4323 = vmatmul.bf16.gmra.mxu0 %v3936
  %v4324 = vpop.f32.mrf.mxu0
  %v4325 = vadd.f32 %v3976, %v4324
  %v4326 = vpop.f32.mrf.mxu0
  %v4327 = vadd.f32 %v3976, %v4326
  %4328 = vmatmul.bf16.gmra.mxu0 %v3938
  %v4329 = vpop.f32.mrf.mxu0
  %v4330 = vadd.f32 %v3976, %v4329
  %v4331 = vpop.f32.mrf.mxu0
  %v4332 = vadd.f32 %v3976, %v4331
  %4333 = vmatmul.bf16.gmra.mxu0 %v3940
  %v4334 = vpop.f32.mrf.mxu0
  %v4335 = vadd.f32 %v3976, %v4334
  %v4336 = vpop.f32.mrf.mxu0
  %4337 = vdwg.mxu0
  %4338 = vmatpush.bf16.msra.mxu0 %v4106
  %4339 = vmatpush.bf16.msra.mxu0 %v4104
  %4340 = vmatpush.bf16.msra.mxu0 %v4102
  %4341 = vmatpush.bf16.msra.mxu0 %v4100
  %4342 = vmatpush.bf16.msra.mxu0 %v4098
  %4343 = vmatpush.bf16.msra.mxu0 %v4096
  %4344 = vmatpush.bf16.msra.mxu0 %v4094
  %4345 = vmatpush.bf16.msra.mxu0 %v4092
  %4346 = vmatmul.bf16.gmra.mxu0 %v3867
  %v4347 = vpop.f32.mrf.mxu0
  %v4348 = vadd.f32 %v4150, %v4347
  %v4349 = vpop.f32.mrf.mxu0
  %v4350 = vadd.f32 %v4152, %v4349
  %4351 = vmatmul.bf16.gmra.mxu0 %v3869
  %v4352 = vpop.f32.mrf.mxu0
  %v4353 = vadd.f32 %v4155, %v4352
  %v4354 = vpop.f32.mrf.mxu0
  %v4355 = vadd.f32 %v4157, %v4354
  %4356 = vmatmul.bf16.gmra.mxu0 %v3871
  %v4357 = vpop.f32.mrf.mxu0
  %v4358 = vadd.f32 %v4160, %v4357
  %v4359 = vpop.f32.mrf.mxu0
  %v4360 = vadd.f32 %v4162, %v4359
  %4361 = vmatmul.bf16.gmra.mxu0 %v3873
  %v4362 = vpop.f32.mrf.mxu0
  %v4363 = vadd.f32 %v4165, %v4362
  %v4364 = vpop.f32.mrf.mxu0
  %v4365 = vadd.f32 %v4167, %v4364
  %4366 = vmatmul.bf16.gmra.mxu0 %v3875
  %v4367 = vpop.f32.mrf.mxu0
  %v4368 = vadd.f32 %v4170, %v4367
  %v4369 = vpop.f32.mrf.mxu0
  %v4370 = vadd.f32 %v4172, %v4369
  %4371 = vmatmul.bf16.gmra.mxu0 %v3877
  %v4372 = vpop.f32.mrf.mxu0
  %v4373 = vadd.f32 %v4175, %v4372
  %v4374 = vpop.f32.mrf.mxu0
  %v4375 = vadd.f32 %v4177, %v4374
  %4376 = vmatmul.bf16.gmra.mxu0 %v3879
  %v4377 = vpop.f32.mrf.mxu0
  %v4378 = vadd.f32 %v4180, %v4377
  %v4379 = vpop.f32.mrf.mxu0
  %v4380 = vadd.f32 %v4182, %v4379
  %4381 = vmatmul.bf16.gmra.mxu0 %v3881
  %v4382 = vpop.f32.mrf.mxu0
  %v4383 = vadd.f32 %v4185, %v4382
  %v4384 = vpop.f32.mrf.mxu0
  %v4385 = vadd.f32 %v4187, %v4384
  %4386 = vmatmul.bf16.gmra.mxu0 %v3883
  %v4387 = vpop.f32.mrf.mxu0
  %v4388 = vadd.f32 %v4190, %v4387
  %v4389 = vpop.f32.mrf.mxu0
  %v4390 = vadd.f32 %v4192, %v4389
  %4391 = vmatmul.bf16.gmra.mxu0 %v3885
  %v4392 = vpop.f32.mrf.mxu0
  %v4393 = vadd.f32 %v4195, %v4392
  %v4394 = vpop.f32.mrf.mxu0
  %v4395 = vadd.f32 %v4197, %v4394
  %4396 = vmatmul.bf16.gmra.mxu0 %v3887
  %v4397 = vpop.f32.mrf.mxu0
  %v4398 = vadd.f32 %v4200, %v4397
  %v4399 = vpop.f32.mrf.mxu0
  %v4400 = vadd.f32 %v4202, %v4399
  %4401 = vmatmul.bf16.gmra.mxu0 %v3889
  %v4402 = vpop.f32.mrf.mxu0
  %v4403 = vadd.f32 %v4205, %v4402
  %v4404 = vpop.f32.mrf.mxu0
  %v4405 = vadd.f32 %v4207, %v4404
  %4406 = vmatmul.bf16.gmra.mxu0 %v3891
  %v4407 = vpop.f32.mrf.mxu0
  %v4408 = vadd.f32 %v4210, %v4407
  %v4409 = vpop.f32.mrf.mxu0
  %v4410 = vadd.f32 %v4212, %v4409
  %4411 = vmatmul.bf16.gmra.mxu0 %v3893
  %v4412 = vpop.f32.mrf.mxu0
  %v4413 = vadd.f32 %v4215, %v4412
  %v4414 = vpop.f32.mrf.mxu0
  %v4415 = vadd.f32 %v4217, %v4414
  %4416 = vmatmul.bf16.gmra.mxu0 %v3895
  %v4417 = vpop.f32.mrf.mxu0
  %v4418 = vadd.f32 %v4220, %v4417
  %v4419 = vpop.f32.mrf.mxu0
  %v4420 = vadd.f32 %v4222, %v4419
  %4421 = vmatmul.bf16.gmra.mxu0 %v3897
  %v4422 = vpop.f32.mrf.mxu0
  %v4423 = vadd.f32 %v4225, %v4422
  %v4424 = vpop.f32.mrf.mxu0
  %v4425 = vadd.f32 %v4227, %v4424
  %4426 = vmatmul.bf16.gmra.mxu0 %v3899
  %v4427 = vpop.f32.mrf.mxu0
  %v4428 = vadd.f32 %v4230, %v4427
  %v4429 = vpop.f32.mrf.mxu0
  %v4430 = vadd.f32 %v4232, %v4429
  %4431 = vmatmul.bf16.gmra.mxu0 %v3901
  %v4432 = vpop.f32.mrf.mxu0
  %v4433 = vadd.f32 %v4235, %v4432
  %v4434 = vpop.f32.mrf.mxu0
  %v4435 = vadd.f32 %v4237, %v4434
  %4436 = vmatmul.bf16.gmra.mxu0 %v3903
  %v4437 = vpop.f32.mrf.mxu0
  %v4438 = vadd.f32 %v4240, %v4437
  %v4439 = vpop.f32.mrf.mxu0
  %v4440 = vadd.f32 %v4242, %v4439
  %4441 = vmatmul.bf16.gmra.mxu0 %v3905
  %v4442 = vpop.f32.mrf.mxu0
  %v4443 = vadd.f32 %v4245, %v4442
  %v4444 = vpop.f32.mrf.mxu0
  %v4445 = vadd.f32 %v4247, %v4444
  %4446 = vmatmul.bf16.gmra.mxu0 %v3907
  %v4447 = vpop.f32.mrf.mxu0
  %v4448 = vadd.f32 %v4250, %v4447
  %v4449 = vpop.f32.mrf.mxu0
  %v4450 = vadd.f32 %v4252, %v4449
  %4451 = vmatmul.bf16.gmra.mxu0 %v3909
  %v4452 = vpop.f32.mrf.mxu0
  %v4453 = vadd.f32 %v4255, %v4452
  %v4454 = vpop.f32.mrf.mxu0
  %v4455 = vadd.f32 %v4257, %v4454
  %4456 = vmatmul.bf16.gmra.mxu0 %v3911
  %v4457 = vpop.f32.mrf.mxu0
  %v4458 = vadd.f32 %v4260, %v4457
  %v4459 = vpop.f32.mrf.mxu0
  %v4460 = vadd.f32 %v4262, %v4459
  %4461 = vmatmul.bf16.gmra.mxu0 %v3913
  %v4462 = vpop.f32.mrf.mxu0
  %v4463 = vadd.f32 %v4265, %v4462
  %v4464 = vpop.f32.mrf.mxu0
  %v4465 = vadd.f32 %v4267, %v4464
  %4466 = vmatmul.bf16.gmra.mxu0 %v3915
  %v4467 = vpop.f32.mrf.mxu0
  %v4468 = vadd.f32 %v4270, %v4467
  %v4469 = vpop.f32.mrf.mxu0
  %v4470 = vadd.f32 %v4272, %v4469
  %4471 = vmatmul.bf16.gmra.mxu0 %v3917
  %v4472 = vpop.f32.mrf.mxu0
  %v4473 = vadd.f32 %v4275, %v4472
  %v4474 = vpop.f32.mrf.mxu0
  %v4475 = vadd.f32 %v4277, %v4474
  %4476 = vmatmul.bf16.gmra.mxu0 %v3919
  %v4477 = vpop.f32.mrf.mxu0
  %v4478 = vadd.f32 %v4280, %v4477
  %v4479 = vpop.f32.mrf.mxu0
  %v4480 = vadd.f32 %v4282, %v4479
  %4481 = vmatmul.bf16.gmra.mxu0 %v3921
  %v4482 = vpop.f32.mrf.mxu0
  %v4483 = vadd.f32 %v4285, %v4482
  %v4484 = vpop.f32.mrf.mxu0
  %v4485 = vadd.f32 %v4287, %v4484
  %4486 = vmatmul.bf16.gmra.mxu0 %v3923
  %v4487 = vpop.f32.mrf.mxu0
  %v4488 = vadd.f32 %v4290, %v4487
  %v4489 = vpop.f32.mrf.mxu0
  %v4490 = vadd.f32 %v4292, %v4489
  %4491 = vmatmul.bf16.gmra.mxu0 %v3925
  %v4492 = vpop.f32.mrf.mxu0
  %v4493 = vadd.f32 %v4295, %v4492
  %v4494 = vpop.f32.mrf.mxu0
  %v4495 = vadd.f32 %v4297, %v4494
  %4496 = vmatmul.bf16.gmra.mxu0 %v3927
  %v4497 = vpop.f32.mrf.mxu0
  %v4498 = vadd.f32 %v4300, %v4497
  %v4499 = vpop.f32.mrf.mxu0
  %v4500 = vadd.f32 %v4302, %v4499
  %4501 = vmatmul.bf16.gmra.mxu0 %v3929
  %v4502 = vpop.f32.mrf.mxu0
  %v4503 = vadd.f32 %v4305, %v4502
  %v4504 = vpop.f32.mrf.mxu0
  %v4505 = vadd.f32 %v4307, %v4504
  %4506 = vmatmul.bf16.gmra.mxu0 %v3931
  %v4507 = vpop.f32.mrf.mxu0
  %v4508 = vadd.f32 %v4310, %v4507
  %v4509 = vpop.f32.mrf.mxu0
  %v4510 = vadd.f32 %v4312, %v4509
  %4511 = vmatmul.bf16.gmra.mxu0 %v3933
  %v4512 = vpop.f32.mrf.mxu0
  %v4513 = vadd.f32 %v4315, %v4512
  %v4514 = vpop.f32.mrf.mxu0
  %v4515 = vadd.f32 %v4317, %v4514
  %4516 = vmatmul.bf16.gmra.mxu0 %v3935
  %v4517 = vpop.f32.mrf.mxu0
  %v4518 = vadd.f32 %v4320, %v4517
  %v4519 = vpop.f32.mrf.mxu0
  %v4520 = vadd.f32 %v4322, %v4519
  %4521 = vmatmul.bf16.gmra.mxu0 %v3937
  %v4522 = vpop.f32.mrf.mxu0
  %v4523 = vadd.f32 %v4325, %v4522
  %v4524 = vpop.f32.mrf.mxu0
  %v4525 = vadd.f32 %v4327, %v4524
  %4526 = vmatmul.bf16.gmra.mxu0 %v3939
  %v4527 = vpop.f32.mrf.mxu0
  %v4528 = vadd.f32 %v4330, %v4527
  %v4529 = vpop.f32.mrf.mxu0
  %v4530 = vadd.f32 %v4332, %v4529
  %4531 = vmatmul.bf16.gmra.mxu0 %v3941
  %v4532 = vpop.f32.mrf.mxu0
  %v4533 = vadd.f32 %v4335, %v4532
  %v4534 = vpop.f32.mrf.mxu0
  %4535 = vdwg.mxu0
  %4536 = vmatpush.bf16.msra.mxu0 %v4091
  %4537 = vmatpush.bf16.msra.mxu0 %v4089
  %4538 = vmatpush.bf16.msra.mxu0 %v4087
  %4539 = vmatpush.bf16.msra.mxu0 %v4085
  %4540 = vmatpush.bf16.msra.mxu0 %v4083
  %4541 = vmatpush.bf16.msra.mxu0 %v4081
  %4542 = vmatpush.bf16.msra.mxu0 %v4079
  %4543 = vmatpush.bf16.msra.mxu0 %v4077
  %4544 = vmatmul.bf16.gmra.mxu0 %v3866
  %v4545 = vpop.f32.mrf.mxu0
  %v4546 = vadd.f32 %v3977, %v4545
  %v4547 = vpop.f32.mrf.mxu0
  %v4548 = vadd.f32 %v3977, %v4547
  %4549 = vmatmul.bf16.gmra.mxu0 %v3868
  %v4550 = vpop.f32.mrf.mxu0
  %v4551 = vadd.f32 %v3977, %v4550
  %v4552 = vpop.f32.mrf.mxu0
  %v4553 = vadd.f32 %v3977, %v4552
  %4554 = vmatmul.bf16.gmra.mxu0 %v3870
  %v4555 = vpop.f32.mrf.mxu0
  %v4556 = vadd.f32 %v3977, %v4555
  %v4557 = vpop.f32.mrf.mxu0
  %v4558 = vadd.f32 %v3977, %v4557
  %4559 = vmatmul.bf16.gmra.mxu0 %v3872
  %v4560 = vpop.f32.mrf.mxu0
  %v4561 = vadd.f32 %v3977, %v4560
  %v4562 = vpop.f32.mrf.mxu0
  %v4563 = vadd.f32 %v3977, %v4562
  %4564 = vmatmul.bf16.gmra.mxu0 %v3874
  %v4565 = vpop.f32.mrf.mxu0
  %v4566 = vadd.f32 %v3977, %v4565
  %v4567 = vpop.f32.mrf.mxu0
  %v4568 = vadd.f32 %v3977, %v4567
  %4569 = vmatmul.bf16.gmra.mxu0 %v3876
  %v4570 = vpop.f32.mrf.mxu0
  %v4571 = vadd.f32 %v3977, %v4570
  %v4572 = vpop.f32.mrf.mxu0
  %v4573 = vadd.f32 %v3977, %v4572
  %4574 = vmatmul.bf16.gmra.mxu0 %v3878
  %v4575 = vpop.f32.mrf.mxu0
  %v4576 = vadd.f32 %v3977, %v4575
  %v4577 = vpop.f32.mrf.mxu0
  %v4578 = vadd.f32 %v3977, %v4577
  %4579 = vmatmul.bf16.gmra.mxu0 %v3880
  %v4580 = vpop.f32.mrf.mxu0
  %v4581 = vadd.f32 %v3977, %v4580
  %v4582 = vpop.f32.mrf.mxu0
  %v4583 = vadd.f32 %v3977, %v4582
  %4584 = vmatmul.bf16.gmra.mxu0 %v3882
  %v4585 = vpop.f32.mrf.mxu0
  %v4586 = vadd.f32 %v3977, %v4585
  %v4587 = vpop.f32.mrf.mxu0
  %v4588 = vadd.f32 %v3977, %v4587
  %4589 = vmatmul.bf16.gmra.mxu0 %v3884
  %v4590 = vpop.f32.mrf.mxu0
  %v4591 = vadd.f32 %v3977, %v4590
  %v4592 = vpop.f32.mrf.mxu0
  %v4593 = vadd.f32 %v3977, %v4592
  %4594 = vmatmul.bf16.gmra.mxu0 %v3886
  %v4595 = vpop.f32.mrf.mxu0
  %v4596 = vadd.f32 %v3977, %v4595
  %v4597 = vpop.f32.mrf.mxu0
  %v4598 = vadd.f32 %v3977, %v4597
  %4599 = vmatmul.bf16.gmra.mxu0 %v3888
  %v4600 = vpop.f32.mrf.mxu0
  %v4601 = vadd.f32 %v3977, %v4600
  %v4602 = vpop.f32.mrf.mxu0
  %v4603 = vadd.f32 %v3977, %v4602
  %4604 = vmatmul.bf16.gmra.mxu0 %v3890
  %v4605 = vpop.f32.mrf.mxu0
  %v4606 = vadd.f32 %v3977, %v4605
  %v4607 = vpop.f32.mrf.mxu0
  %v4608 = vadd.f32 %v3977, %v4607
  %4609 = vmatmul.bf16.gmra.mxu0 %v3892
  %v4610 = vpop.f32.mrf.mxu0
  %v4611 = vadd.f32 %v3977, %v4610
  %v4612 = vpop.f32.mrf.mxu0
  %v4613 = vadd.f32 %v3977, %v4612
  %4614 = vmatmul.bf16.gmra.mxu0 %v3894
  %v4615 = vpop.f32.mrf.mxu0
  %v4616 = vadd.f32 %v3977, %v4615
  %v4617 = vpop.f32.mrf.mxu0
  %v4618 = vadd.f32 %v3977, %v4617
  %4619 = vmatmul.bf16.gmra.mxu0 %v3896
  %v4620 = vpop.f32.mrf.mxu0
  %v4621 = vadd.f32 %v3977, %v4620
  %v4622 = vpop.f32.mrf.mxu0
  %v4623 = vadd.f32 %v3977, %v4622
  %4624 = vmatmul.bf16.gmra.mxu0 %v3898
  %v4625 = vpop.f32.mrf.mxu0
  %v4626 = vadd.f32 %v3977, %v4625
  %v4627 = vpop.f32.mrf.mxu0
  %v4628 = vadd.f32 %v3977, %v4627
  %4629 = vmatmul.bf16.gmra.mxu0 %v3900
  %v4630 = vpop.f32.mrf.mxu0
  %v4631 = vadd.f32 %v3977, %v4630
  %v4632 = vpop.f32.mrf.mxu0
  %v4633 = vadd.f32 %v3977, %v4632
  %4634 = vmatmul.bf16.gmra.mxu0 %v3902
  %v4635 = vpop.f32.mrf.mxu0
  %v4636 = vadd.f32 %v3977, %v4635
  %v4637 = vpop.f32.mrf.mxu0
  %v4638 = vadd.f32 %v3977, %v4637
  %4639 = vmatmul.bf16.gmra.mxu0 %v3904
  %v4640 = vpop.f32.mrf.mxu0
  %v4641 = vadd.f32 %v3977, %v4640
  %v4642 = vpop.f32.mrf.mxu0
  %v4643 = vadd.f32 %v3977, %v4642
  %4644 = vmatmul.bf16.gmra.mxu0 %v3906
  %v4645 = vpop.f32.mrf.mxu0
  %v4646 = vadd.f32 %v3977, %v4645
  %v4647 = vpop.f32.mrf.mxu0
  %v4648 = vadd.f32 %v3977, %v4647
  %4649 = vmatmul.bf16.gmra.mxu0 %v3908
  %v4650 = vpop.f32.mrf.mxu0
  %v4651 = vadd.f32 %v3977, %v4650
  %v4652 = vpop.f32.mrf.mxu0
  %v4653 = vadd.f32 %v3977, %v4652
  %4654 = vmatmul.bf16.gmra.mxu0 %v3910
  %v4655 = vpop.f32.mrf.mxu0
  %v4656 = vadd.f32 %v3977, %v4655
  %v4657 = vpop.f32.mrf.mxu0
  %v4658 = vadd.f32 %v3977, %v4657
  %4659 = vmatmul.bf16.gmra.mxu0 %v3912
  %v4660 = vpop.f32.mrf.mxu0
  %v4661 = vadd.f32 %v3977, %v4660
  %v4662 = vpop.f32.mrf.mxu0
  %v4663 = vadd.f32 %v3977, %v4662
  %4664 = vmatmul.bf16.gmra.mxu0 %v3914
  %v4665 = vpop.f32.mrf.mxu0
  %v4666 = vadd.f32 %v3977, %v4665
  %v4667 = vpop.f32.mrf.mxu0
  %v4668 = vadd.f32 %v3977, %v4667
  %4669 = vmatmul.bf16.gmra.mxu0 %v3916
  %v4670 = vpop.f32.mrf.mxu0
  %v4671 = vadd.f32 %v3977, %v4670
  %v4672 = vpop.f32.mrf.mxu0
  %v4673 = vadd.f32 %v3977, %v4672
  %4674 = vmatmul.bf16.gmra.mxu0 %v3918
  %v4675 = vpop.f32.mrf.mxu0
  %v4676 = vadd.f32 %v3977, %v4675
  %v4677 = vpop.f32.mrf.mxu0
  %v4678 = vadd.f32 %v3977, %v4677
  %4679 = vmatmul.bf16.gmra.mxu0 %v3920
  %v4680 = vpop.f32.mrf.mxu0
  %v4681 = vadd.f32 %v3977, %v4680
  %v4682 = vpop.f32.mrf.mxu0
  %v4683 = vadd.f32 %v3977, %v4682
  %4684 = vmatmul.bf16.gmra.mxu0 %v3922
  %v4685 = vpop.f32.mrf.mxu0
  %v4686 = vadd.f32 %v3977, %v4685
  %v4687 = vpop.f32.mrf.mxu0
  %v4688 = vadd.f32 %v3977, %v4687
  %4689 = vmatmul.bf16.gmra.mxu0 %v3924
  %v4690 = vpop.f32.mrf.mxu0
  %v4691 = vadd.f32 %v3977, %v4690
  %v4692 = vpop.f32.mrf.mxu0
  %v4693 = vadd.f32 %v3977, %v4692
  %4694 = vmatmul.bf16.gmra.mxu0 %v3926
  %v4695 = vpop.f32.mrf.mxu0
  %v4696 = vadd.f32 %v3977, %v4695
  %v4697 = vpop.f32.mrf.mxu0
  %v4698 = vadd.f32 %v3977, %v4697
  %4699 = vmatmul.bf16.gmra.mxu0 %v3928
  %v4700 = vpop.f32.mrf.mxu0
  %v4701 = vadd.f32 %v3977, %v4700
  %v4702 = vpop.f32.mrf.mxu0
  %v4703 = vadd.f32 %v3977, %v4702
  %4704 = vmatmul.bf16.gmra.mxu0 %v3930
  %v4705 = vpop.f32.mrf.mxu0
  %v4706 = vadd.f32 %v3977, %v4705
  %v4707 = vpop.f32.mrf.mxu0
  %v4708 = vadd.f32 %v3977, %v4707
  %4709 = vmatmul.bf16.gmra.mxu0 %v3932
  %v4710 = vpop.f32.mrf.mxu0
  %v4711 = vadd.f32 %v3977, %v4710
  %v4712 = vpop.f32.mrf.mxu0
  %v4713 = vadd.f32 %v3977, %v4712
  %4714 = vmatmul.bf16.gmra.mxu0 %v3934
  %v4715 = vpop.f32.mrf.mxu0
  %v4716 = vadd.f32 %v3977, %v4715
  %v4717 = vpop.f32.mrf.mxu0
  %v4718 = vadd.f32 %v3977, %v4717
  %4719 = vmatmul.bf16.gmra.mxu0 %v3936
  %v4720 = vpop.f32.mrf.mxu0
  %v4721 = vadd.f32 %v3977, %v4720
  %v4722 = vpop.f32.mrf.mxu0
  %v4723 = vadd.f32 %v3977, %v4722
  %4724 = vmatmul.bf16.gmra.mxu0 %v3938
  %v4725 = vpop.f32.mrf.mxu0
  %v4726 = vadd.f32 %v3977, %v4725
  %v4727 = vpop.f32.mrf.mxu0
  %v4728 = vadd.f32 %v3977, %v4727
  %4729 = vmatmul.bf16.gmra.mxu0 %v3940
  %v4730 = vpop.f32.mrf.mxu0
  %v4731 = vadd.f32 %v3977, %v4730
  %v4732 = vpop.f32.mrf.mxu0
  %4733 = vdwg.mxu0
  %4734 = vmatpush.bf16.msra.mxu0 %v4107
  %4735 = vmatpush.bf16.msra.mxu0 %v4105
  %4736 = vmatpush.bf16.msra.mxu0 %v4103
  %4737 = vmatpush.bf16.msra.mxu0 %v4101
  %4738 = vmatpush.bf16.msra.mxu0 %v4099
  %4739 = vmatpush.bf16.msra.mxu0 %v4097
  %4740 = vmatpush.bf16.msra.mxu0 %v4095
  %4741 = vmatpush.bf16.msra.mxu0 %v4093
  %4742 = vmatmul.bf16.gmra.mxu0 %v3867
  %v4743 = vpop.f32.mrf.mxu0
  %v4744 = vadd.f32 %v4546, %v4743
  %v4745 = vpop.f32.mrf.mxu0
  %v4746 = vadd.f32 %v4548, %v4745
  %4747 = vmatmul.bf16.gmra.mxu0 %v3869
  %v4748 = vpop.f32.mrf.mxu0
  %v4749 = vadd.f32 %v4551, %v4748
  %v4750 = vpop.f32.mrf.mxu0
  %v4751 = vadd.f32 %v4553, %v4750
  %4752 = vmatmul.bf16.gmra.mxu0 %v3871
  %v4753 = vpop.f32.mrf.mxu0
  %v4754 = vadd.f32 %v4556, %v4753
  %v4755 = vpop.f32.mrf.mxu0
  %v4756 = vadd.f32 %v4558, %v4755
  %4757 = vmatmul.bf16.gmra.mxu0 %v3873
  %v4758 = vpop.f32.mrf.mxu0
  %v4759 = vadd.f32 %v4561, %v4758
  %v4760 = vpop.f32.mrf.mxu0
  %v4761 = vadd.f32 %v4563, %v4760
  %4762 = vmatmul.bf16.gmra.mxu0 %v3875
  %v4763 = vpop.f32.mrf.mxu0
  %v4764 = vadd.f32 %v4566, %v4763
  %v4765 = vpop.f32.mrf.mxu0
  %v4766 = vadd.f32 %v4568, %v4765
  %4767 = vmatmul.bf16.gmra.mxu0 %v3877
  %v4768 = vpop.f32.mrf.mxu0
  %v4769 = vadd.f32 %v4571, %v4768
  %v4770 = vpop.f32.mrf.mxu0
  %v4771 = vadd.f32 %v4573, %v4770
  %4772 = vmatmul.bf16.gmra.mxu0 %v3879
  %v4773 = vpop.f32.mrf.mxu0
  %v4774 = vadd.f32 %v4576, %v4773
  %v4775 = vpop.f32.mrf.mxu0
  %v4776 = vadd.f32 %v4578, %v4775
  %4777 = vmatmul.bf16.gmra.mxu0 %v3881
  %v4778 = vpop.f32.mrf.mxu0
  %v4779 = vadd.f32 %v4581, %v4778
  %v4780 = vpop.f32.mrf.mxu0
  %v4781 = vadd.f32 %v4583, %v4780
  %4782 = vmatmul.bf16.gmra.mxu0 %v3883
  %v4783 = vpop.f32.mrf.mxu0
  %v4784 = vadd.f32 %v4586, %v4783
  %v4785 = vpop.f32.mrf.mxu0
  %v4786 = vadd.f32 %v4588, %v4785
  %4787 = vmatmul.bf16.gmra.mxu0 %v3885
  %v4788 = vpop.f32.mrf.mxu0
  %v4789 = vadd.f32 %v4591, %v4788
  %v4790 = vpop.f32.mrf.mxu0
  %v4791 = vadd.f32 %v4593, %v4790
  %4792 = vmatmul.bf16.gmra.mxu0 %v3887
  %v4793 = vpop.f32.mrf.mxu0
  %v4794 = vadd.f32 %v4596, %v4793
  %v4795 = vpop.f32.mrf.mxu0
  %v4796 = vadd.f32 %v4598, %v4795
  %4797 = vmatmul.bf16.gmra.mxu0 %v3889
  %v4798 = vpop.f32.mrf.mxu0
  %v4799 = vadd.f32 %v4601, %v4798
  %v4800 = vpop.f32.mrf.mxu0
  %v4801 = vadd.f32 %v4603, %v4800
  %4802 = vmatmul.bf16.gmra.mxu0 %v3891
  %v4803 = vpop.f32.mrf.mxu0
  %v4804 = vadd.f32 %v4606, %v4803
  %v4805 = vpop.f32.mrf.mxu0
  %v4806 = vadd.f32 %v4608, %v4805
  %4807 = vmatmul.bf16.gmra.mxu0 %v3893
  %v4808 = vpop.f32.mrf.mxu0
  %v4809 = vadd.f32 %v4611, %v4808
  %v4810 = vpop.f32.mrf.mxu0
  %v4811 = vadd.f32 %v4613, %v4810
  %4812 = vmatmul.bf16.gmra.mxu0 %v3895
  %v4813 = vpop.f32.mrf.mxu0
  %v4814 = vadd.f32 %v4616, %v4813
  %v4815 = vpop.f32.mrf.mxu0
  %v4816 = vadd.f32 %v4618, %v4815
  %4817 = vmatmul.bf16.gmra.mxu0 %v3897
  %v4818 = vpop.f32.mrf.mxu0
  %v4819 = vadd.f32 %v4621, %v4818
  %v4820 = vpop.f32.mrf.mxu0
  %v4821 = vadd.f32 %v4623, %v4820
  %4822 = vmatmul.bf16.gmra.mxu0 %v3899
  %v4823 = vpop.f32.mrf.mxu0
  %v4824 = vadd.f32 %v4626, %v4823
  %v4825 = vpop.f32.mrf.mxu0
  %v4826 = vadd.f32 %v4628, %v4825
  %4827 = vmatmul.bf16.gmra.mxu0 %v3901
  %v4828 = vpop.f32.mrf.mxu0
  %v4829 = vadd.f32 %v4631, %v4828
  %v4830 = vpop.f32.mrf.mxu0
  %v4831 = vadd.f32 %v4633, %v4830
  %4832 = vmatmul.bf16.gmra.mxu0 %v3903
  %v4833 = vpop.f32.mrf.mxu0
  %v4834 = vadd.f32 %v4636, %v4833
  %v4835 = vpop.f32.mrf.mxu0
  %v4836 = vadd.f32 %v4638, %v4835
  %4837 = vmatmul.bf16.gmra.mxu0 %v3905
  %v4838 = vpop.f32.mrf.mxu0
  %v4839 = vadd.f32 %v4641, %v4838
  %v4840 = vpop.f32.mrf.mxu0
  %v4841 = vadd.f32 %v4643, %v4840
  %4842 = vmatmul.bf16.gmra.mxu0 %v3907
  %v4843 = vpop.f32.mrf.mxu0
  %v4844 = vadd.f32 %v4646, %v4843
  %v4845 = vpop.f32.mrf.mxu0
  %v4846 = vadd.f32 %v4648, %v4845
  %4847 = vmatmul.bf16.gmra.mxu0 %v3909
  %v4848 = vpop.f32.mrf.mxu0
  %v4849 = vadd.f32 %v4651, %v4848
  %v4850 = vpop.f32.mrf.mxu0
  %v4851 = vadd.f32 %v4653, %v4850
  %4852 = vmatmul.bf16.gmra.mxu0 %v3911
  %v4853 = vpop.f32.mrf.mxu0
  %v4854 = vadd.f32 %v4656, %v4853
  %v4855 = vpop.f32.mrf.mxu0
  %v4856 = vadd.f32 %v4658, %v4855
  %4857 = vmatmul.bf16.gmra.mxu0 %v3913
  %v4858 = vpop.f32.mrf.mxu0
  %v4859 = vadd.f32 %v4661, %v4858
  %v4860 = vpop.f32.mrf.mxu0
  %v4861 = vadd.f32 %v4663, %v4860
  %4862 = vmatmul.bf16.gmra.mxu0 %v3915
  %v4863 = vpop.f32.mrf.mxu0
  %v4864 = vadd.f32 %v4666, %v4863
  %v4865 = vpop.f32.mrf.mxu0
  %v4866 = vadd.f32 %v4668, %v4865
  %4867 = vmatmul.bf16.gmra.mxu0 %v3917
  %v4868 = vpop.f32.mrf.mxu0
  %v4869 = vadd.f32 %v4671, %v4868
  %v4870 = vpop.f32.mrf.mxu0
  %v4871 = vadd.f32 %v4673, %v4870
  %4872 = vmatmul.bf16.gmra.mxu0 %v3919
  %v4873 = vpop.f32.mrf.mxu0
  %v4874 = vadd.f32 %v4676, %v4873
  %v4875 = vpop.f32.mrf.mxu0
  %v4876 = vadd.f32 %v4678, %v4875
  %4877 = vmatmul.bf16.gmra.mxu0 %v3921
  %v4878 = vpop.f32.mrf.mxu0
  %v4879 = vadd.f32 %v4681, %v4878
  %v4880 = vpop.f32.mrf.mxu0
  %v4881 = vadd.f32 %v4683, %v4880
  %4882 = vmatmul.bf16.gmra.mxu0 %v3923
  %v4883 = vpop.f32.mrf.mxu0
  %v4884 = vadd.f32 %v4686, %v4883
  %v4885 = vpop.f32.mrf.mxu0
  %v4886 = vadd.f32 %v4688, %v4885
  %4887 = vmatmul.bf16.gmra.mxu0 %v3925
  %v4888 = vpop.f32.mrf.mxu0
  %v4889 = vadd.f32 %v4691, %v4888
  %v4890 = vpop.f32.mrf.mxu0
  %v4891 = vadd.f32 %v4693, %v4890
  %4892 = vmatmul.bf16.gmra.mxu0 %v3927
  %v4893 = vpop.f32.mrf.mxu0
  %v4894 = vadd.f32 %v4696, %v4893
  %v4895 = vpop.f32.mrf.mxu0
  %v4896 = vadd.f32 %v4698, %v4895
  %4897 = vmatmul.bf16.gmra.mxu0 %v3929
  %v4898 = vpop.f32.mrf.mxu0
  %v4899 = vadd.f32 %v4701, %v4898
  %v4900 = vpop.f32.mrf.mxu0
  %v4901 = vadd.f32 %v4703, %v4900
  %4902 = vmatmul.bf16.gmra.mxu0 %v3931
  %v4903 = vpop.f32.mrf.mxu0
  %v4904 = vadd.f32 %v4706, %v4903
  %v4905 = vpop.f32.mrf.mxu0
  %v4906 = vadd.f32 %v4708, %v4905
  %4907 = vmatmul.bf16.gmra.mxu0 %v3933
  %v4908 = vpop.f32.mrf.mxu0
  %v4909 = vadd.f32 %v4711, %v4908
  %v4910 = vpop.f32.mrf.mxu0
  %v4911 = vadd.f32 %v4713, %v4910
  %4912 = vmatmul.bf16.gmra.mxu0 %v3935
  %v4913 = vpop.f32.mrf.mxu0
  %v4914 = vadd.f32 %v4716, %v4913
  %v4915 = vpop.f32.mrf.mxu0
  %v4916 = vadd.f32 %v4718, %v4915
  %4917 = vmatmul.bf16.gmra.mxu0 %v3937
  %v4918 = vpop.f32.mrf.mxu0
  %v4919 = vadd.f32 %v4721, %v4918
  %v4920 = vpop.f32.mrf.mxu0
  %v4921 = vadd.f32 %v4723, %v4920
  %4922 = vmatmul.bf16.gmra.mxu0 %v3939
  %v4923 = vpop.f32.mrf.mxu0
  %v4924 = vadd.f32 %v4726, %v4923
  %v4925 = vpop.f32.mrf.mxu0
  %v4926 = vadd.f32 %v4728, %v4925
  %4927 = vmatmul.bf16.gmra.mxu0 %v3941
  %v4928 = vpop.f32.mrf.mxu0
  %v4929 = vadd.f32 %v4731, %v4928
  %v4930 = vpop.f32.mrf.mxu0
  %4931 = vdwg.mxu0
  %v4932 = vpack.c.bf16 %v4350, %v4348
  %v4933 = vpack.c.bf16 %v4746, %v4744
  %v4934 = vpack.c.bf16 %v4355, %v4353
  %v4935 = vpack.c.bf16 %v4751, %v4749
  %v4936 = vpack.c.bf16 %v4360, %v4358
  %v4937 = vpack.c.bf16 %v4756, %v4754
  %v4938 = vpack.c.bf16 %v4365, %v4363
  %v4939 = vpack.c.bf16 %v4761, %v4759
  %v4940 = vpack.c.bf16 %v4370, %v4368
  %v4941 = vpack.c.bf16 %v4766, %v4764
  %v4942 = vpack.c.bf16 %v4375, %v4373
  %v4943 = vpack.c.bf16 %v4771, %v4769
  %v4944 = vpack.c.bf16 %v4380, %v4378
  %v4945 = vpack.c.bf16 %v4776, %v4774
  %v4946 = vpack.c.bf16 %v4385, %v4383
  %v4947 = vpack.c.bf16 %v4781, %v4779
  %v4948 = vpack.c.bf16 %v4390, %v4388
  %v4949 = vpack.c.bf16 %v4786, %v4784
  %v4950 = vpack.c.bf16 %v4395, %v4393
  %v4951 = vpack.c.bf16 %v4791, %v4789
  %v4952 = vpack.c.bf16 %v4400, %v4398
  %v4953 = vpack.c.bf16 %v4796, %v4794
  %v4954 = vpack.c.bf16 %v4405, %v4403
  %v4955 = vpack.c.bf16 %v4801, %v4799
  %v4956 = vpack.c.bf16 %v4410, %v4408
  %v4957 = vpack.c.bf16 %v4806, %v4804
  %v4958 = vpack.c.bf16 %v4415, %v4413
  %v4959 = vpack.c.bf16 %v4811, %v4809
  %v4960 = vpack.c.bf16 %v4420, %v4418
  %v4961 = vpack.c.bf16 %v4816, %v4814
  %v4962 = vpack.c.bf16 %v4425, %v4423
  %v4963 = vpack.c.bf16 %v4821, %v4819
  %v4964 = vpack.c.bf16 %v4430, %v4428
  %v4965 = vpack.c.bf16 %v4826, %v4824
  %v4966 = vpack.c.bf16 %v4435, %v4433
  %v4967 = vpack.c.bf16 %v4831, %v4829
  %v4968 = vpack.c.bf16 %v4440, %v4438
  %v4969 = vpack.c.bf16 %v4836, %v4834
  %v4970 = vpack.c.bf16 %v4445, %v4443
  %v4971 = vpack.c.bf16 %v4841, %v4839
  %v4972 = vpack.c.bf16 %v4450, %v4448
  %v4973 = vpack.c.bf16 %v4846, %v4844
  %v4974 = vpack.c.bf16 %v4455, %v4453
  %v4975 = vpack.c.bf16 %v4851, %v4849
  %v4976 = vpack.c.bf16 %v4460, %v4458
  %v4977 = vpack.c.bf16 %v4856, %v4854
  %v4978 = vpack.c.bf16 %v4465, %v4463
  %v4979 = vpack.c.bf16 %v4861, %v4859
  %v4980 = vpack.c.bf16 %v4470, %v4468
  %v4981 = vpack.c.bf16 %v4866, %v4864
  %v4982 = vpack.c.bf16 %v4475, %v4473
  %v4983 = vpack.c.bf16 %v4871, %v4869
  %v4984 = vpack.c.bf16 %v4480, %v4478
  %v4985 = vpack.c.bf16 %v4876, %v4874
  %v4986 = vpack.c.bf16 %v4485, %v4483
  %v4987 = vpack.c.bf16 %v4881, %v4879
  %v4988 = vpack.c.bf16 %v4490, %v4488
  %v4989 = vpack.c.bf16 %v4886, %v4884
  %v4990 = vpack.c.bf16 %v4495, %v4493
  %v4991 = vpack.c.bf16 %v4891, %v4889
  %v4992 = vpack.c.bf16 %v4500, %v4498
  %v4993 = vpack.c.bf16 %v4896, %v4894
  %v4994 = vpack.c.bf16 %v4505, %v4503
  %v4995 = vpack.c.bf16 %v4901, %v4899
  %v4996 = vpack.c.bf16 %v4510, %v4508
  %v4997 = vpack.c.bf16 %v4906, %v4904
  %v4998 = vpack.c.bf16 %v4515, %v4513
  %v4999 = vpack.c.bf16 %v4911, %v4909
  %v5000 = vpack.c.bf16 %v4520, %v4518
  %v5001 = vpack.c.bf16 %v4916, %v4914
  %v5002 = vpack.c.bf16 %v4525, %v4523
  %v5003 = vpack.c.bf16 %v4921, %v4919
  %v5004 = vpack.c.bf16 %v4530, %v4528
  %v5005 = vpack.c.bf16 %v4926, %v4924
  %v5006 = vpack.c.bf16 %v4533, %v4533
  %v5007 = vpack.c.bf16 %v4929, %v4929
  %v5008 = vunpack.c.l.bf16 %v4932
  %v5009 = vunpack.c.l.bf16 %v4933
  %v5010 = vunpack.c.h.bf16 %v4932
  %v5011 = vunpack.c.h.bf16 %v4933
  %v5012 = vunpack.c.l.bf16 %v4934
  %v5013 = vunpack.c.l.bf16 %v4935
  %v5014 = vunpack.c.h.bf16 %v4934
  %v5015 = vunpack.c.h.bf16 %v4935
  %v5016 = vunpack.c.l.bf16 %v4936
  %v5017 = vunpack.c.l.bf16 %v4937
  %v5018 = vunpack.c.h.bf16 %v4936
  %v5019 = vunpack.c.h.bf16 %v4937
  %v5020 = vunpack.c.l.bf16 %v4938
  %v5021 = vunpack.c.l.bf16 %v4939
  %v5022 = vunpack.c.h.bf16 %v4938
  %v5023 = vunpack.c.h.bf16 %v4939
  %v5024 = vunpack.c.l.bf16 %v4940
  %v5025 = vunpack.c.l.bf16 %v4941
  %v5026 = vunpack.c.h.bf16 %v4940
  %v5027 = vunpack.c.h.bf16 %v4941
  %v5028 = vunpack.c.l.bf16 %v4942
  %v5029 = vunpack.c.l.bf16 %v4943
  %v5030 = vunpack.c.h.bf16 %v4942
  %v5031 = vunpack.c.h.bf16 %v4943
  %v5032 = vunpack.c.l.bf16 %v4944
  %v5033 = vunpack.c.l.bf16 %v4945
  %v5034 = vunpack.c.h.bf16 %v4944
  %v5035 = vunpack.c.h.bf16 %v4945
  %v5036 = vunpack.c.l.bf16 %v4946
  %v5037 = vunpack.c.l.bf16 %v4947
  %v5038 = vunpack.c.h.bf16 %v4946
  %v5039 = vunpack.c.h.bf16 %v4947
  %v5040 = vunpack.c.l.bf16 %v4948
  %v5041 = vunpack.c.l.bf16 %v4949
  %v5042 = vunpack.c.h.bf16 %v4948
  %v5043 = vunpack.c.h.bf16 %v4949
  %v5044 = vunpack.c.l.bf16 %v4950
  %v5045 = vunpack.c.l.bf16 %v4951
  %v5046 = vunpack.c.h.bf16 %v4950
  %v5047 = vunpack.c.h.bf16 %v4951
  %v5048 = vunpack.c.l.bf16 %v4952
  %v5049 = vunpack.c.l.bf16 %v4953
  %v5050 = vunpack.c.h.bf16 %v4952
  %v5051 = vunpack.c.h.bf16 %v4953
  %v5052 = vunpack.c.l.bf16 %v4954
  %v5053 = vunpack.c.l.bf16 %v4955
  %v5054 = vunpack.c.h.bf16 %v4954
  %v5055 = vunpack.c.h.bf16 %v4955
  %v5056 = vunpack.c.l.bf16 %v4956
  %v5057 = vunpack.c.l.bf16 %v4957
  %v5058 = vunpack.c.h.bf16 %v4956
  %v5059 = vunpack.c.h.bf16 %v4957
  %v5060 = vunpack.c.l.bf16 %v4958
  %v5061 = vunpack.c.l.bf16 %v4959
  %v5062 = vunpack.c.h.bf16 %v4958
  %v5063 = vunpack.c.h.bf16 %v4959
  %v5064 = vunpack.c.l.bf16 %v4960
  %v5065 = vunpack.c.l.bf16 %v4961
  %v5066 = vunpack.c.h.bf16 %v4960
  %v5067 = vunpack.c.h.bf16 %v4961
  %v5068 = vunpack.c.l.bf16 %v4962
  %v5069 = vunpack.c.l.bf16 %v4963
  %v5070 = vunpack.c.h.bf16 %v4962
  %v5071 = vunpack.c.h.bf16 %v4963
  %v5072 = vunpack.c.l.bf16 %v4964
  %v5073 = vunpack.c.l.bf16 %v4965
  %v5074 = vunpack.c.h.bf16 %v4964
  %v5075 = vunpack.c.h.bf16 %v4965
  %v5076 = vunpack.c.l.bf16 %v4966
  %v5077 = vunpack.c.l.bf16 %v4967
  %v5078 = vunpack.c.h.bf16 %v4966
  %v5079 = vunpack.c.h.bf16 %v4967
  %v5080 = vunpack.c.l.bf16 %v4968
  %v5081 = vunpack.c.l.bf16 %v4969
  %v5082 = vunpack.c.h.bf16 %v4968
  %v5083 = vunpack.c.h.bf16 %v4969
  %v5084 = vunpack.c.l.bf16 %v4970
  %v5085 = vunpack.c.l.bf16 %v4971
  %v5086 = vunpack.c.h.bf16 %v4970
  %v5087 = vunpack.c.h.bf16 %v4971
  %v5088 = vunpack.c.l.bf16 %v4972
  %v5089 = vunpack.c.l.bf16 %v4973
  %v5090 = vunpack.c.h.bf16 %v4972
  %v5091 = vunpack.c.h.bf16 %v4973
  %v5092 = vunpack.c.l.bf16 %v4974
  %v5093 = vunpack.c.l.bf16 %v4975
  %v5094 = vunpack.c.h.bf16 %v4974
  %v5095 = vunpack.c.h.bf16 %v4975
  %v5096 = vunpack.c.l.bf16 %v4976
  %v5097 = vunpack.c.l.bf16 %v4977
  %v5098 = vunpack.c.h.bf16 %v4976
  %v5099 = vunpack.c.h.bf16 %v4977
  %v5100 = vunpack.c.l.bf16 %v4978
  %v5101 = vunpack.c.l.bf16 %v4979
  %v5102 = vunpack.c.h.bf16 %v4978
  %v5103 = vunpack.c.h.bf16 %v4979
  %v5104 = vunpack.c.l.bf16 %v4980
  %v5105 = vunpack.c.l.bf16 %v4981
  %v5106 = vunpack.c.h.bf16 %v4980
  %v5107 = vunpack.c.h.bf16 %v4981
  %v5108 = vunpack.c.l.bf16 %v4982
  %v5109 = vunpack.c.l.bf16 %v4983
  %v5110 = vunpack.c.h.bf16 %v4982
  %v5111 = vunpack.c.h.bf16 %v4983
  %v5112 = vunpack.c.l.bf16 %v4984
  %v5113 = vunpack.c.l.bf16 %v4985
  %v5114 = vunpack.c.h.bf16 %v4984
  %v5115 = vunpack.c.h.bf16 %v4985
  %v5116 = vunpack.c.l.bf16 %v4986
  %v5117 = vunpack.c.l.bf16 %v4987
  %v5118 = vunpack.c.h.bf16 %v4986
  %v5119 = vunpack.c.h.bf16 %v4987
  %v5120 = vunpack.c.l.bf16 %v4988
  %v5121 = vunpack.c.l.bf16 %v4989
  %v5122 = vunpack.c.h.bf16 %v4988
  %v5123 = vunpack.c.h.bf16 %v4989
  %v5124 = vunpack.c.l.bf16 %v4990
  %v5125 = vunpack.c.l.bf16 %v4991
  %v5126 = vunpack.c.h.bf16 %v4990
  %v5127 = vunpack.c.h.bf16 %v4991
  %v5128 = vunpack.c.l.bf16 %v4992
  %v5129 = vunpack.c.l.bf16 %v4993
  %v5130 = vunpack.c.h.bf16 %v4992
  %v5131 = vunpack.c.h.bf16 %v4993
  %v5132 = vunpack.c.l.bf16 %v4994
  %v5133 = vunpack.c.l.bf16 %v4995
  %v5134 = vunpack.c.h.bf16 %v4994
  %v5135 = vunpack.c.h.bf16 %v4995
  %v5136 = vunpack.c.l.bf16 %v4996
  %v5137 = vunpack.c.l.bf16 %v4997
  %v5138 = vunpack.c.h.bf16 %v4996
  %v5139 = vunpack.c.h.bf16 %v4997
  %v5140 = vunpack.c.l.bf16 %v4998
  %v5141 = vunpack.c.l.bf16 %v4999
  %v5142 = vunpack.c.h.bf16 %v4998
  %v5143 = vunpack.c.h.bf16 %v4999
  %v5144 = vunpack.c.l.bf16 %v5000
  %v5145 = vunpack.c.l.bf16 %v5001
  %v5146 = vunpack.c.h.bf16 %v5000
  %v5147 = vunpack.c.h.bf16 %v5001
  %v5148 = vunpack.c.l.bf16 %v5002
  %v5149 = vunpack.c.l.bf16 %v5003
  %v5150 = vunpack.c.h.bf16 %v5002
  %v5151 = vunpack.c.h.bf16 %v5003
  %v5152 = vunpack.c.l.bf16 %v5004
  %v5153 = vunpack.c.l.bf16 %v5005
  %v5154 = vunpack.c.h.bf16 %v5004
  %v5155 = vunpack.c.h.bf16 %v5005
  %v5156 = vunpack.c.l.bf16 %v5006
  %v5157 = vunpack.c.l.bf16 %v5007
  %v5158 = vtanh.pop %v5008
  %v5159 = vtanh.pop %v5009
  %v5160 = vtanh.pop %v5010
  %v5161 = vtanh.pop %v5011
  %v5162 = vtanh.pop %v5012
  %v5163 = vtanh.pop %v5013
  %v5164 = vtanh.pop %v5014
  %v5165 = vtanh.pop %v5015
  %v5166 = vtanh.pop %v5016
  %v5167 = vtanh.pop %v5017
  %v5168 = vtanh.pop %v5018
  %v5169 = vtanh.pop %v5019
  %v5170 = vtanh.pop %v5020
  %v5171 = vtanh.pop %v5021
  %v5172 = vtanh.pop %v5022
  %v5173 = vtanh.pop %v5023
  %v5174 = vtanh.pop %v5024
  %v5175 = vtanh.pop %v5025
  %v5176 = vtanh.pop %v5026
  %v5177 = vtanh.pop %v5027
  %v5178 = vtanh.pop %v5028
  %v5179 = vtanh.pop %v5029
  %v5180 = vtanh.pop %v5030
  %v5181 = vtanh.pop %v5031
  %v5182 = vtanh.pop %v5032
  %v5183 = vtanh.pop %v5033
  %v5184 = vtanh.pop %v5034
  %v5185 = vtanh.pop %v5035
  %v5186 = vtanh.pop %v5036
  %v5187 = vtanh.pop %v5037
  %v5188 = vtanh.pop %v5038
  %v5189 = vtanh.pop %v5039
  %v5190 = vtanh.pop %v5040
  %v5191 = vtanh.pop %v5041
  %v5192 = vtanh.pop %v5042
  %v5193 = vtanh.pop %v5043
  %v5194 = vtanh.pop %v5044
  %v5195 = vtanh.pop %v5045
  %v5196 = vtanh.pop %v5046
  %v5197 = vtanh.pop %v5047
  %v5198 = vtanh.pop %v5048
  %v5199 = vtanh.pop %v5049
  %v5200 = vtanh.pop %v5050
  %v5201 = vtanh.pop %v5051
  %v5202 = vtanh.pop %v5052
  %v5203 = vtanh.pop %v5053
  %v5204 = vtanh.pop %v5054
  %v5205 = vtanh.pop %v5055
  %v5206 = vtanh.pop %v5056
  %v5207 = vtanh.pop %v5057
  %v5208 = vtanh.pop %v5058
  %v5209 = vtanh.pop %v5059
  %v5210 = vtanh.pop %v5060
  %v5211 = vtanh.pop %v5061
  %v5212 = vtanh.pop %v5062
  %v5213 = vtanh.pop %v5063
  %v5214 = vtanh.pop %v5064
  %v5215 = vtanh.pop %v5065
  %v5216 = vtanh.pop %v5066
  %v5217 = vtanh.pop %v5067
  %v5218 = vtanh.pop %v5068
  %v5219 = vtanh.pop %v5069
  %v5220 = vtanh.pop %v5070
  %v5221 = vtanh.pop %v5071
  %v5222 = vtanh.pop %v5072
  %v5223 = vtanh.pop %v5073
  %v5224 = vtanh.pop %v5074
  %v5225 = vtanh.pop %v5075
  %v5226 = vtanh.pop %v5076
  %v5227 = vtanh.pop %v5077
  %v5228 = vtanh.pop %v5078
  %v5229 = vtanh.pop %v5079
  %v5230 = vtanh.pop %v5080
  %v5231 = vtanh.pop %v5081
  %v5232 = vtanh.pop %v5082
  %v5233 = vtanh.pop %v5083
  %v5234 = vtanh.pop %v5084
  %v5235 = vtanh.pop %v5085
  %v5236 = vtanh.pop %v5086
  %v5237 = vtanh.pop %v5087
  %v5238 = vtanh.pop %v5088
  %v5239 = vtanh.pop %v5089
  %v5240 = vtanh.pop %v5090
  %v5241 = vtanh.pop %v5091
  %v5242 = vtanh.pop %v5092
  %v5243 = vtanh.pop %v5093
  %v5244 = vtanh.pop %v5094
  %v5245 = vtanh.pop %v5095
  %v5246 = vtanh.pop %v5096
  %v5247 = vtanh.pop %v5097
  %v5248 = vtanh.pop %v5098
  %v5249 = vtanh.pop %v5099
  %v5250 = vtanh.pop %v5100
  %v5251 = vtanh.pop %v5101
  %v5252 = vtanh.pop %v5102
  %v5253 = vtanh.pop %v5103
  %v5254 = vtanh.pop %v5104
  %v5255 = vtanh.pop %v5105
  %v5256 = vtanh.pop %v5106
  %v5257 = vtanh.pop %v5107
  %v5258 = vtanh.pop %v5108
  %v5259 = vtanh.pop %v5109
  %v5260 = vtanh.pop %v5110
  %v5261 = vtanh.pop %v5111
  %v5262 = vtanh.pop %v5112
  %v5263 = vtanh.pop %v5113
  %v5264 = vtanh.pop %v5114
  %v5265 = vtanh.pop %v5115
  %v5266 = vtanh.pop %v5116
  %v5267 = vtanh.pop %v5117
  %v5268 = vtanh.pop %v5118
  %v5269 = vtanh.pop %v5119
  %v5270 = vtanh.pop %v5120
  %v5271 = vtanh.pop %v5121
  %v5272 = vtanh.pop %v5122
  %v5273 = vtanh.pop %v5123
  %v5274 = vtanh.pop %v5124
  %v5275 = vtanh.pop %v5125
  %v5276 = vtanh.pop %v5126
  %v5277 = vtanh.pop %v5127
  %v5278 = vtanh.pop %v5128
  %v5279 = vtanh.pop %v5129
  %v5280 = vtanh.pop %v5130
  %v5281 = vtanh.pop %v5131
  %v5282 = vtanh.pop %v5132
  %v5283 = vtanh.pop %v5133
  %v5284 = vtanh.pop %v5134
  %v5285 = vtanh.pop %v5135
  %v5286 = vtanh.pop %v5136
  %v5287 = vtanh.pop %v5137
  %v5288 = vtanh.pop %v5138
  %v5289 = vtanh.pop %v5139
  %v5290 = vtanh.pop %v5140
  %v5291 = vtanh.pop %v5141
  %v5292 = vtanh.pop %v5142
  %v5293 = vtanh.pop %v5143
  %v5294 = vtanh.pop %v5144
  %v5295 = vtanh.pop %v5145
  %v5296 = vtanh.pop %v5146
  %v5297 = vtanh.pop %v5147
  %v5298 = vtanh.pop %v5148
  %v5299 = vtanh.pop %v5149
  %v5300 = vtanh.pop %v5150
  %v5301 = vtanh.pop %v5151
  %v5302 = vtanh.pop %v5152
  %v5303 = vtanh.pop %v5153
  %v5304 = vtanh.pop %v5154
  %v5305 = vtanh.pop %v5155
  %v5306 = vtanh.pop %v5156
  %v5307 = vtanh.pop %v5157
  %v5308 = vpack.c.bf16 %v5160, %v5158
  %v5309 = vpack.c.bf16 %v5161, %v5159
  %v5310 = vpack.c.bf16 %v5164, %v5162
  %v5311 = vpack.c.bf16 %v5165, %v5163
  %v5312 = vpack.c.bf16 %v5168, %v5166
  %v5313 = vpack.c.bf16 %v5169, %v5167
  %v5314 = vpack.c.bf16 %v5172, %v5170
  %v5315 = vpack.c.bf16 %v5173, %v5171
  %v5316 = vpack.c.bf16 %v5176, %v5174
  %v5317 = vpack.c.bf16 %v5177, %v5175
  %v5318 = vpack.c.bf16 %v5180, %v5178
  %v5319 = vpack.c.bf16 %v5181, %v5179
  %v5320 = vpack.c.bf16 %v5184, %v5182
  %v5321 = vpack.c.bf16 %v5185, %v5183
  %v5322 = vpack.c.bf16 %v5188, %v5186
  %v5323 = vpack.c.bf16 %v5189, %v5187
  %v5324 = vpack.c.bf16 %v5192, %v5190
  %v5325 = vpack.c.bf16 %v5193, %v5191
  %v5326 = vpack.c.bf16 %v5196, %v5194
  %v5327 = vpack.c.bf16 %v5197, %v5195
  %v5328 = vpack.c.bf16 %v5200, %v5198
  %v5329 = vpack.c.bf16 %v5201, %v5199
  %v5330 = vpack.c.bf16 %v5204, %v5202
  %v5331 = vpack.c.bf16 %v5205, %v5203
  %v5332 = vpack.c.bf16 %v5208, %v5206
  %v5333 = vpack.c.bf16 %v5209, %v5207
  %v5334 = vpack.c.bf16 %v5212, %v5210
  %v5335 = vpack.c.bf16 %v5213, %v5211
  %v5336 = vpack.c.bf16 %v5216, %v5214
  %v5337 = vpack.c.bf16 %v5217, %v5215
  %v5338 = vpack.c.bf16 %v5220, %v5218
  %v5339 = vpack.c.bf16 %v5221, %v5219
  %v5340 = vpack.c.bf16 %v5224, %v5222
  %v5341 = vpack.c.bf16 %v5225, %v5223
  %v5342 = vpack.c.bf16 %v5228, %v5226
  %v5343 = vpack.c.bf16 %v5229, %v5227
  %v5344 = vpack.c.bf16 %v5232, %v5230
  %v5345 = vpack.c.bf16 %v5233, %v5231
  %v5346 = vpack.c.bf16 %v5236, %v5234
  %v5347 = vpack.c.bf16 %v5237, %v5235
  %v5348 = vpack.c.bf16 %v5240, %v5238
  %v5349 = vpack.c.bf16 %v5241, %v5239
  %v5350 = vpack.c.bf16 %v5244, %v5242
  %v5351 = vpack.c.bf16 %v5245, %v5243
  %v5352 = vpack.c.bf16 %v5248, %v5246
  %v5353 = vpack.c.bf16 %v5249, %v5247
  %v5354 = vpack.c.bf16 %v5252, %v5250
  %v5355 = vpack.c.bf16 %v5253, %v5251
  %v5356 = vpack.c.bf16 %v5256, %v5254
  %v5357 = vpack.c.bf16 %v5257, %v5255
  %v5358 = vpack.c.bf16 %v5260, %v5258
  %v5359 = vpack.c.bf16 %v5261, %v5259
  %v5360 = vpack.c.bf16 %v5264, %v5262
  %v5361 = vpack.c.bf16 %v5265, %v5263
  %v5362 = vpack.c.bf16 %v5268, %v5266
  %v5363 = vpack.c.bf16 %v5269, %v5267
  %v5364 = vpack.c.bf16 %v5272, %v5270
  %v5365 = vpack.c.bf16 %v5273, %v5271
  %v5366 = vpack.c.bf16 %v5276, %v5274
  %v5367 = vpack.c.bf16 %v5277, %v5275
  %v5368 = vpack.c.bf16 %v5280, %v5278
  %v5369 = vpack.c.bf16 %v5281, %v5279
  %v5370 = vpack.c.bf16 %v5284, %v5282
  %v5371 = vpack.c.bf16 %v5285, %v5283
  %v5372 = vpack.c.bf16 %v5288, %v5286
  %v5373 = vpack.c.bf16 %v5289, %v5287
  %v5374 = vpack.c.bf16 %v5292, %v5290
  %v5375 = vpack.c.bf16 %v5293, %v5291
  %v5376 = vpack.c.bf16 %v5296, %v5294
  %v5377 = vpack.c.bf16 %v5297, %v5295
  %v5378 = vpack.c.bf16 %v5300, %v5298
  %v5379 = vpack.c.bf16 %v5301, %v5299
  %v5380 = vpack.c.bf16 %v5304, %v5302
  %v5381 = vpack.c.bf16 %v5305, %v5303
  %v5382 = vpack.c.bf16 %v5306, %v5306
  %v5383 = vpack.c.bf16 %v5307, %v5307
  %v5384 = vld [vmem:[%s9] sm:$0xf]
  %v5385 = vld [vmem:[%s9 + $0x4] sm:$0xf]
  %v5386 = vld [vmem:[%s9 + $0x8] sm:$0xf]
  %v5387 = vld [vmem:[%s9 + $0xc] sm:$0xf]
  %v5388 = vld [vmem:[%s9 + $0x10] sm:$0xf]
  %v5389 = vld [vmem:[%s9 + $0x14] sm:$0xf]
  %v5390 = vld [vmem:[%s9 + $0x18] sm:$0xf]
  %v5391 = vld [vmem:[%s9 + $0x1c] sm:$0xf]
  %v5392 = vld [vmem:[%s9 + $0x20] sm:$0xf]
  %v5393 = vld [vmem:[%s9 + $0x24] sm:$0xf]
  %v5394 = vld [vmem:[%s9 + $0x28] sm:$0xf]
  %v5395 = vld [vmem:[%s9 + $0x2c] sm:$0xf]
  %v5396 = vld [vmem:[%s9 + $0x30] sm:$0xf]
  %v5397 = vld [vmem:[%s9 + $0x34] sm:$0xf]
  %v5398 = vld [vmem:[%s9 + $0x38] sm:$0xf]
  %v5399 = vld [vmem:[%s9 + $0x3c] sm:$0xf]
  %v5400 = vld [vmem:[%s9 + $0x40] sm:$0xf]
  %v5401 = vld [vmem:[%s9 + $0x44] sm:$0xf]
  %v5402 = vld [vmem:[%s9 + $0x48] sm:$0xf]
  %v5403 = vld [vmem:[%s9 + $0x4c] sm:$0xf]
  %v5404 = vld [vmem:[%s9 + $0x50] sm:$0xf]
  %v5405 = vld [vmem:[%s9 + $0x54] sm:$0xf]
  %v5406 = vld [vmem:[%s9 + $0x58] sm:$0xf]
  %v5407 = vld [vmem:[%s9 + $0x5c] sm:$0xf]
  %v5408 = vld [vmem:[%s9 + $0x60] sm:$0xf]
  %v5409 = vld [vmem:[%s9 + $0x64] sm:$0xf]
  %v5410 = vld [vmem:[%s9 + $0x68] sm:$0xf]
  %v5411 = vld [vmem:[%s9 + $0x6c] sm:$0xf]
  %v5412 = vld [vmem:[%s9 + $0x70] sm:$0xf]
  %v5413 = vld [vmem:[%s9 + $0x74] sm:$0xf]
  %v5414 = vld [vmem:[%s9 + $0x78] sm:$0xf]
  %v5415 = vld [vmem:[%s9 + $0x7c] sm:$0xf]
  %v5416 = vld [vmem:[%s10] sm:$0x1]
  %v5418 = vperm.slane %v5416, 0
  %v5452 = vunpack.c.l.b16 %v5384
  %v5453 = vunpack.c.l.b16 %v5385
  %v5454 = vunpack.c.l.b16 %v5386
  %v5455 = vunpack.c.l.b16 %v5387
  %v5456 = vunpack.c.l.b16 %v5388
  %v5457 = vunpack.c.l.b16 %v5389
  %v5458 = vunpack.c.l.b16 %v5390
  %v5459 = vunpack.c.l.b16 %v5391
  %v5460 = vunpack.c.l.b16 %v5392
  %v5461 = vunpack.c.l.b16 %v5393
  %v5462 = vunpack.c.l.b16 %v5394
  %v5463 = vunpack.c.l.b16 %v5395
  %v5464 = vunpack.c.l.b16 %v5396
  %v5465 = vunpack.c.l.b16 %v5397
  %v5466 = vunpack.c.l.b16 %v5398
  %v5467 = vunpack.c.l.b16 %v5399
  %v5468 = vunpack.c.l.b16 %v5400
  %v5469 = vunpack.c.l.b16 %v5401
  %v5470 = vunpack.c.l.b16 %v5402
  %v5471 = vunpack.c.l.b16 %v5403
  %v5472 = vunpack.c.l.b16 %v5404
  %v5473 = vunpack.c.l.b16 %v5405
  %v5474 = vunpack.c.l.b16 %v5406
  %v5475 = vunpack.c.l.b16 %v5407
  %v5476 = vunpack.c.l.b16 %v5408
  %v5477 = vunpack.c.l.b16 %v5409
  %v5478 = vunpack.c.l.b16 %v5410
  %v5479 = vunpack.c.l.b16 %v5411
  %v5480 = vunpack.c.l.b16 %v5412
  %v5481 = vunpack.c.l.b16 %v5413
  %v5482 = vunpack.c.l.b16 %v5414
  %v5483 = vunpack.c.l.b16 %v5415
  %v5484 = vpack.c.b16 %v5453, %v5452
  %v5485 = vpack.c.b16 %v5455, %v5454
  %v5486 = vpack.c.b16 %v5457, %v5456
  %v5487 = vpack.c.b16 %v5459, %v5458
  %v5488 = vpack.c.b16 %v5461, %v5460
  %v5489 = vpack.c.b16 %v5463, %v5462
  %v5490 = vpack.c.b16 %v5465, %v5464
  %v5491 = vpack.c.b16 %v5467, %v5466
  %v5492 = vpack.c.b16 %v5469, %v5468
  %v5493 = vpack.c.b16 %v5471, %v5470
  %v5494 = vpack.c.b16 %v5473, %v5472
  %v5495 = vpack.c.b16 %v5475, %v5474
  %v5496 = vpack.c.b16 %v5477, %v5476
  %v5497 = vpack.c.b16 %v5479, %v5478
  %v5498 = vpack.c.b16 %v5481, %v5480
  %v5499 = vpack.c.b16 %v5483, %v5482
  %5516 = vmatpush.bf16.msra.mxu0 %v5491
  %5517 = vmatpush.bf16.msra.mxu0 %v5490
  %5518 = vmatpush.bf16.msra.mxu0 %v5489
  %5519 = vmatpush.bf16.msra.mxu0 %v5488
  %5520 = vmatpush.bf16.msra.mxu0 %v5487
  %5521 = vmatpush.bf16.msra.mxu0 %v5486
  %5522 = vmatpush.bf16.msra.mxu0 %v5485
  %5523 = vmatpush.bf16.msra.mxu0 %v5484
  %5524 = vmatmul.bf16.gmra.mxu0 %v5308
  %v5525 = vpop.f32.mrf.mxu0
  %v5526 = vadd.f32 %v5418, %v5525
  %v5527 = vpop.f32.mrf.mxu0
  %v5528 = vadd.f32 %v5418, %v5527
  %5529 = vmatmul.bf16.gmra.mxu0 %v5310
  %v5530 = vpop.f32.mrf.mxu0
  %v5531 = vadd.f32 %v5418, %v5530
  %v5532 = vpop.f32.mrf.mxu0
  %v5533 = vadd.f32 %v5418, %v5532
  %5534 = vmatmul.bf16.gmra.mxu0 %v5312
  %v5535 = vpop.f32.mrf.mxu0
  %v5536 = vadd.f32 %v5418, %v5535
  %v5537 = vpop.f32.mrf.mxu0
  %v5538 = vadd.f32 %v5418, %v5537
  %5539 = vmatmul.bf16.gmra.mxu0 %v5314
  %v5540 = vpop.f32.mrf.mxu0
  %v5541 = vadd.f32 %v5418, %v5540
  %v5542 = vpop.f32.mrf.mxu0
  %v5543 = vadd.f32 %v5418, %v5542
  %5544 = vmatmul.bf16.gmra.mxu0 %v5316
  %v5545 = vpop.f32.mrf.mxu0
  %v5546 = vadd.f32 %v5418, %v5545
  %v5547 = vpop.f32.mrf.mxu0
  %v5548 = vadd.f32 %v5418, %v5547
  %5549 = vmatmul.bf16.gmra.mxu0 %v5318
  %v5550 = vpop.f32.mrf.mxu0
  %v5551 = vadd.f32 %v5418, %v5550
  %v5552 = vpop.f32.mrf.mxu0
  %v5553 = vadd.f32 %v5418, %v5552
  %5554 = vmatmul.bf16.gmra.mxu0 %v5320
  %v5555 = vpop.f32.mrf.mxu0
  %v5556 = vadd.f32 %v5418, %v5555
  %v5557 = vpop.f32.mrf.mxu0
  %v5558 = vadd.f32 %v5418, %v5557
  %5559 = vmatmul.bf16.gmra.mxu0 %v5322
  %v5560 = vpop.f32.mrf.mxu0
  %v5561 = vadd.f32 %v5418, %v5560
  %v5562 = vpop.f32.mrf.mxu0
  %v5563 = vadd.f32 %v5418, %v5562
  %5564 = vmatmul.bf16.gmra.mxu0 %v5324
  %v5565 = vpop.f32.mrf.mxu0
  %v5566 = vadd.f32 %v5418, %v5565
  %v5567 = vpop.f32.mrf.mxu0
  %v5568 = vadd.f32 %v5418, %v5567
  %5569 = vmatmul.bf16.gmra.mxu0 %v5326
  %v5570 = vpop.f32.mrf.mxu0
  %v5571 = vadd.f32 %v5418, %v5570
  %v5572 = vpop.f32.mrf.mxu0
  %v5573 = vadd.f32 %v5418, %v5572
  %5574 = vmatmul.bf16.gmra.mxu0 %v5328
  %v5575 = vpop.f32.mrf.mxu0
  %v5576 = vadd.f32 %v5418, %v5575
  %v5577 = vpop.f32.mrf.mxu0
  %v5578 = vadd.f32 %v5418, %v5577
  %5579 = vmatmul.bf16.gmra.mxu0 %v5330
  %v5580 = vpop.f32.mrf.mxu0
  %v5581 = vadd.f32 %v5418, %v5580
  %v5582 = vpop.f32.mrf.mxu0
  %v5583 = vadd.f32 %v5418, %v5582
  %5584 = vmatmul.bf16.gmra.mxu0 %v5332
  %v5585 = vpop.f32.mrf.mxu0
  %v5586 = vadd.f32 %v5418, %v5585
  %v5587 = vpop.f32.mrf.mxu0
  %v5588 = vadd.f32 %v5418, %v5587
  %5589 = vmatmul.bf16.gmra.mxu0 %v5334
  %v5590 = vpop.f32.mrf.mxu0
  %v5591 = vadd.f32 %v5418, %v5590
  %v5592 = vpop.f32.mrf.mxu0
  %v5593 = vadd.f32 %v5418, %v5592
  %5594 = vmatmul.bf16.gmra.mxu0 %v5336
  %v5595 = vpop.f32.mrf.mxu0
  %v5596 = vadd.f32 %v5418, %v5595
  %v5597 = vpop.f32.mrf.mxu0
  %v5598 = vadd.f32 %v5418, %v5597
  %5599 = vmatmul.bf16.gmra.mxu0 %v5338
  %v5600 = vpop.f32.mrf.mxu0
  %v5601 = vadd.f32 %v5418, %v5600
  %v5602 = vpop.f32.mrf.mxu0
  %v5603 = vadd.f32 %v5418, %v5602
  %5604 = vmatmul.bf16.gmra.mxu0 %v5340
  %v5605 = vpop.f32.mrf.mxu0
  %v5606 = vadd.f32 %v5418, %v5605
  %v5607 = vpop.f32.mrf.mxu0
  %v5608 = vadd.f32 %v5418, %v5607
  %5609 = vmatmul.bf16.gmra.mxu0 %v5342
  %v5610 = vpop.f32.mrf.mxu0
  %v5611 = vadd.f32 %v5418, %v5610
  %v5612 = vpop.f32.mrf.mxu0
  %v5613 = vadd.f32 %v5418, %v5612
  %5614 = vmatmul.bf16.gmra.mxu0 %v5344
  %v5615 = vpop.f32.mrf.mxu0
  %v5616 = vadd.f32 %v5418, %v5615
  %v5617 = vpop.f32.mrf.mxu0
  %v5618 = vadd.f32 %v5418, %v5617
  %5619 = vmatmul.bf16.gmra.mxu0 %v5346
  %v5620 = vpop.f32.mrf.mxu0
  %v5621 = vadd.f32 %v5418, %v5620
  %v5622 = vpop.f32.mrf.mxu0
  %v5623 = vadd.f32 %v5418, %v5622
  %5624 = vmatmul.bf16.gmra.mxu0 %v5348
  %v5625 = vpop.f32.mrf.mxu0
  %v5626 = vadd.f32 %v5418, %v5625
  %v5627 = vpop.f32.mrf.mxu0
  %v5628 = vadd.f32 %v5418, %v5627
  %5629 = vmatmul.bf16.gmra.mxu0 %v5350
  %v5630 = vpop.f32.mrf.mxu0
  %v5631 = vadd.f32 %v5418, %v5630
  %v5632 = vpop.f32.mrf.mxu0
  %v5633 = vadd.f32 %v5418, %v5632
  %5634 = vmatmul.bf16.gmra.mxu0 %v5352
  %v5635 = vpop.f32.mrf.mxu0
  %v5636 = vadd.f32 %v5418, %v5635
  %v5637 = vpop.f32.mrf.mxu0
  %v5638 = vadd.f32 %v5418, %v5637
  %5639 = vmatmul.bf16.gmra.mxu0 %v5354
  %v5640 = vpop.f32.mrf.mxu0
  %v5641 = vadd.f32 %v5418, %v5640
  %v5642 = vpop.f32.mrf.mxu0
  %v5643 = vadd.f32 %v5418, %v5642
  %5644 = vmatmul.bf16.gmra.mxu0 %v5356
  %v5645 = vpop.f32.mrf.mxu0
  %v5646 = vadd.f32 %v5418, %v5645
  %v5647 = vpop.f32.mrf.mxu0
  %v5648 = vadd.f32 %v5418, %v5647
  %5649 = vmatmul.bf16.gmra.mxu0 %v5358
  %v5650 = vpop.f32.mrf.mxu0
  %v5651 = vadd.f32 %v5418, %v5650
  %v5652 = vpop.f32.mrf.mxu0
  %v5653 = vadd.f32 %v5418, %v5652
  %5654 = vmatmul.bf16.gmra.mxu0 %v5360
  %v5655 = vpop.f32.mrf.mxu0
  %v5656 = vadd.f32 %v5418, %v5655
  %v5657 = vpop.f32.mrf.mxu0
  %v5658 = vadd.f32 %v5418, %v5657
  %5659 = vmatmul.bf16.gmra.mxu0 %v5362
  %v5660 = vpop.f32.mrf.mxu0
  %v5661 = vadd.f32 %v5418, %v5660
  %v5662 = vpop.f32.mrf.mxu0
  %v5663 = vadd.f32 %v5418, %v5662
  %5664 = vmatmul.bf16.gmra.mxu0 %v5364
  %v5665 = vpop.f32.mrf.mxu0
  %v5666 = vadd.f32 %v5418, %v5665
  %v5667 = vpop.f32.mrf.mxu0
  %v5668 = vadd.f32 %v5418, %v5667
  %5669 = vmatmul.bf16.gmra.mxu0 %v5366
  %v5670 = vpop.f32.mrf.mxu0
  %v5671 = vadd.f32 %v5418, %v5670
  %v5672 = vpop.f32.mrf.mxu0
  %v5673 = vadd.f32 %v5418, %v5672
  %5674 = vmatmul.bf16.gmra.mxu0 %v5368
  %v5675 = vpop.f32.mrf.mxu0
  %v5676 = vadd.f32 %v5418, %v5675
  %v5677 = vpop.f32.mrf.mxu0
  %v5678 = vadd.f32 %v5418, %v5677
  %5679 = vmatmul.bf16.gmra.mxu0 %v5370
  %v5680 = vpop.f32.mrf.mxu0
  %v5681 = vadd.f32 %v5418, %v5680
  %v5682 = vpop.f32.mrf.mxu0
  %v5683 = vadd.f32 %v5418, %v5682
  %5684 = vmatmul.bf16.gmra.mxu0 %v5372
  %v5685 = vpop.f32.mrf.mxu0
  %v5686 = vadd.f32 %v5418, %v5685
  %v5687 = vpop.f32.mrf.mxu0
  %v5688 = vadd.f32 %v5418, %v5687
  %5689 = vmatmul.bf16.gmra.mxu0 %v5374
  %v5690 = vpop.f32.mrf.mxu0
  %v5691 = vadd.f32 %v5418, %v5690
  %v5692 = vpop.f32.mrf.mxu0
  %v5693 = vadd.f32 %v5418, %v5692
  %5694 = vmatmul.bf16.gmra.mxu0 %v5376
  %v5695 = vpop.f32.mrf.mxu0
  %v5696 = vadd.f32 %v5418, %v5695
  %v5697 = vpop.f32.mrf.mxu0
  %v5698 = vadd.f32 %v5418, %v5697
  %5699 = vmatmul.bf16.gmra.mxu0 %v5378
  %v5700 = vpop.f32.mrf.mxu0
  %v5701 = vadd.f32 %v5418, %v5700
  %v5702 = vpop.f32.mrf.mxu0
  %v5703 = vadd.f32 %v5418, %v5702
  %5704 = vmatmul.bf16.gmra.mxu0 %v5380
  %v5705 = vpop.f32.mrf.mxu0
  %v5706 = vadd.f32 %v5418, %v5705
  %v5707 = vpop.f32.mrf.mxu0
  %v5708 = vadd.f32 %v5418, %v5707
  %5709 = vmatmul.bf16.gmra.mxu0 %v5382
  %v5710 = vpop.f32.mrf.mxu0
  %v5711 = vadd.f32 %v5418, %v5710
  %v5712 = vpop.f32.mrf.mxu0
  %5713 = vdwg.mxu0
  %5714 = vmatpush.bf16.msra.mxu0 %v5499
  %5715 = vmatpush.bf16.msra.mxu0 %v5498
  %5716 = vmatpush.bf16.msra.mxu0 %v5497
  %5717 = vmatpush.bf16.msra.mxu0 %v5496
  %5718 = vmatpush.bf16.msra.mxu0 %v5495
  %5719 = vmatpush.bf16.msra.mxu0 %v5494
  %5720 = vmatpush.bf16.msra.mxu0 %v5493
  %5721 = vmatpush.bf16.msra.mxu0 %v5492
  %5722 = vmatmul.bf16.gmra.mxu0 %v5309
  %v5723 = vpop.f32.mrf.mxu0
  %v5724 = vadd.f32 %v5526, %v5723
  %v5725 = vpop.f32.mrf.mxu0
  %v5726 = vadd.f32 %v5528, %v5725
  %5727 = vmatmul.bf16.gmra.mxu0 %v5311
  %v5728 = vpop.f32.mrf.mxu0
  %v5729 = vadd.f32 %v5531, %v5728
  %v5730 = vpop.f32.mrf.mxu0
  %v5731 = vadd.f32 %v5533, %v5730
  %5732 = vmatmul.bf16.gmra.mxu0 %v5313
  %v5733 = vpop.f32.mrf.mxu0
  %v5734 = vadd.f32 %v5536, %v5733
  %v5735 = vpop.f32.mrf.mxu0
  %v5736 = vadd.f32 %v5538, %v5735
  %5737 = vmatmul.bf16.gmra.mxu0 %v5315
  %v5738 = vpop.f32.mrf.mxu0
  %v5739 = vadd.f32 %v5541, %v5738
  %v5740 = vpop.f32.mrf.mxu0
  %v5741 = vadd.f32 %v5543, %v5740
  %5742 = vmatmul.bf16.gmra.mxu0 %v5317
  %v5743 = vpop.f32.mrf.mxu0
  %v5744 = vadd.f32 %v5546, %v5743
  %v5745 = vpop.f32.mrf.mxu0
  %v5746 = vadd.f32 %v5548, %v5745
  %5747 = vmatmul.bf16.gmra.mxu0 %v5319
  %v5748 = vpop.f32.mrf.mxu0
  %v5749 = vadd.f32 %v5551, %v5748
  %v5750 = vpop.f32.mrf.mxu0
  %v5751 = vadd.f32 %v5553, %v5750
  %5752 = vmatmul.bf16.gmra.mxu0 %v5321
  %v5753 = vpop.f32.mrf.mxu0
  %v5754 = vadd.f32 %v5556, %v5753
  %v5755 = vpop.f32.mrf.mxu0
  %v5756 = vadd.f32 %v5558, %v5755
  %5757 = vmatmul.bf16.gmra.mxu0 %v5323
  %v5758 = vpop.f32.mrf.mxu0
  %v5759 = vadd.f32 %v5561, %v5758
  %v5760 = vpop.f32.mrf.mxu0
  %v5761 = vadd.f32 %v5563, %v5760
  %5762 = vmatmul.bf16.gmra.mxu0 %v5325
  %v5763 = vpop.f32.mrf.mxu0
  %v5764 = vadd.f32 %v5566, %v5763
  %v5765 = vpop.f32.mrf.mxu0
  %v5766 = vadd.f32 %v5568, %v5765
  %5767 = vmatmul.bf16.gmra.mxu0 %v5327
  %v5768 = vpop.f32.mrf.mxu0
  %v5769 = vadd.f32 %v5571, %v5768
  %v5770 = vpop.f32.mrf.mxu0
  %v5771 = vadd.f32 %v5573, %v5770
  %5772 = vmatmul.bf16.gmra.mxu0 %v5329
  %v5773 = vpop.f32.mrf.mxu0
  %v5774 = vadd.f32 %v5576, %v5773
  %v5775 = vpop.f32.mrf.mxu0
  %v5776 = vadd.f32 %v5578, %v5775
  %5777 = vmatmul.bf16.gmra.mxu0 %v5331
  %v5778 = vpop.f32.mrf.mxu0
  %v5779 = vadd.f32 %v5581, %v5778
  %v5780 = vpop.f32.mrf.mxu0
  %v5781 = vadd.f32 %v5583, %v5780
  %5782 = vmatmul.bf16.gmra.mxu0 %v5333
  %v5783 = vpop.f32.mrf.mxu0
  %v5784 = vadd.f32 %v5586, %v5783
  %v5785 = vpop.f32.mrf.mxu0
  %v5786 = vadd.f32 %v5588, %v5785
  %5787 = vmatmul.bf16.gmra.mxu0 %v5335
  %v5788 = vpop.f32.mrf.mxu0
  %v5789 = vadd.f32 %v5591, %v5788
  %v5790 = vpop.f32.mrf.mxu0
  %v5791 = vadd.f32 %v5593, %v5790
  %5792 = vmatmul.bf16.gmra.mxu0 %v5337
  %v5793 = vpop.f32.mrf.mxu0
  %v5794 = vadd.f32 %v5596, %v5793
  %v5795 = vpop.f32.mrf.mxu0
  %v5796 = vadd.f32 %v5598, %v5795
  %5797 = vmatmul.bf16.gmra.mxu0 %v5339
  %v5798 = vpop.f32.mrf.mxu0
  %v5799 = vadd.f32 %v5601, %v5798
  %v5800 = vpop.f32.mrf.mxu0
  %v5801 = vadd.f32 %v5603, %v5800
  %5802 = vmatmul.bf16.gmra.mxu0 %v5341
  %v5803 = vpop.f32.mrf.mxu0
  %v5804 = vadd.f32 %v5606, %v5803
  %v5805 = vpop.f32.mrf.mxu0
  %v5806 = vadd.f32 %v5608, %v5805
  %5807 = vmatmul.bf16.gmra.mxu0 %v5343
  %v5808 = vpop.f32.mrf.mxu0
  %v5809 = vadd.f32 %v5611, %v5808
  %v5810 = vpop.f32.mrf.mxu0
  %v5811 = vadd.f32 %v5613, %v5810
  %5812 = vmatmul.bf16.gmra.mxu0 %v5345
  %v5813 = vpop.f32.mrf.mxu0
  %v5814 = vadd.f32 %v5616, %v5813
  %v5815 = vpop.f32.mrf.mxu0
  %v5816 = vadd.f32 %v5618, %v5815
  %5817 = vmatmul.bf16.gmra.mxu0 %v5347
  %v5818 = vpop.f32.mrf.mxu0
  %v5819 = vadd.f32 %v5621, %v5818
  %v5820 = vpop.f32.mrf.mxu0
  %v5821 = vadd.f32 %v5623, %v5820
  %5822 = vmatmul.bf16.gmra.mxu0 %v5349
  %v5823 = vpop.f32.mrf.mxu0
  %v5824 = vadd.f32 %v5626, %v5823
  %v5825 = vpop.f32.mrf.mxu0
  %v5826 = vadd.f32 %v5628, %v5825
  %5827 = vmatmul.bf16.gmra.mxu0 %v5351
  %v5828 = vpop.f32.mrf.mxu0
  %v5829 = vadd.f32 %v5631, %v5828
  %v5830 = vpop.f32.mrf.mxu0
  %v5831 = vadd.f32 %v5633, %v5830
  %5832 = vmatmul.bf16.gmra.mxu0 %v5353
  %v5833 = vpop.f32.mrf.mxu0
  %v5834 = vadd.f32 %v5636, %v5833
  %v5835 = vpop.f32.mrf.mxu0
  %v5836 = vadd.f32 %v5638, %v5835
  %5837 = vmatmul.bf16.gmra.mxu0 %v5355
  %v5838 = vpop.f32.mrf.mxu0
  %v5839 = vadd.f32 %v5641, %v5838
  %v5840 = vpop.f32.mrf.mxu0
  %v5841 = vadd.f32 %v5643, %v5840
  %5842 = vmatmul.bf16.gmra.mxu0 %v5357
  %v5843 = vpop.f32.mrf.mxu0
  %v5844 = vadd.f32 %v5646, %v5843
  %v5845 = vpop.f32.mrf.mxu0
  %v5846 = vadd.f32 %v5648, %v5845
  %5847 = vmatmul.bf16.gmra.mxu0 %v5359
  %v5848 = vpop.f32.mrf.mxu0
  %v5849 = vadd.f32 %v5651, %v5848
  %v5850 = vpop.f32.mrf.mxu0
  %v5851 = vadd.f32 %v5653, %v5850
  %5852 = vmatmul.bf16.gmra.mxu0 %v5361
  %v5853 = vpop.f32.mrf.mxu0
  %v5854 = vadd.f32 %v5656, %v5853
  %v5855 = vpop.f32.mrf.mxu0
  %v5856 = vadd.f32 %v5658, %v5855
  %5857 = vmatmul.bf16.gmra.mxu0 %v5363
  %v5858 = vpop.f32.mrf.mxu0
  %v5859 = vadd.f32 %v5661, %v5858
  %v5860 = vpop.f32.mrf.mxu0
  %v5861 = vadd.f32 %v5663, %v5860
  %5862 = vmatmul.bf16.gmra.mxu0 %v5365
  %v5863 = vpop.f32.mrf.mxu0
  %v5864 = vadd.f32 %v5666, %v5863
  %v5865 = vpop.f32.mrf.mxu0
  %v5866 = vadd.f32 %v5668, %v5865
  %5867 = vmatmul.bf16.gmra.mxu0 %v5367
  %v5868 = vpop.f32.mrf.mxu0
  %v5869 = vadd.f32 %v5671, %v5868
  %v5870 = vpop.f32.mrf.mxu0
  %v5871 = vadd.f32 %v5673, %v5870
  %5872 = vmatmul.bf16.gmra.mxu0 %v5369
  %v5873 = vpop.f32.mrf.mxu0
  %v5874 = vadd.f32 %v5676, %v5873
  %v5875 = vpop.f32.mrf.mxu0
  %v5876 = vadd.f32 %v5678, %v5875
  %5877 = vmatmul.bf16.gmra.mxu0 %v5371
  %v5878 = vpop.f32.mrf.mxu0
  %v5879 = vadd.f32 %v5681, %v5878
  %v5880 = vpop.f32.mrf.mxu0
  %v5881 = vadd.f32 %v5683, %v5880
  %5882 = vmatmul.bf16.gmra.mxu0 %v5373
  %v5883 = vpop.f32.mrf.mxu0
  %v5884 = vadd.f32 %v5686, %v5883
  %v5885 = vpop.f32.mrf.mxu0
  %v5886 = vadd.f32 %v5688, %v5885
  %5887 = vmatmul.bf16.gmra.mxu0 %v5375
  %v5888 = vpop.f32.mrf.mxu0
  %v5889 = vadd.f32 %v5691, %v5888
  %v5890 = vpop.f32.mrf.mxu0
  %v5891 = vadd.f32 %v5693, %v5890
  %5892 = vmatmul.bf16.gmra.mxu0 %v5377
  %v5893 = vpop.f32.mrf.mxu0
  %v5894 = vadd.f32 %v5696, %v5893
  %v5895 = vpop.f32.mrf.mxu0
  %v5896 = vadd.f32 %v5698, %v5895
  %5897 = vmatmul.bf16.gmra.mxu0 %v5379
  %v5898 = vpop.f32.mrf.mxu0
  %v5899 = vadd.f32 %v5701, %v5898
  %v5900 = vpop.f32.mrf.mxu0
  %v5901 = vadd.f32 %v5703, %v5900
  %5902 = vmatmul.bf16.gmra.mxu0 %v5381
  %v5903 = vpop.f32.mrf.mxu0
  %v5904 = vadd.f32 %v5706, %v5903
  %v5905 = vpop.f32.mrf.mxu0
  %v5906 = vadd.f32 %v5708, %v5905
  %5907 = vmatmul.bf16.gmra.mxu0 %v5383
  %v5908 = vpop.f32.mrf.mxu0
  %v5909 = vadd.f32 %v5711, %v5908
  %v5910 = vpop.f32.mrf.mxu0
  %5911 = vdwg.mxu0
  %vm5912 = vcmask 23552
  %5913 = vst.msk [vmem:[%s11] sm:$0xff] %vm5912, %v5724
  %5914 = vst.msk [vmem:[%s11 + $0x8] sm:$0xff] %vm5912, %v5726
  %5915 = vst.msk [vmem:[%s11 + $0x10] sm:$0xff] %vm5912, %v5729
  %5916 = vst.msk [vmem:[%s11 + $0x18] sm:$0xff] %vm5912, %v5731
  %5917 = vst.msk [vmem:[%s11 + $0x20] sm:$0xff] %vm5912, %v5734
  %5918 = vst.msk [vmem:[%s11 + $0x28] sm:$0xff] %vm5912, %v5736
  %5919 = vst.msk [vmem:[%s11 + $0x30] sm:$0xff] %vm5912, %v5739
  %5920 = vst.msk [vmem:[%s11 + $0x38] sm:$0xff] %vm5912, %v5741
  %5921 = vst.msk [vmem:[%s11 + $0x40] sm:$0xff] %vm5912, %v5744
  %5922 = vst.msk [vmem:[%s11 + $0x48] sm:$0xff] %vm5912, %v5746
  %5923 = vst.msk [vmem:[%s11 + $0x50] sm:$0xff] %vm5912, %v5749
  %5924 = vst.msk [vmem:[%s11 + $0x58] sm:$0xff] %vm5912, %v5751
  %5925 = vst.msk [vmem:[%s11 + $0x60] sm:$0xff] %vm5912, %v5754
  %5926 = vst.msk [vmem:[%s11 + $0x68] sm:$0xff] %vm5912, %v5756
  %5927 = vst.msk [vmem:[%s11 + $0x70] sm:$0xff] %vm5912, %v5759
  %5928 = vst.msk [vmem:[%s11 + $0x78] sm:$0xff] %vm5912, %v5761
  %5929 = vst.msk [vmem:[%s11 + $0x80] sm:$0xff] %vm5912, %v5764
  %5930 = vst.msk [vmem:[%s11 + $0x88] sm:$0xff] %vm5912, %v5766
  %5931 = vst.msk [vmem:[%s11 + $0x90] sm:$0xff] %vm5912, %v5769
  %5932 = vst.msk [vmem:[%s11 + $0x98] sm:$0xff] %vm5912, %v5771
  %5933 = vst.msk [vmem:[%s11 + $0xa0] sm:$0xff] %vm5912, %v5774
  %5934 = vst.msk [vmem:[%s11 + $0xa8] sm:$0xff] %vm5912, %v5776
  %5935 = vst.msk [vmem:[%s11 + $0xb0] sm:$0xff] %vm5912, %v5779
  %5936 = vst.msk [vmem:[%s11 + $0xb8] sm:$0xff] %vm5912, %v5781
  %5937 = vst.msk [vmem:[%s11 + $0xc0] sm:$0xff] %vm5912, %v5784
  %5938 = vst.msk [vmem:[%s11 + $0xc8] sm:$0xff] %vm5912, %v5786
  %5939 = vst.msk [vmem:[%s11 + $0xd0] sm:$0xff] %vm5912, %v5789
  %5940 = vst.msk [vmem:[%s11 + $0xd8] sm:$0xff] %vm5912, %v5791
  %5941 = vst.msk [vmem:[%s11 + $0xe0] sm:$0xff] %vm5912, %v5794
  %5942 = vst.msk [vmem:[%s11 + $0xe8] sm:$0xff] %vm5912, %v5796
  %5943 = vst.msk [vmem:[%s11 + $0xf0] sm:$0xff] %vm5912, %v5799
  %5944 = vst.msk [vmem:[%s11 + $0xf8] sm:$0xff] %vm5912, %v5801
  %5945 = vst.msk [vmem:[%s11 + $0x100] sm:$0xff] %vm5912, %v5804
  %5946 = vst.msk [vmem:[%s11 + $0x108] sm:$0xff] %vm5912, %v5806
  %5947 = vst.msk [vmem:[%s11 + $0x110] sm:$0xff] %vm5912, %v5809
  %5948 = vst.msk [vmem:[%s11 + $0x118] sm:$0xff] %vm5912, %v5811
  %5949 = vst.msk [vmem:[%s11 + $0x120] sm:$0xff] %vm5912, %v5814
  %5950 = vst.msk [vmem:[%s11 + $0x128] sm:$0xff] %vm5912, %v5816
  %5951 = vst.msk [vmem:[%s11 + $0x130] sm:$0xff] %vm5912, %v5819
  %5952 = vst.msk [vmem:[%s11 + $0x138] sm:$0xff] %vm5912, %v5821
  %5953 = vst.msk [vmem:[%s11 + $0x140] sm:$0xff] %vm5912, %v5824
  %5954 = vst.msk [vmem:[%s11 + $0x148] sm:$0xff] %vm5912, %v5826
  %5955 = vst.msk [vmem:[%s11 + $0x150] sm:$0xff] %vm5912, %v5829
  %5956 = vst.msk [vmem:[%s11 + $0x158] sm:$0xff] %vm5912, %v5831
  %5957 = vst.msk [vmem:[%s11 + $0x160] sm:$0xff] %vm5912, %v5834
  %5958 = vst.msk [vmem:[%s11 + $0x168] sm:$0xff] %vm5912, %v5836
  %5959 = vst.msk [vmem:[%s11 + $0x170] sm:$0xff] %vm5912, %v5839
  %5960 = vst.msk [vmem:[%s11 + $0x178] sm:$0xff] %vm5912, %v5841
  %5961 = vst.msk [vmem:[%s11 + $0x180] sm:$0xff] %vm5912, %v5844
  %5962 = vst.msk [vmem:[%s11 + $0x188] sm:$0xff] %vm5912, %v5846
  %5963 = vst.msk [vmem:[%s11 + $0x190] sm:$0xff] %vm5912, %v5849
  %5964 = vst.msk [vmem:[%s11 + $0x198] sm:$0xff] %vm5912, %v5851
  %5965 = vst.msk [vmem:[%s11 + $0x1a0] sm:$0xff] %vm5912, %v5854
  %5966 = vst.msk [vmem:[%s11 + $0x1a8] sm:$0xff] %vm5912, %v5856
  %5967 = vst.msk [vmem:[%s11 + $0x1b0] sm:$0xff] %vm5912, %v5859
  %5968 = vst.msk [vmem:[%s11 + $0x1b8] sm:$0xff] %vm5912, %v5861
  %5969 = vst.msk [vmem:[%s11 + $0x1c0] sm:$0xff] %vm5912, %v5864
  %5970 = vst.msk [vmem:[%s11 + $0x1c8] sm:$0xff] %vm5912, %v5866
  %5971 = vst.msk [vmem:[%s11 + $0x1d0] sm:$0xff] %vm5912, %v5869
  %5972 = vst.msk [vmem:[%s11 + $0x1d8] sm:$0xff] %vm5912, %v5871
  %5973 = vst.msk [vmem:[%s11 + $0x1e0] sm:$0xff] %vm5912, %v5874
  %5974 = vst.msk [vmem:[%s11 + $0x1e8] sm:$0xff] %vm5912, %v5876
  %5975 = vst.msk [vmem:[%s11 + $0x1f0] sm:$0xff] %vm5912, %v5879
  %5976 = vst.msk [vmem:[%s11 + $0x1f8] sm:$0xff] %vm5912, %v5881
  %5977 = vst.msk [vmem:[%s11 + $0x200] sm:$0xff] %vm5912, %v5884
  %5978 = vst.msk [vmem:[%s11 + $0x208] sm:$0xff] %vm5912, %v5886
  %5979 = vst.msk [vmem:[%s11 + $0x210] sm:$0xff] %vm5912, %v5889
  %5980 = vst.msk [vmem:[%s11 + $0x218] sm:$0xff] %vm5912, %v5891
  %5981 = vst.msk [vmem:[%s11 + $0x220] sm:$0xff] %vm5912, %v5894
  %5982 = vst.msk [vmem:[%s11 + $0x228] sm:$0xff] %vm5912, %v5896
  %5983 = vst.msk [vmem:[%s11 + $0x230] sm:$0xff] %vm5912, %v5899
  %5984 = vst.msk [vmem:[%s11 + $0x238] sm:$0xff] %vm5912, %v5901
  %5985 = vst.msk [vmem:[%s11 + $0x240] sm:$0xff] %vm5912, %v5904
  %5986 = vst.msk [vmem:[%s11 + $0x248] sm:$0xff] %vm5912, %v5906
  %5987 = vst.msk [vmem:[%s11 + $0x250] sm:$0xff] %vm5912, %v5909
  // Predicated region
  $region46: #{ia_nilut_forward.1} parent=0 // pred_check
    _
  $region47: #{ia_nilut_forward.1} parent=0 // pred_check_branch
    %5989 = sbr.rel (0) target = $region49
  $region48: #{ia_nilut_forward.1} parent=0 // pred_region
    _
  $region49: #{ia_nilut_forward.1} parent=0 // pred_fallthru
    _
  // Predicated region
  $region50: #{ia_nilut_forward.1} parent=0 // pred_check
    _
  $region51: #{ia_nilut_forward.1} parent=0 // pred_check_branch
    %5991 = sbr.rel (0) target = $region53
  $region52: #{ia_nilut_forward.1} parent=0 // pred_region
    _
  $region53: #{ia_nilut_forward.1} parent=0 // pred_fallthru
    _

</llo_original>
